<compile_context>
chip_gen: v6e
topology: v6e:2x2x1
jax: 0.10.0
libtpu: 0.0.40
codegen_flags: <defaults>
</compile_context>

<pallas_src>
import jax
import jax.numpy as jnp
from jax import lax
from jax.experimental import pallas as pl
from jax.experimental.pallas import tpu as pltpu


def _round_up(v, m):
    return ((v + m - 1) // m) * m


def decoder_block_forward(x_nchw, w1, b1, wt2, b2):
    """Pallas forward pass of DecoderBlock.

    Args:
      x_nchw: (N, Cin, H, W) input (NCHW, like the PyTorch module).
      w1:     (Cmid, Cin, 3, 3)  Conv2d weight (torch layout).
      b1:     (Cmid,)            Conv2d bias.
      wt2:    (Cmid, Cout, 3, 3) ConvTranspose2d weight (torch layout).
      b2:     (Cout,)            ConvTranspose2d bias.
    Returns:
      (N, Cout, 2H, 2W) float32 output.
    """
    N, CIN, H, W = x_nchw.shape
    CMID = w1.shape[0]
    COUT = wt2.shape[1]

    S_row = W + 2                                  # row stride of padded/flat spatial dim
    S_x = (H + 2) * S_row                          # padded input, flattened
    S_acc = H * S_row                              # flat stage-1 / stage-2 slab length
    S_xpad = _round_up(S_x + 2, 128)               # + tap-offset overshoot, lane aligned
    S_ybuf = _round_up((H + 1) * S_row + 2, 128)   # stage-1 act + zero pad row/tail

    # ---- host-side layout plumbing (pad + flatten only; no transposes) ----
    xf = jnp.pad(x_nchw.astype(jnp.float32), ((0, 0), (0, 0), (1, 1), (1, 1)))
    xf = xf.reshape(N, CIN, S_x)
    xf = jnp.pad(xf, ((0, 0), (0, 0), (0, S_xpad - S_x)))          # zero tail

    w1_k = jnp.transpose(w1, (2, 3, 0, 1)).astype(jnp.float32)     # (3,3,Cmid,Cin)
    w2_k = jnp.transpose(wt2, (2, 3, 1, 0)).astype(jnp.float32)    # (3,3,Cout,Cmid)
    b1_k = b1.reshape(CMID, 1).astype(jnp.float32)
    b2_k = b2.reshape(COUT, 1).astype(jnp.float32)

    # flat position f = h*S_row + w is a real output column iff w < W
    colmask = ((jnp.arange(S_acc) % S_row) < W).astype(jnp.float32).reshape(1, S_acc)

    def kernel(x_ref, w1_ref, b1_ref, w2_ref, b2_ref, m_ref, out_ref, y_ref):
        # ---- stage 1: 3x3 "same" conv + ReLU as 9 whole-slab matmuls ----
        acc = jnp.zeros((CMID, S_acc), jnp.float32)
        for ky in range(3):
            for kx in range(3):
                off = ky * S_row + kx
                xs = x_ref[0, :, off:off + S_acc]            # (Cin, S_acc)
                acc = acc + jnp.dot(w1_ref[ky, kx], xs,
                                    preferred_element_type=jnp.float32)
        # bias + ReLU, then zero the 2 garbage columns per row (w in {W, W+1})
        y = jnp.maximum(acc + b1_ref[...], 0.0) * m_ref[...]
        y_ref[:, 0:S_acc] = y
        # zero ONLY the pad tail (extra row H + alignment tail), every grid step
        y_ref[:, S_acc:] = jnp.zeros((CMID, S_ybuf - S_acc), jnp.float32)

        # ---- stage 2: ConvTranspose2d(k=3, s=2, p=1, op=1) + ReLU ----
        # out[2m+a, 2n+b] only mixes taps whose parity matches (a, b); each
        # neighbor (m(+1), n(+1)) is a flat lane shift of the y slab.
        y00 = y_ref[:, 0:S_acc]                              # y[m,   n  ]
        y01 = y_ref[:, 1:1 + S_acc]                          # y[m,   n+1]
        y10 = y_ref[:, S_row:S_row + S_acc]                  # y[m+1, n  ]
        y11 = y_ref[:, S_row + 1:S_row + 1 + S_acc]          # y[m+1, n+1]

        def tap(ysl, ky, kx):
            return jnp.dot(w2_ref[ky, kx], ysl, preferred_element_type=jnp.float32)

        ee = tap(y00, 1, 1)
        eo = tap(y00, 1, 2) + tap(y01, 1, 0)
        oe = tap(y00, 2, 1) + tap(y10, 0, 1)
        oo = tap(y00, 2, 2) + tap(y01, 2, 0) + tap(y10, 0, 2) + tap(y11, 0, 0)

        b2v = b2_ref[...]                                    # (Cout, 1)
        out_ref[0, 0, :, :] = jnp.maximum(ee + b2v, 0.0)     # (a=0, b=0)
        out_ref[0, 1, :, :] = jnp.maximum(eo + b2v, 0.0)     # (a=0, b=1)
        out_ref[0, 2, :, :] = jnp.maximum(oe + b2v, 0.0)     # (a=1, b=0)
        out_ref[0, 3, :, :] = jnp.maximum(oo + b2v, 0.0)     # (a=1, b=1)

    out_pl = pl.pallas_call(
        kernel,
        out_shape=jax.ShapeDtypeStruct((N, 4, COUT, S_acc), jnp.float32),
        grid_spec=pltpu.PrefetchScalarGridSpec(
            num_scalar_prefetch=0,
            grid=(N,),
            in_specs=[
                pl.BlockSpec((1, CIN, S_xpad), lambda n: (n, 0, 0)),
                pl.BlockSpec((3, 3, CMID, CIN), lambda n: (0, 0, 0, 0)),
                pl.BlockSpec((CMID, 1), lambda n: (0, 0)),
                pl.BlockSpec((3, 3, COUT, CMID), lambda n: (0, 0, 0, 0)),
                pl.BlockSpec((COUT, 1), lambda n: (0, 0)),
                pl.BlockSpec((1, S_acc), lambda n: (0, 0)),
            ],
            out_specs=pl.BlockSpec((1, 4, COUT, S_acc), lambda n: (n, 0, 0, 0)),
            scratch_shapes=[pltpu.VMEM((CMID, S_ybuf), jnp.float32)],
        ),
        compiler_params=pltpu.CompilerParams(
            dimension_semantics=("parallel",),
        ),
    )(xf, w1_k, b1_k, w2_k, b2_k, colmask)

    # Un-flatten + parity-interleave (pure layout plumbing on the small output:
    # out[n, c, 2m+a, 2q+b] = out_pl[n, 2a+b, c, m*(W+2)+q]).
    o = out_pl.reshape(N, 2, 2, COUT, H, S_row)[:, :, :, :, :, :W]  # (n,a,b,c,m,q)
    o = jnp.transpose(o, (0, 3, 4, 1, 5, 2))                        # (n,c,m,a,q,b)
    return o.reshape(N, COUT, 2 * H, 2 * W)


def _reference(x, w1, b1, wt2, b2):
    """Pure-JAX reference matching the PyTorch DecoderBlock forward."""
    y = lax.conv_general_dilated(
        x, w1, window_strides=(1, 1), padding=((1, 1), (1, 1)),
        dimension_numbers=("NCHW", "OIHW", "NCHW"),
        precision=lax.Precision.HIGHEST)
    y = jnp.maximum(y + b1.reshape(1, -1, 1, 1), 0.0)
    # ConvTranspose2d(k=3, s=2, p=1, op=1) == lhs-dilated cross-correlation
    # with the spatially flipped, channel-swapped kernel and padding (1, 2).
    w2f = jnp.flip(jnp.transpose(wt2, (1, 0, 2, 3)), axis=(2, 3))
    z = lax.conv_general_dilated(
        y, w2f, window_strides=(1, 1), padding=((1, 2), (1, 2)),
        lhs_dilation=(2, 2),
        dimension_numbers=("NCHW", "OIHW", "NCHW"),
        precision=lax.Precision.HIGHEST)
    return jnp.maximum(z + b2.reshape(1, -1, 1, 1), 0.0)


if __name__ == "__main__":
    key = jax.random.PRNGKey(0)
    kx, k1, kb1, k2, kb2 = jax.random.split(key, 5)

    N, CIN, CMID, COUT, H, W = 2, 4, 8, 4, 16, 16
    x = jax.random.normal(kx, (N, CIN, H, W), jnp.float32)
    w1 = jax.random.normal(k1, (CMID, CIN, 3, 3), jnp.float32) * 0.2
    b1 = jax.random.normal(kb1, (CMID,), jnp.float32) * 0.1
    wt2 = jax.random.normal(k2, (CMID, COUT, 3, 3), jnp.float32) * 0.2
    b2 = jax.random.normal(kb2, (COUT,), jnp.float32) * 0.1

    out = decoder_block_forward(x, w1, b1, wt2, b2)
    out = jax.block_until_ready(out)

    ref = _reference(x, w1, b1, wt2, b2)
    assert out.shape == (N, COUT, 2 * H, 2 * W), out.shape
    max_err = float(jnp.max(jnp.abs(out - ref)))
    assert jnp.allclose(out, ref, rtol=1e-2, atol=1e-2), max_err

    print("KERNEL_OK")
</pallas_src>

<mosaic_0001>
module attributes {stable_mosaic.version = 11 : i64} {
  func.func @kernel(%arg0: i32, %arg1: memref<1x4x384xf32, #tpu.memory_space<vmem>>, %arg2: memref<3x3x8x4xf32, #tpu.memory_space<vmem>>, %arg3: memref<8x1xf32, #tpu.memory_space<vmem>>, %arg4: memref<3x3x4x8xf32, #tpu.memory_space<vmem>>, %arg5: memref<4x1xf32, #tpu.memory_space<vmem>>, %arg6: memref<1x288xf32, #tpu.memory_space<vmem>>, %arg7: memref<1x4x4x288xf32, #tpu.memory_space<vmem>>, %arg8: memref<8x384xf32, #tpu.memory_space<vmem>>) attributes {dimension_semantics = [#tpu.dimension_semantics<parallel>], iteration_bounds = array<i64: 2>, scalar_prefetch = 0 : i64, scratch_operands = 1 : i64, tpu.core_type = #tpu.core_type<tc>, window_params = [{transform_indices = @transform_0, window_bounds = array<i64: 1, 4, 384>}, {pipeline_mode = #tpu.pipeline_mode<synchronous>, transform_indices = @transform_1, window_bounds = array<i64: 3, 3, 8, 4>}, {pipeline_mode = #tpu.pipeline_mode<synchronous>, transform_indices = @transform_2, window_bounds = array<i64: 8, 1>}, {pipeline_mode = #tpu.pipeline_mode<synchronous>, transform_indices = @transform_3, window_bounds = array<i64: 3, 3, 4, 8>}, {pipeline_mode = #tpu.pipeline_mode<synchronous>, transform_indices = @transform_4, window_bounds = array<i64: 4, 1>}, {pipeline_mode = #tpu.pipeline_mode<synchronous>, transform_indices = @transform_5, window_bounds = array<i64: 1, 288>}, {transform_indices = @transform_6, window_bounds = array<i64: 1, 4, 4, 288>}]} {
    %cst = arith.constant 0.000000e+00 : f32
    %0 = vector.broadcast %cst : f32 to vector<8x288xf32>
    %c0 = arith.constant 0 : index
    %c0_0 = arith.constant 0 : index
    %c0_1 = arith.constant 0 : index
    %1 = vector.load %arg1[%c0, %c0_0, %c0_1] : memref<1x4x384xf32, #tpu.memory_space<vmem>>, vector<1x4x288xf32>
    %2 = vector.shape_cast %1 : vector<1x4x288xf32> to vector<4x288xf32>
    %c0_2 = arith.constant 0 : index
    %c0_3 = arith.constant 0 : index
    %c0_4 = arith.constant 0 : index
    %c0_5 = arith.constant 0 : index
    %3 = vector.load %arg2[%c0_2, %c0_3, %c0_4, %c0_5] : memref<3x3x8x4xf32, #tpu.memory_space<vmem>>, vector<1x1x8x4xf32>
    %4 = vector.shape_cast %3 : vector<1x1x8x4xf32> to vector<8x4xf32>
    %cst_6 = arith.constant dense<0.000000e+00> : vector<8x288xf32>
    %5 = tpu.matmul %4, %2, %cst_6 {dimension_numbers = #tpu.dot_dimension_numbers<[1], [0], [0], [1], [0, 0, 1, 1], [], []>} : vector<8x4xf32>, vector<4x288xf32>, vector<8x288xf32> -> vector<8x288xf32>
    %6 = arith.addf %0, %5 : vector<8x288xf32>
    %c0_7 = arith.constant 0 : index
    %c0_8 = arith.constant 0 : index
    %c1 = arith.constant 1 : index
    %7 = vector.load %arg1[%c0_7, %c0_8, %c1] : memref<1x4x384xf32, #tpu.memory_space<vmem>>, vector<1x4x288xf32>
    %8 = vector.shape_cast %7 : vector<1x4x288xf32> to vector<4x288xf32>
    %c0_9 = arith.constant 0 : index
    %c1_10 = arith.constant 1 : index
    %c0_11 = arith.constant 0 : index
    %c0_12 = arith.constant 0 : index
    %9 = vector.load %arg2[%c0_9, %c1_10, %c0_11, %c0_12] : memref<3x3x8x4xf32, #tpu.memory_space<vmem>>, vector<1x1x8x4xf32>
    %10 = vector.shape_cast %9 : vector<1x1x8x4xf32> to vector<8x4xf32>
    %cst_13 = arith.constant dense<0.000000e+00> : vector<8x288xf32>
    %11 = tpu.matmul %10, %8, %cst_13 {dimension_numbers = #tpu.dot_dimension_numbers<[1], [0], [0], [1], [0, 0, 1, 1], [], []>} : vector<8x4xf32>, vector<4x288xf32>, vector<8x288xf32> -> vector<8x288xf32>
    %12 = arith.addf %6, %11 : vector<8x288xf32>
    %c0_14 = arith.constant 0 : index
    %c0_15 = arith.constant 0 : index
    %c2 = arith.constant 2 : index
    %13 = vector.load %arg1[%c0_14, %c0_15, %c2] : memref<1x4x384xf32, #tpu.memory_space<vmem>>, vector<1x4x288xf32>
    %14 = vector.shape_cast %13 : vector<1x4x288xf32> to vector<4x288xf32>
    %c0_16 = arith.constant 0 : index
    %c2_17 = arith.constant 2 : index
    %c0_18 = arith.constant 0 : index
    %c0_19 = arith.constant 0 : index
    %15 = vector.load %arg2[%c0_16, %c2_17, %c0_18, %c0_19] : memref<3x3x8x4xf32, #tpu.memory_space<vmem>>, vector<1x1x8x4xf32>
    %16 = vector.shape_cast %15 : vector<1x1x8x4xf32> to vector<8x4xf32>
    %cst_20 = arith.constant dense<0.000000e+00> : vector<8x288xf32>
    %17 = tpu.matmul %16, %14, %cst_20 {dimension_numbers = #tpu.dot_dimension_numbers<[1], [0], [0], [1], [0, 0, 1, 1], [], []>} : vector<8x4xf32>, vector<4x288xf32>, vector<8x288xf32> -> vector<8x288xf32>
    %18 = arith.addf %12, %17 : vector<8x288xf32>
    %c0_21 = arith.constant 0 : index
    %c0_22 = arith.constant 0 : index
    %c18 = arith.constant 18 : index
    %19 = vector.load %arg1[%c0_21, %c0_22, %c18] : memref<1x4x384xf32, #tpu.memory_space<vmem>>, vector<1x4x288xf32>
    %20 = vector.shape_cast %19 : vector<1x4x288xf32> to vector<4x288xf32>
    %c1_23 = arith.constant 1 : index
    %c0_24 = arith.constant 0 : index
    %c0_25 = arith.constant 0 : index
    %c0_26 = arith.constant 0 : index
    %21 = vector.load %arg2[%c1_23, %c0_24, %c0_25, %c0_26] : memref<3x3x8x4xf32, #tpu.memory_space<vmem>>, vector<1x1x8x4xf32>
    %22 = vector.shape_cast %21 : vector<1x1x8x4xf32> to vector<8x4xf32>
    %cst_27 = arith.constant dense<0.000000e+00> : vector<8x288xf32>
    %23 = tpu.matmul %22, %20, %cst_27 {dimension_numbers = #tpu.dot_dimension_numbers<[1], [0], [0], [1], [0, 0, 1, 1], [], []>} : vector<8x4xf32>, vector<4x288xf32>, vector<8x288xf32> -> vector<8x288xf32>
    %24 = arith.addf %18, %23 : vector<8x288xf32>
    %c0_28 = arith.constant 0 : index
    %c0_29 = arith.constant 0 : index
    %c19 = arith.constant 19 : index
    %25 = vector.load %arg1[%c0_28, %c0_29, %c19] : memref<1x4x384xf32, #tpu.memory_space<vmem>>, vector<1x4x288xf32>
    %26 = vector.shape_cast %25 : vector<1x4x288xf32> to vector<4x288xf32>
    %c1_30 = arith.constant 1 : index
    %c1_31 = arith.constant 1 : index
    %c0_32 = arith.constant 0 : index
    %c0_33 = arith.constant 0 : index
    %27 = vector.load %arg2[%c1_30, %c1_31, %c0_32, %c0_33] : memref<3x3x8x4xf32, #tpu.memory_space<vmem>>, vector<1x1x8x4xf32>
    %28 = vector.shape_cast %27 : vector<1x1x8x4xf32> to vector<8x4xf32>
    %cst_34 = arith.constant dense<0.000000e+00> : vector<8x288xf32>
    %29 = tpu.matmul %28, %26, %cst_34 {dimension_numbers = #tpu.dot_dimension_numbers<[1], [0], [0], [1], [0, 0, 1, 1], [], []>} : vector<8x4xf32>, vector<4x288xf32>, vector<8x288xf32> -> vector<8x288xf32>
    %30 = arith.addf %24, %29 : vector<8x288xf32>
    %c0_35 = arith.constant 0 : index
    %c0_36 = arith.constant 0 : index
    %c20 = arith.constant 20 : index
    %31 = vector.load %arg1[%c0_35, %c0_36, %c20] : memref<1x4x384xf32, #tpu.memory_space<vmem>>, vector<1x4x288xf32>
    %32 = vector.shape_cast %31 : vector<1x4x288xf32> to vector<4x288xf32>
    %c1_37 = arith.constant 1 : index
    %c2_38 = arith.constant 2 : index
    %c0_39 = arith.constant 0 : index
    %c0_40 = arith.constant 0 : index
    %33 = vector.load %arg2[%c1_37, %c2_38, %c0_39, %c0_40] : memref<3x3x8x4xf32, #tpu.memory_space<vmem>>, vector<1x1x8x4xf32>
    %34 = vector.shape_cast %33 : vector<1x1x8x4xf32> to vector<8x4xf32>
    %cst_41 = arith.constant dense<0.000000e+00> : vector<8x288xf32>
    %35 = tpu.matmul %34, %32, %cst_41 {dimension_numbers = #tpu.dot_dimension_numbers<[1], [0], [0], [1], [0, 0, 1, 1], [], []>} : vector<8x4xf32>, vector<4x288xf32>, vector<8x288xf32> -> vector<8x288xf32>
    %36 = arith.addf %30, %35 : vector<8x288xf32>
    %c0_42 = arith.constant 0 : index
    %c0_43 = arith.constant 0 : index
    %c36 = arith.constant 36 : index
    %37 = vector.load %arg1[%c0_42, %c0_43, %c36] : memref<1x4x384xf32, #tpu.memory_space<vmem>>, vector<1x4x288xf32>
    %38 = vector.shape_cast %37 : vector<1x4x288xf32> to vector<4x288xf32>
    %c2_44 = arith.constant 2 : index
    %c0_45 = arith.constant 0 : index
    %c0_46 = arith.constant 0 : index
    %c0_47 = arith.constant 0 : index
    %39 = vector.load %arg2[%c2_44, %c0_45, %c0_46, %c0_47] : memref<3x3x8x4xf32, #tpu.memory_space<vmem>>, vector<1x1x8x4xf32>
    %40 = vector.shape_cast %39 : vector<1x1x8x4xf32> to vector<8x4xf32>
    %cst_48 = arith.constant dense<0.000000e+00> : vector<8x288xf32>
    %41 = tpu.matmul %40, %38, %cst_48 {dimension_numbers = #tpu.dot_dimension_numbers<[1], [0], [0], [1], [0, 0, 1, 1], [], []>} : vector<8x4xf32>, vector<4x288xf32>, vector<8x288xf32> -> vector<8x288xf32>
    %42 = arith.addf %36, %41 : vector<8x288xf32>
    %c0_49 = arith.constant 0 : index
    %c0_50 = arith.constant 0 : index
    %c37 = arith.constant 37 : index
    %43 = vector.load %arg1[%c0_49, %c0_50, %c37] : memref<1x4x384xf32, #tpu.memory_space<vmem>>, vector<1x4x288xf32>
    %44 = vector.shape_cast %43 : vector<1x4x288xf32> to vector<4x288xf32>
    %c2_51 = arith.constant 2 : index
    %c1_52 = arith.constant 1 : index
    %c0_53 = arith.constant 0 : index
    %c0_54 = arith.constant 0 : index
    %45 = vector.load %arg2[%c2_51, %c1_52, %c0_53, %c0_54] : memref<3x3x8x4xf32, #tpu.memory_space<vmem>>, vector<1x1x8x4xf32>
    %46 = vector.shape_cast %45 : vector<1x1x8x4xf32> to vector<8x4xf32>
    %cst_55 = arith.constant dense<0.000000e+00> : vector<8x288xf32>
    %47 = tpu.matmul %46, %44, %cst_55 {dimension_numbers = #tpu.dot_dimension_numbers<[1], [0], [0], [1], [0, 0, 1, 1], [], []>} : vector<8x4xf32>, vector<4x288xf32>, vector<8x288xf32> -> vector<8x288xf32>
    %48 = arith.addf %42, %47 : vector<8x288xf32>
    %c0_56 = arith.constant 0 : index
    %c0_57 = arith.constant 0 : index
    %c38 = arith.constant 38 : index
    %49 = vector.load %arg1[%c0_56, %c0_57, %c38] : memref<1x4x384xf32, #tpu.memory_space<vmem>>, vector<1x4x288xf32>
    %50 = vector.shape_cast %49 : vector<1x4x288xf32> to vector<4x288xf32>
    %c2_58 = arith.constant 2 : index
    %c2_59 = arith.constant 2 : index
    %c0_60 = arith.constant 0 : index
    %c0_61 = arith.constant 0 : index
    %51 = vector.load %arg2[%c2_58, %c2_59, %c0_60, %c0_61] : memref<3x3x8x4xf32, #tpu.memory_space<vmem>>, vector<1x1x8x4xf32>
    %52 = vector.shape_cast %51 : vector<1x1x8x4xf32> to vector<8x4xf32>
    %cst_62 = arith.constant dense<0.000000e+00> : vector<8x288xf32>
    %53 = tpu.matmul %52, %50, %cst_62 {dimension_numbers = #tpu.dot_dimension_numbers<[1], [0], [0], [1], [0, 0, 1, 1], [], []>} : vector<8x4xf32>, vector<4x288xf32>, vector<8x288xf32> -> vector<8x288xf32>
    %54 = arith.addf %48, %53 : vector<8x288xf32>
    %c0_63 = arith.constant 0 : index
    %c0_64 = arith.constant 0 : index
    %55 = vector.load %arg3[%c0_63, %c0_64] : memref<8x1xf32, #tpu.memory_space<vmem>>, vector<8x1xf32>
    %56 = vector.broadcast %55 : vector<8x1xf32> to vector<8x288xf32>
    %57 = arith.addf %54, %56 : vector<8x288xf32>
    %cst_65 = arith.constant 0.000000e+00 : f32
    %58 = vector.broadcast %cst_65 : f32 to vector<8x288xf32>
    %59 = arith.maximumf %57, %58 : vector<8x288xf32>
    %c0_66 = arith.constant 0 : index
    %c0_67 = arith.constant 0 : index
    %60 = vector.load %arg6[%c0_66, %c0_67] : memref<1x288xf32, #tpu.memory_space<vmem>>, vector<1x288xf32>
    %61 = vector.broadcast %60 : vector<1x288xf32> to vector<8x288xf32>
    %62 = arith.mulf %59, %61 : vector<8x288xf32>
    %c0_68 = arith.constant 0 : index
    %c0_69 = arith.constant 0 : index
    %63 = vector.load %arg8[%c0_68, %c0_69] : memref<8x384xf32, #tpu.memory_space<vmem>>, vector<8x288xf32>
    tpu.vector_store %arg8[%c0_68, %c0_69], %62 {strides = array<i32>} : memref<8x384xf32, #tpu.memory_space<vmem>>, vector<8x288xf32>,
    %cst_70 = arith.constant 0.000000e+00 : f32
    %64 = vector.broadcast %cst_70 : f32 to vector<8x96xf32>
    %c0_71 = arith.constant 0 : index
    %c288 = arith.constant 288 : index
    %65 = vector.load %arg8[%c0_71, %c288] : memref<8x384xf32, #tpu.memory_space<vmem>>, vector<8x96xf32>
    tpu.vector_store %arg8[%c0_71, %c288], %64 {strides = array<i32>} : memref<8x384xf32, #tpu.memory_space<vmem>>, vector<8x96xf32>,
    %c0_72 = arith.constant 0 : index
    %c0_73 = arith.constant 0 : index
    %66 = vector.load %arg8[%c0_72, %c0_73] : memref<8x384xf32, #tpu.memory_space<vmem>>, vector<8x288xf32>
    %c0_74 = arith.constant 0 : index
    %c1_75 = arith.constant 1 : index
    %67 = vector.load %arg8[%c0_74, %c1_75] : memref<8x384xf32, #tpu.memory_space<vmem>>, vector<8x288xf32>
    %c0_76 = arith.constant 0 : index
    %c18_77 = arith.constant 18 : index
    %68 = vector.load %arg8[%c0_76, %c18_77] : memref<8x384xf32, #tpu.memory_space<vmem>>, vector<8x288xf32>
    %c0_78 = arith.constant 0 : index
    %c19_79 = arith.constant 19 : index
    %69 = vector.load %arg8[%c0_78, %c19_79] : memref<8x384xf32, #tpu.memory_space<vmem>>, vector<8x288xf32>
    %c1_80 = arith.constant 1 : index
    %c1_81 = arith.constant 1 : index
    %c0_82 = arith.constant 0 : index
    %c0_83 = arith.constant 0 : index
    %70 = vector.load %arg4[%c1_80, %c1_81, %c0_82, %c0_83] : memref<3x3x4x8xf32, #tpu.memory_space<vmem>>, vector<1x1x4x8xf32>
    %71 = vector.shape_cast %70 : vector<1x1x4x8xf32> to vector<4x8xf32>
    %cst_84 = arith.constant dense<0.000000e+00> : vector<4x288xf32>
    %72 = tpu.matmul %71, %66, %cst_84 {dimension_numbers = #tpu.dot_dimension_numbers<[1], [0], [0], [1], [0, 0, 1, 1], [], []>} : vector<4x8xf32>, vector<8x288xf32>, vector<4x288xf32> -> vector<4x288xf32>
    %c1_85 = arith.constant 1 : index
    %c2_86 = arith.constant 2 : index
    %c0_87 = arith.constant 0 : index
    %c0_88 = arith.constant 0 : index
    %73 = vector.load %arg4[%c1_85, %c2_86, %c0_87, %c0_88] : memref<3x3x4x8xf32, #tpu.memory_space<vmem>>, vector<1x1x4x8xf32>
    %74 = vector.shape_cast %73 : vector<1x1x4x8xf32> to vector<4x8xf32>
    %cst_89 = arith.constant dense<0.000000e+00> : vector<4x288xf32>
    %75 = tpu.matmul %74, %66, %cst_89 {dimension_numbers = #tpu.dot_dimension_numbers<[1], [0], [0], [1], [0, 0, 1, 1], [], []>} : vector<4x8xf32>, vector<8x288xf32>, vector<4x288xf32> -> vector<4x288xf32>
    %c1_90 = arith.constant 1 : index
    %c0_91 = arith.constant 0 : index
    %c0_92 = arith.constant 0 : index
    %c0_93 = arith.constant 0 : index
    %76 = vector.load %arg4[%c1_90, %c0_91, %c0_92, %c0_93] : memref<3x3x4x8xf32, #tpu.memory_space<vmem>>, vector<1x1x4x8xf32>
    %77 = vector.shape_cast %76 : vector<1x1x4x8xf32> to vector<4x8xf32>
    %cst_94 = arith.constant dense<0.000000e+00> : vector<4x288xf32>
    %78 = tpu.matmul %77, %67, %cst_94 {dimension_numbers = #tpu.dot_dimension_numbers<[1], [0], [0], [1], [0, 0, 1, 1], [], []>} : vector<4x8xf32>, vector<8x288xf32>, vector<4x288xf32> -> vector<4x288xf32>
    %79 = arith.addf %75, %78 : vector<4x288xf32>
    %c2_95 = arith.constant 2 : index
    %c1_96 = arith.constant 1 : index
    %c0_97 = arith.constant 0 : index
    %c0_98 = arith.constant 0 : index
    %80 = vector.load %arg4[%c2_95, %c1_96, %c0_97, %c0_98] : memref<3x3x4x8xf32, #tpu.memory_space<vmem>>, vector<1x1x4x8xf32>
    %81 = vector.shape_cast %80 : vector<1x1x4x8xf32> to vector<4x8xf32>
    %cst_99 = arith.constant dense<0.000000e+00> : vector<4x288xf32>
    %82 = tpu.matmul %81, %66, %cst_99 {dimension_numbers = #tpu.dot_dimension_numbers<[1], [0], [0], [1], [0, 0, 1, 1], [], []>} : vector<4x8xf32>, vector<8x288xf32>, vector<4x288xf32> -> vector<4x288xf32>
    %c0_100 = arith.constant 0 : index
    %c1_101 = arith.constant 1 : index
    %c0_102 = arith.constant 0 : index
    %c0_103 = arith.constant 0 : index
    %83 = vector.load %arg4[%c0_100, %c1_101, %c0_102, %c0_103] : memref<3x3x4x8xf32, #tpu.memory_space<vmem>>, vector<1x1x4x8xf32>
    %84 = vector.shape_cast %83 : vector<1x1x4x8xf32> to vector<4x8xf32>
    %cst_104 = arith.constant dense<0.000000e+00> : vector<4x288xf32>
    %85 = tpu.matmul %84, %68, %cst_104 {dimension_numbers = #tpu.dot_dimension_numbers<[1], [0], [0], [1], [0, 0, 1, 1], [], []>} : vector<4x8xf32>, vector<8x288xf32>, vector<4x288xf32> -> vector<4x288xf32>
    %86 = arith.addf %82, %85 : vector<4x288xf32>
    %c2_105 = arith.constant 2 : index
    %c2_106 = arith.constant 2 : index
    %c0_107 = arith.constant 0 : index
    %c0_108 = arith.constant 0 : index
    %87 = vector.load %arg4[%c2_105, %c2_106, %c0_107, %c0_108] : memref<3x3x4x8xf32, #tpu.memory_space<vmem>>, vector<1x1x4x8xf32>
    %88 = vector.shape_cast %87 : vector<1x1x4x8xf32> to vector<4x8xf32>
    %cst_109 = arith.constant dense<0.000000e+00> : vector<4x288xf32>
    %89 = tpu.matmul %88, %66, %cst_109 {dimension_numbers = #tpu.dot_dimension_numbers<[1], [0], [0], [1], [0, 0, 1, 1], [], []>} : vector<4x8xf32>, vector<8x288xf32>, vector<4x288xf32> -> vector<4x288xf32>
    %c2_110 = arith.constant 2 : index
    %c0_111 = arith.constant 0 : index
    %c0_112 = arith.constant 0 : index
    %c0_113 = arith.constant 0 : index
    %90 = vector.load %arg4[%c2_110, %c0_111, %c0_112, %c0_113] : memref<3x3x4x8xf32, #tpu.memory_space<vmem>>, vector<1x1x4x8xf32>
    %91 = vector.shape_cast %90 : vector<1x1x4x8xf32> to vector<4x8xf32>
    %cst_114 = arith.constant dense<0.000000e+00> : vector<4x288xf32>
    %92 = tpu.matmul %91, %67, %cst_114 {dimension_numbers = #tpu.dot_dimension_numbers<[1], [0], [0], [1], [0, 0, 1, 1], [], []>} : vector<4x8xf32>, vector<8x288xf32>, vector<4x288xf32> -> vector<4x288xf32>
    %93 = arith.addf %89, %92 : vector<4x288xf32>
    %c0_115 = arith.constant 0 : index
    %c2_116 = arith.constant 2 : index
    %c0_117 = arith.constant 0 : index
    %c0_118 = arith.constant 0 : index
    %94 = vector.load %arg4[%c0_115, %c2_116, %c0_117, %c0_118] : memref<3x3x4x8xf32, #tpu.memory_space<vmem>>, vector<1x1x4x8xf32>
    %95 = vector.shape_cast %94 : vector<1x1x4x8xf32> to vector<4x8xf32>
    %cst_119 = arith.constant dense<0.000000e+00> : vector<4x288xf32>
    %96 = tpu.matmul %95, %68, %cst_119 {dimension_numbers = #tpu.dot_dimension_numbers<[1], [0], [0], [1], [0, 0, 1, 1], [], []>} : vector<4x8xf32>, vector<8x288xf32>, vector<4x288xf32> -> vector<4x288xf32>
    %97 = arith.addf %93, %96 : vector<4x288xf32>
    %c0_120 = arith.constant 0 : index
    %c0_121 = arith.constant 0 : index
    %c0_122 = arith.constant 0 : index
    %c0_123 = arith.constant 0 : index
    %98 = vector.load %arg4[%c0_120, %c0_121, %c0_122, %c0_123] : memref<3x3x4x8xf32, #tpu.memory_space<vmem>>, vector<1x1x4x8xf32>
    %99 = vector.shape_cast %98 : vector<1x1x4x8xf32> to vector<4x8xf32>
    %cst_124 = arith.constant dense<0.000000e+00> : vector<4x288xf32>
    %100 = tpu.matmul %99, %69, %cst_124 {dimension_numbers = #tpu.dot_dimension_numbers<[1], [0], [0], [1], [0, 0, 1, 1], [], []>} : vector<4x8xf32>, vector<8x288xf32>, vector<4x288xf32> -> vector<4x288xf32>
    %101 = arith.addf %97, %100 : vector<4x288xf32>
    %c0_125 = arith.constant 0 : index
    %c0_126 = arith.constant 0 : index
    %102 = vector.load %arg5[%c0_125, %c0_126] : memref<4x1xf32, #tpu.memory_space<vmem>>, vector<4x1xf32>
    %103 = vector.broadcast %102 : vector<4x1xf32> to vector<4x288xf32>
    %104 = arith.addf %72, %103 : vector<4x288xf32>
    %cst_127 = arith.constant 0.000000e+00 : f32
    %105 = vector.broadcast %cst_127 : f32 to vector<4x288xf32>
    %106 = arith.maximumf %104, %105 : vector<4x288xf32>
    %c0_128 = arith.constant 0 : index
    %c0_129 = arith.constant 0 : index
    %c0_130 = arith.constant 0 : index
    %c0_131 = arith.constant 0 : index
    %107 = vector.load %arg7[%c0_128, %c0_129, %c0_130, %c0_131] : memref<1x4x4x288xf32, #tpu.memory_space<vmem>>, vector<1x1x4x288xf32>
    %108 = vector.shape_cast %107 : vector<1x1x4x288xf32> to vector<4x288xf32>
    %109 = vector.shape_cast %106 : vector<4x288xf32> to vector<1x1x4x288xf32>
    tpu.vector_store %arg7[%c0_128, %c0_129, %c0_130, %c0_131], %109 {strides = array<i32>} : memref<1x4x4x288xf32, #tpu.memory_space<vmem>>, vector<1x1x4x288xf32>,
    %110 = vector.broadcast %102 : vector<4x1xf32> to vector<4x288xf32>
    %111 = arith.addf %79, %110 : vector<4x288xf32>
    %cst_132 = arith.constant 0.000000e+00 : f32
    %112 = vector.broadcast %cst_132 : f32 to vector<4x288xf32>
    %113 = arith.maximumf %111, %112 : vector<4x288xf32>
    %c0_133 = arith.constant 0 : index
    %c1_134 = arith.constant 1 : index
    %c0_135 = arith.constant 0 : index
    %c0_136 = arith.constant 0 : index
    %114 = vector.load %arg7[%c0_133, %c1_134, %c0_135, %c0_136] : memref<1x4x4x288xf32, #tpu.memory_space<vmem>>, vector<1x1x4x288xf32>
    %115 = vector.shape_cast %114 : vector<1x1x4x288xf32> to vector<4x288xf32>
    %116 = vector.shape_cast %113 : vector<4x288xf32> to vector<1x1x4x288xf32>
    tpu.vector_store %arg7[%c0_133, %c1_134, %c0_135, %c0_136], %116 {strides = array<i32>} : memref<1x4x4x288xf32, #tpu.memory_space<vmem>>, vector<1x1x4x288xf32>,
    %117 = vector.broadcast %102 : vector<4x1xf32> to vector<4x288xf32>
    %118 = arith.addf %86, %117 : vector<4x288xf32>
    %cst_137 = arith.constant 0.000000e+00 : f32
    %119 = vector.broadcast %cst_137 : f32 to vector<4x288xf32>
    %120 = arith.maximumf %118, %119 : vector<4x288xf32>
    %c0_138 = arith.constant 0 : index
    %c2_139 = arith.constant 2 : index
    %c0_140 = arith.constant 0 : index
    %c0_141 = arith.constant 0 : index
    %121 = vector.load %arg7[%c0_138, %c2_139, %c0_140, %c0_141] : memref<1x4x4x288xf32, #tpu.memory_space<vmem>>, vector<1x1x4x288xf32>
    %122 = vector.shape_cast %121 : vector<1x1x4x288xf32> to vector<4x288xf32>
    %123 = vector.shape_cast %120 : vector<4x288xf32> to vector<1x1x4x288xf32>
    tpu.vector_store %arg7[%c0_138, %c2_139, %c0_140, %c0_141], %123 {strides = array<i32>} : memref<1x4x4x288xf32, #tpu.memory_space<vmem>>, vector<1x1x4x288xf32>,
    %124 = vector.broadcast %102 : vector<4x1xf32> to vector<4x288xf32>
    %125 = arith.addf %101, %124 : vector<4x288xf32>
    %cst_142 = arith.constant 0.000000e+00 : f32
    %126 = vector.broadcast %cst_142 : f32 to vector<4x288xf32>
    %127 = arith.maximumf %125, %126 : vector<4x288xf32>
    %c0_143 = arith.constant 0 : index
    %c3 = arith.constant 3 : index
    %c0_144 = arith.constant 0 : index
    %c0_145 = arith.constant 0 : index
    %128 = vector.load %arg7[%c0_143, %c3, %c0_144, %c0_145] : memref<1x4x4x288xf32, #tpu.memory_space<vmem>>, vector<1x1x4x288xf32>
    %129 = vector.shape_cast %128 : vector<1x1x4x288xf32> to vector<4x288xf32>
    %130 = vector.shape_cast %127 : vector<4x288xf32> to vector<1x1x4x288xf32>
    tpu.vector_store %arg7[%c0_143, %c3, %c0_144, %c0_145], %130 {strides = array<i32>} : memref<1x4x4x288xf32, #tpu.memory_space<vmem>>, vector<1x1x4x288xf32>,
    return
  }
  func.func @transform_0(%arg0: i32) -> (i32, i32, i32) {
    %c0_i32 = arith.constant 0 : i32
    %c0_i32_0 = arith.constant 0 : i32
    %c0_i32_1 = arith.constant 0 : i32
    return %arg0, %c0_i32, %c0_i32_0 : i32, i32, i32
  }
  func.func @transform_1(%arg0: i32) -> (i32, i32, i32, i32) {
    %c0_i32 = arith.constant 0 : i32
    %c0_i32_0 = arith.constant 0 : i32
    %c0_i32_1 = arith.constant 0 : i32
    %c0_i32_2 = arith.constant 0 : i32
    %c0_i32_3 = arith.constant 0 : i32
    return %c0_i32, %c0_i32_0, %c0_i32_1, %c0_i32_2 : i32, i32, i32, i32
  }
  func.func @transform_2(%arg0: i32) -> (i32, i32) {
    %c0_i32 = arith.constant 0 : i32
    %c0_i32_0 = arith.constant 0 : i32
    %c0_i32_1 = arith.constant 0 : i32
    return %c0_i32, %c0_i32_0 : i32, i32
  }
  func.func @transform_3(%arg0: i32) -> (i32, i32, i32, i32) {
    %c0_i32 = arith.constant 0 : i32
    %c0_i32_0 = arith.constant 0 : i32
    %c0_i32_1 = arith.constant 0 : i32
    %c0_i32_2 = arith.constant 0 : i32
    %c0_i32_3 = arith.constant 0 : i32
    return %c0_i32, %c0_i32_0, %c0_i32_1, %c0_i32_2 : i32, i32, i32, i32
  }
  func.func @transform_4(%arg0: i32) -> (i32, i32) {
    %c0_i32 = arith.constant 0 : i32
    %c0_i32_0 = arith.constant 0 : i32
    %c0_i32_1 = arith.constant 0 : i32
    return %c0_i32, %c0_i32_0 : i32, i32
  }
  func.func @transform_5(%arg0: i32) -> (i32, i32) {
    %c0_i32 = arith.constant 0 : i32
    %c0_i32_0 = arith.constant 0 : i32
    %c0_i32_1 = arith.constant 0 : i32
    return %c0_i32, %c0_i32_0 : i32, i32
  }
  func.func @transform_6(%arg0: i32) -> (i32, i32, i32, i32) {
    %c0_i32 = arith.constant 0 : i32
    %c0_i32_0 = arith.constant 0 : i32
    %c0_i32_1 = arith.constant 0 : i32
    %c0_i32_2 = arith.constant 0 : i32
    return %arg0, %c0_i32, %c0_i32_0, %c0_i32_1 : i32, i32, i32, i32
  }
}

</mosaic_0001>

<llo_original>
// kernel: tpu_custom_call.1
$region0: #{tpu_custom_call.1}
  #allocation0 [shape = 'u32[]', space=smem, size = 0x4, offset = 0x4, fixed_abs, tag = 'smem constant byte address 0x4 - core index']
  #allocation1 [shape = 'u32[144,128]{1,0:T(1,128)}', space=vmem, size = 0x12000, scoped, tag = 'internal scratch']
  #allocation2 [shape = 'f32[8,384]{1,0:T(8,128)}', space=vmem, size = 0x3000, scoped, tag = 'scratch operand']
  %s0 = inlined_call_operand.vmem [shape: f32[2,4,384], index: 0, kind: input, shape index: {}]
  %s1 = inlined_call_operand.vmem [shape: f32[3,3,8,4], index: 1, kind: input, shape index: {}]
  %s2 = inlined_call_operand.vmem [shape: f32[8,1], index: 2, kind: input, shape index: {}]
  %s3 = inlined_call_operand.vmem [shape: f32[3,3,4,8], index: 3, kind: input, shape index: {}]
  %s4 = inlined_call_operand.vmem [shape: f32[4,1], index: 4, kind: input, shape index: {}]
  %s5 = inlined_call_operand.vmem [shape: f32[1,288], index: 5, kind: input, shape index: {}]
  %s6 = inlined_call_operand.hbm [shape: f32[2,4,4,288], index: 6, kind: output, shape index: {}]
  %s7 = sld [smem:[#allocation0]]
  $region57: #{tpu_custom_call.1} parent=0
    _
  %s9 = ssub.s32 1, %s7
  %s10 = scalar_select 0, %s9, %s7
  $region1: #{tpu_custom_call.1} parent=0
    #allocation3 [shape = 'u8[49152]{0}', space=vmem, size = 0xc000, scoped, tag = 'output window, operand 0']
    #allocation4 [shape = 's32[2]{0}', space=sflag, size = 0x8, scoped, tag = 'scoped memory for tpu_custom_call.1']
    %11 = vsyncpa [#allocation4], 0
    %s12 = scalar_lea.sflag [#allocation4], 1
    %13 = vsyncpa %s12, 0
    loop: start=0, step=1, limit=4
    $region2: #{tpu_custom_call.1} parent=1 // loop_pre_header
      _
    $region3: #{tpu_custom_call.1} parent=1 // loop_header
      %s15 = sphi 0, %s19
      %p16 = scmp.ge.s32.totalorder %s15, 4
      %s25 = sphi 0, %s27
      %s28 = sphi 0, %s25
      %s29 = sphi 0, %s28
      %s45 = sphi 0, %s29
      %s49 = sphi 0, %s49
      %s51 = sphi 0, %s49
      %s52 = sphi 0, %s51
      %s66 = sphi 0, %s52
      %s70 = sphi 0, %s70
      %s72 = sphi 0, %s70
      %s73 = sphi 0, %s72
      %s87 = sphi 0, %s73
      %s91 = sphi 0, %s91
      %s93 = sphi 0, %s91
      %s94 = sphi 0, %s93
      %s108 = sphi 0, %s94
      %s112 = sphi 0, %s112
      %s114 = sphi 0, %s112
      %s115 = sphi 0, %s114
      %s129 = sphi 0, %s115
      %s133 = sphi 0, %s133
      %s135 = sphi 0, %s133
      %s136 = sphi 0, %s135
      %s150 = sphi 0, %s136
      %s156 = sphi 0, %s158
      %s159 = sphi 0, %s156
      %s160 = sphi 0, %s159
      %s176 = sphi 0, %s160
    $region4: #{tpu_custom_call.1} parent=1 // loop_header_branch
      %18 = sbr.rel (%p16) target = $region8
    $region5: #{tpu_custom_call.1} parent=1 // loop_body
      %s20 = ssub.s32 %s15, 1
      %s21 = ssub.s32 %s15, 2
      %s22 = sadd.s32 %s15, 1
      %s23 = ssub.s32 %s15, %s22
      %p24 = scmp.eq.s32.totalorder %s23, 0
      %s26 = sadd.s32 %s25, 1
      %s27 = scalar_select %p24, %s25, %s26
      %p30 = pneg %p24
      %p31 = scmp.eq.s32.totalorder %s15, 1
      %p32 = por %p30, %p31
      %p33 = scmp.ne.s32.totalorder %s25, %s28
      %p34 = scmp.eq.s32.totalorder %s15, 0
      %p35 = por %p33, %p34
      %p36 = scmp.ne.s32.totalorder %s25, %s28
      %p37 = scmp.eq.s32.totalorder %s20, 1
      %p38 = por %p36, %p37
      %p39 = scmp.ne.s32.totalorder %s28, %s29
      %p40 = scmp.eq.s32.totalorder %s20, 0
      %p41 = por %p39, %p40
      %p42 = scmp.ne.s32.totalorder %s28, %s29
      %p43 = scmp.eq.s32.totalorder %s21, 1
      %p44 = por %p42, %p43
      %p46 = scmp.ne.s32.totalorder %s29, %s45
      %p47 = scmp.eq.s32.totalorder %s21, 0
      %p48 = por %p46, %p47
      %s50 = sadd.s32 %s49, 1
      %p53 = scmp.eq.s32.totalorder %s15, 1
      %p54 = scmp.ne.s32.totalorder %s49, %s51
      %p55 = scmp.eq.s32.totalorder %s15, 0
      %p56 = por %p54, %p55
      %p57 = scmp.ne.s32.totalorder %s49, %s51
      %p58 = scmp.eq.s32.totalorder %s20, 1
      %p59 = por %p57, %p58
      %p60 = scmp.ne.s32.totalorder %s51, %s52
      %p61 = scmp.eq.s32.totalorder %s20, 0
      %p62 = por %p60, %p61
      %p63 = scmp.ne.s32.totalorder %s51, %s52
      %p64 = scmp.eq.s32.totalorder %s21, 1
      %p65 = por %p63, %p64
      %p67 = scmp.ne.s32.totalorder %s52, %s66
      %p68 = scmp.eq.s32.totalorder %s21, 0
      %p69 = por %p67, %p68
      %s71 = sadd.s32 %s70, 1
      %p74 = scmp.eq.s32.totalorder %s15, 1
      %p75 = scmp.ne.s32.totalorder %s70, %s72
      %p76 = scmp.eq.s32.totalorder %s15, 0
      %p77 = por %p75, %p76
      %p78 = scmp.ne.s32.totalorder %s70, %s72
      %p79 = scmp.eq.s32.totalorder %s20, 1
      %p80 = por %p78, %p79
      %p81 = scmp.ne.s32.totalorder %s72, %s73
      %p82 = scmp.eq.s32.totalorder %s20, 0
      %p83 = por %p81, %p82
      %p84 = scmp.ne.s32.totalorder %s72, %s73
      %p85 = scmp.eq.s32.totalorder %s21, 1
      %p86 = por %p84, %p85
      %p88 = scmp.ne.s32.totalorder %s73, %s87
      %p89 = scmp.eq.s32.totalorder %s21, 0
      %p90 = por %p88, %p89
      %s92 = sadd.s32 %s91, 1
      %p95 = scmp.eq.s32.totalorder %s15, 1
      %p96 = scmp.ne.s32.totalorder %s91, %s93
      %p97 = scmp.eq.s32.totalorder %s15, 0
      %p98 = por %p96, %p97
      %p99 = scmp.ne.s32.totalorder %s91, %s93
      %p100 = scmp.eq.s32.totalorder %s20, 1
      %p101 = por %p99, %p100
      %p102 = scmp.ne.s32.totalorder %s93, %s94
      %p103 = scmp.eq.s32.totalorder %s20, 0
      %p104 = por %p102, %p103
      %p105 = scmp.ne.s32.totalorder %s93, %s94
      %p106 = scmp.eq.s32.totalorder %s21, 1
      %p107 = por %p105, %p106
      %p109 = scmp.ne.s32.totalorder %s94, %s108
      %p110 = scmp.eq.s32.totalorder %s21, 0
      %p111 = por %p109, %p110
      %s113 = sadd.s32 %s112, 1
      %p116 = scmp.eq.s32.totalorder %s15, 1
      %p117 = scmp.ne.s32.totalorder %s112, %s114
      %p118 = scmp.eq.s32.totalorder %s15, 0
      %p119 = por %p117, %p118
      %p120 = scmp.ne.s32.totalorder %s112, %s114
      %p121 = scmp.eq.s32.totalorder %s20, 1
      %p122 = por %p120, %p121
      %p123 = scmp.ne.s32.totalorder %s114, %s115
      %p124 = scmp.eq.s32.totalorder %s20, 0
      %p125 = por %p123, %p124
      %p126 = scmp.ne.s32.totalorder %s114, %s115
      %p127 = scmp.eq.s32.totalorder %s21, 1
      %p128 = por %p126, %p127
      %p130 = scmp.ne.s32.totalorder %s115, %s129
      %p131 = scmp.eq.s32.totalorder %s21, 0
      %p132 = por %p130, %p131
      %s134 = sadd.s32 %s133, 1
      %p137 = scmp.eq.s32.totalorder %s15, 1
      %p138 = scmp.ne.s32.totalorder %s133, %s135
      %p139 = scmp.eq.s32.totalorder %s15, 0
      %p140 = por %p138, %p139
      %p141 = scmp.ne.s32.totalorder %s133, %s135
      %p142 = scmp.eq.s32.totalorder %s20, 1
      %p143 = por %p141, %p142
      %p144 = scmp.ne.s32.totalorder %s135, %s136
      %p145 = scmp.eq.s32.totalorder %s20, 0
      %p146 = por %p144, %p145
      %p147 = scmp.ne.s32.totalorder %s135, %s136
      %p148 = scmp.eq.s32.totalorder %s21, 1
      %p149 = por %p147, %p148
      %p151 = scmp.ne.s32.totalorder %s136, %s150
      %p152 = scmp.eq.s32.totalorder %s21, 0
      %p153 = por %p151, %p152
      %s154 = ssub.s32 %s15, %s22
      %p155 = scmp.eq.s32.totalorder %s154, 0
      %s157 = sadd.s32 %s156, 1
      %s158 = scalar_select %p155, %s156, %s157
      %p161 = pneg %p155
      %p162 = scmp.eq.s32.totalorder %s15, 1
      %p163 = por %p161, %p162
      %p164 = scmp.ne.s32.totalorder %s156, %s159
      %p165 = scmp.eq.s32.totalorder %s15, 0
      %p166 = por %p164, %p165
      %p167 = scmp.ne.s32.totalorder %s156, %s159
      %p168 = scmp.eq.s32.totalorder %s20, 1
      %p169 = por %p167, %p168
      %p170 = scmp.ne.s32.totalorder %s159, %s160
      %p171 = scmp.eq.s32.totalorder %s20, 0
      %p172 = por %p170, %p171
      %p173 = scmp.ne.s32.totalorder %s159, %s160
      %p174 = scmp.eq.s32.totalorder %s21, 1
      %p175 = por %p173, %p174
      %p177 = scmp.ne.s32.totalorder %s160, %s176
      %p178 = scmp.eq.s32.totalorder %s21, 0
      %p179 = por %p177, %p178
      %p180 = scmp.le.s32.totalorder 1, %s15
      %p181 = scmp.lt.s32.totalorder %s15, 3
      %p182 = pnand %p180, %p181
      %p183 = pneg %p182
      // Predicated region
      $region9: #{tpu_custom_call.1} parent=5 // pred_check
        _
      $region10: #{tpu_custom_call.1} parent=5 // pred_check_branch
        %185 = sbr.rel (%p182) target = $region12
      $region11: #{tpu_custom_call.1} parent=5 // pred_region
        %s186 = ssub.s32 %s15, 1
        // Predicated region
        $region13: #{tpu_custom_call.1} parent=11 // pred_check
          %p187 = pneg %p62
        $region14: #{tpu_custom_call.1} parent=11 // pred_check_branch
          %189 = sbr.rel (%p187) target = $region16
        $region15: #{tpu_custom_call.1} parent=11 // pred_region
          _
        $region16: #{tpu_custom_call.1} parent=11 // pred_fallthru
          _
        // Predicated region
        $region17: #{tpu_custom_call.1} parent=11 // pred_check
          %p190 = pneg %p83
        $region18: #{tpu_custom_call.1} parent=11 // pred_check_branch
          %192 = sbr.rel (%p190) target = $region20
        $region19: #{tpu_custom_call.1} parent=11 // pred_region
          _
        $region20: #{tpu_custom_call.1} parent=11 // pred_fallthru
          _
        // Predicated region
        $region21: #{tpu_custom_call.1} parent=11 // pred_check
          %p193 = pneg %p104
        $region22: #{tpu_custom_call.1} parent=11 // pred_check_branch
          %195 = sbr.rel (%p193) target = $region24
        $region23: #{tpu_custom_call.1} parent=11 // pred_region
          _
        $region24: #{tpu_custom_call.1} parent=11 // pred_fallthru
          _
        // Predicated region
        $region25: #{tpu_custom_call.1} parent=11 // pred_check
          %p196 = pneg %p125
        $region26: #{tpu_custom_call.1} parent=11 // pred_check_branch
          %198 = sbr.rel (%p196) target = $region28
        $region27: #{tpu_custom_call.1} parent=11 // pred_region
          _
        $region28: #{tpu_custom_call.1} parent=11 // pred_fallthru
          _
        // Predicated region
        $region29: #{tpu_custom_call.1} parent=11 // pred_check
          %p199 = pneg %p146
        $region30: #{tpu_custom_call.1} parent=11 // pred_check_branch
          %201 = sbr.rel (%p199) target = $region32
        $region31: #{tpu_custom_call.1} parent=11 // pred_region
          _
        $region32: #{tpu_custom_call.1} parent=11 // pred_fallthru
          _
      $region12: #{tpu_custom_call.1} parent=5 // pred_fallthru
        _
      %p202 = scmp.lt.s32.totalorder %s15, 2
      // Predicated region
      $region33: #{tpu_custom_call.1} parent=5 // pred_check
        %p203 = pneg %p202
      $region34: #{tpu_custom_call.1} parent=5 // pred_check_branch
        %205 = sbr.rel (%p203) target = $region36
      $region35: #{tpu_custom_call.1} parent=5 // pred_region
        // Predicated region
        $region37: #{tpu_custom_call.1} parent=35 // pred_check
          %p206 = pneg %p35
        $region38: #{tpu_custom_call.1} parent=35 // pred_check_branch
          %208 = sbr.rel (%p206) target = $region40
        $region39: #{tpu_custom_call.1} parent=35 // pred_region
          %p209 = scmp.lt.s32.totalorder %s15, 1
          %s210 = scalar_select %p209, %s15, 1
          %s211 = smul.addr %s210, 3
          %s212 = smul.addr %s211, 4
          %s213 = scalar_lea.vmem %s0, %s212
        $region40: #{tpu_custom_call.1} parent=35 // pred_fallthru
          _
      $region36: #{tpu_custom_call.1} parent=5 // pred_fallthru
        _
      %p214 = scmp.le.s32.totalorder 1, %s15
      %p215 = scmp.lt.s32.totalorder %s15, 3
      %p216 = pnand %p214, %p215
      %p217 = pneg %p216
      // Predicated region
      $region41: #{tpu_custom_call.1} parent=5 // pred_check
        _
      $region42: #{tpu_custom_call.1} parent=5 // pred_check_branch
        %219 = sbr.rel (%p216) target = $region44
      $region43: #{tpu_custom_call.1} parent=5 // pred_region
        %s220 = ssub.s32 %s15, 1
        %p221 = scmp.lt.s32.totalorder %s20, 1
        %s222 = scalar_select %p221, %s20, 1
        %s223 = smul.addr %s222, 3
        %s224 = smul.addr %s223, 4
        %s225 = scalar_lea.vmem %s0, %s224
        %p226 = pneg %p41
        %p227 = pneg %p38
        %p228 = pneg %p62
        %p229 = pneg %p59
        %p230 = pneg %p83
        %p231 = pneg %p80
        %p232 = pneg %p104
        %p233 = pneg %p101
        %p234 = pneg %p125
        %p235 = pneg %p122
        %p236 = pneg %p146
        %p237 = pneg %p143
        %p238 = pneg %p172
        %p239 = pneg %p169
        %s240 = sand.u32 %s159, 1
        %s241 = scalar_lea.sflag [#allocation4], %s240
        %s242 = sand.u32 %s159, 1
        %s243 = smul.addr %s242, 48
        %s244 = scalar_lea.vmem [#allocation3], %s243
        %p245 = scmp.lt.s32.totalorder %s20, 1
        %s246 = scalar_select %p245, %s20, 1
        %s247 = smul.addr %s246, 3
        %s248 = smul.addr %s247, 4
        %s249 = scalar_lea.vmem %s0, %s248
        %v250 = vld [vmem:[%s249] sm:$0xff]
        %v251 = vld [vmem:[%s249 + $0x8] sm:$0xf]
        %v252 = vld [vmem:[%s1] sm:$0xff]
        %s253 = scalar_lea.vmem %s1, 8
        %v254 = vld [vmem:[%s253] sm:$0xff]
        %v257 = vcombine.high %v250, %v250
        %258 = vrot.lane.b32.xlu0 %v250, 127
        %v259 = vpop.permute.xlu0 %258
        %260 = vrot.lane.b32.xlu0 %v257, 127
        %v261 = vpop.permute.xlu0 %260
        %262 = vrot.lane.b32.xlu0 %v251, 127
        %v263 = vpop.permute.xlu0 %262
        %vm264 = vcmask 1039360
        %v265 = vsel %vm264, %v259, %v261
        %v266 = vsel %vm264, %v261, %v263
        %vm267 = vcmask 31744
        %v269 = vsel %vm267, %v254, 0
        %vm271 = vcmask 1043456
        %v272 = vsel %vm271, %v265, 0
        %v274 = vsel %vm271, %v266, 0
        %v276 = vsel %vm271, %v263, 0
        %278 = vmatprep.subr.mxu0 0.0
        %279 = vmatpush1.msra.mxu0 0.0
        %280 = vmatprep.subr.mxu0 0.0
        %281 = vmatpush1.msra.mxu0 0.0
        %282 = vmatprep.subr.mxu0 0.0
        %283 = vmatpush1.msra.mxu0 0.0
        %284 = vmatprep.subr.mxu0 0.0
        %285 = vmatpush1.msra.mxu0 0.0
        %286 = vmatprep.subr.mxu0 0.0
        %287 = vmatpush1.msra.mxu0 0.0
        %288 = vmatprep.subr.mxu0 0.0
        %289 = vmatpush1.msra.mxu0 0.0
        %290 = vmatprep.subr.mxu0 0.0
        %291 = vmatpush1.msra.mxu0 0.0
        %292 = vmatprep.subr.mxu0 0.0
        %293 = vmatpush1.msra.mxu0 0.0
        %294 = vmatprep.subr.mxu0 0.0
        %295 = vmatpush1.msra.mxu0 0.0
        %296 = vmatprep.subr.mxu0 0.0
        %297 = vmatpush1.msra.mxu0 0.0
        %298 = vmatprep.subr.mxu0 0.0
        %299 = vmatpush1.msra.mxu0 0.0
        %300 = vmatprep.subr.mxu0 0.0
        %301 = vmatpush1.msra.mxu0 0.0
        %302 = vmatprep.subr.mxu0 0.0
        %303 = vmatpush1.msra.mxu0 0.0
        %304 = vmatprep.subr.mxu0 0.0
        %305 = vmatpush1.msra.mxu0 0.0
        %306 = vmatprep.subr.mxu0 0.0
        %307 = vmatpush1.msra.mxu0 0.0
        %308 = vmatprep.subr.mxu0 %v274
        %309 = vmatpush1.msra.mxu0 %v272
        %310 = vmatprep.subr.mxu0 0.0
        %311 = vmatpush2.msra.mxu0 0.0
        %312 = vmatprep.subr.mxu0 0.0
        %313 = vmatpush2.msra.mxu0 0.0
        %314 = vmatprep.subr.mxu0 0.0
        %315 = vmatpush2.msra.mxu0 0.0
        %316 = vmatprep.subr.mxu0 0.0
        %317 = vmatpush2.msra.mxu0 0.0
        %318 = vmatprep.subr.mxu0 0.0
        %319 = vmatpush2.msra.mxu0 0.0
        %320 = vmatprep.subr.mxu0 0.0
        %321 = vmatpush2.msra.mxu0 0.0
        %322 = vmatprep.subr.mxu0 0.0
        %323 = vmatpush2.msra.mxu0 0.0
        %324 = vmatprep.subr.mxu0 0.0
        %325 = vmatpush2.msra.mxu0 0.0
        %326 = vmatprep.subr.mxu0 0.0
        %327 = vmatpush2.msra.mxu0 0.0
        %328 = vmatprep.subr.mxu0 0.0
        %329 = vmatpush2.msra.mxu0 0.0
        %330 = vmatprep.subr.mxu0 0.0
        %331 = vmatpush2.msra.mxu0 0.0
        %332 = vmatprep.subr.mxu0 0.0
        %333 = vmatpush2.msra.mxu0 0.0
        %334 = vmatprep.subr.mxu0 0.0
        %335 = vmatpush2.msra.mxu0 0.0
        %336 = vmatprep.subr.mxu0 0.0
        %337 = vmatpush2.msra.mxu0 0.0
        %338 = vmatprep.subr.mxu0 0.0
        %339 = vmatpush2.msra.mxu0 0.0
        %340 = vmatprep.subr.mxu0 0.0
        %341 = vmatpush2.msra.mxu0 0.0
        %342 = vmatprep.mubr.f32.mxu0 0.0
        %343 = vmatmul.mubr.f32.gmra.mxu0 %v269
        %v344 = vpop.f32.mrf.mxu0
        %v345 = vadd.f32 0.0, %v344
        %v346 = vpop.f32.mrf.mxu0
        %v347 = vadd.f32 0.0, %v346
        %348 = vdwg.mxu0
        %349 = vmatprep.subr.mxu0 0.0
        %350 = vmatpush1.msra.mxu0 0.0
        %351 = vmatprep.subr.mxu0 0.0
        %352 = vmatpush1.msra.mxu0 0.0
        %353 = vmatprep.subr.mxu0 0.0
        %354 = vmatpush1.msra.mxu0 0.0
        %355 = vmatprep.subr.mxu0 0.0
        %356 = vmatpush1.msra.mxu0 0.0
        %357 = vmatprep.subr.mxu0 0.0
        %358 = vmatpush1.msra.mxu0 0.0
        %359 = vmatprep.subr.mxu0 0.0
        %360 = vmatpush1.msra.mxu0 0.0
        %361 = vmatprep.subr.mxu0 0.0
        %362 = vmatpush1.msra.mxu0 0.0
        %363 = vmatprep.subr.mxu0 0.0
        %364 = vmatpush1.msra.mxu0 0.0
        %365 = vmatprep.subr.mxu0 0.0
        %366 = vmatpush1.msra.mxu0 0.0
        %367 = vmatprep.subr.mxu0 0.0
        %368 = vmatpush1.msra.mxu0 0.0
        %369 = vmatprep.subr.mxu0 0.0
        %370 = vmatpush1.msra.mxu0 0.0
        %371 = vmatprep.subr.mxu0 0.0
        %372 = vmatpush1.msra.mxu0 0.0
        %373 = vmatprep.subr.mxu0 0.0
        %374 = vmatpush1.msra.mxu0 0.0
        %375 = vmatprep.subr.mxu0 0.0
        %376 = vmatpush1.msra.mxu0 0.0
        %377 = vmatprep.subr.mxu0 0.0
        %378 = vmatpush1.msra.mxu0 0.0
        %379 = vmatprep.subr.mxu0 0.0
        %380 = vmatpush1.msra.mxu0 %v276
        %381 = vmatprep.subr.mxu0 0.0
        %382 = vmatpush2.msra.mxu0 0.0
        %383 = vmatprep.subr.mxu0 0.0
        %384 = vmatpush2.msra.mxu0 0.0
        %385 = vmatprep.subr.mxu0 0.0
        %386 = vmatpush2.msra.mxu0 0.0
        %387 = vmatprep.subr.mxu0 0.0
        %388 = vmatpush2.msra.mxu0 0.0
        %389 = vmatprep.subr.mxu0 0.0
        %390 = vmatpush2.msra.mxu0 0.0
        %391 = vmatprep.subr.mxu0 0.0
        %392 = vmatpush2.msra.mxu0 0.0
        %393 = vmatprep.subr.mxu0 0.0
        %394 = vmatpush2.msra.mxu0 0.0
        %395 = vmatprep.subr.mxu0 0.0
        %396 = vmatpush2.msra.mxu0 0.0
        %397 = vmatprep.subr.mxu0 0.0
        %398 = vmatpush2.msra.mxu0 0.0
        %399 = vmatprep.subr.mxu0 0.0
        %400 = vmatpush2.msra.mxu0 0.0
        %401 = vmatprep.subr.mxu0 0.0
        %402 = vmatpush2.msra.mxu0 0.0
        %403 = vmatprep.subr.mxu0 0.0
        %404 = vmatpush2.msra.mxu0 0.0
        %405 = vmatprep.subr.mxu0 0.0
        %406 = vmatpush2.msra.mxu0 0.0
        %407 = vmatprep.subr.mxu0 0.0
        %408 = vmatpush2.msra.mxu0 0.0
        %409 = vmatprep.subr.mxu0 0.0
        %410 = vmatpush2.msra.mxu0 0.0
        %411 = vmatprep.subr.mxu0 0.0
        %412 = vmatpush2.msra.mxu0 0.0
        %413 = vmatprep.mubr.f32.mxu0 0.0
        %414 = vmatmul.mubr.f32.gmra.mxu0 %v269
        %v415 = vpop.f32.mrf.mxu0
        %v416 = vadd.f32 0.0, %v415
        %v417 = vpop.f32.mrf.mxu0
        %418 = vdwg.mxu0
        %v420 = vsel %vm267, %v252, 0
        %v422 = vsel %vm271, %v250, 0
        %v424 = vsel %vm271, %v257, 0
        %v426 = vsel %vm271, %v251, 0
        %428 = vmatprep.subr.mxu0 0.0
        %429 = vmatpush1.msra.mxu0 0.0
        %430 = vmatprep.subr.mxu0 0.0
        %431 = vmatpush1.msra.mxu0 0.0
        %432 = vmatprep.subr.mxu0 0.0
        %433 = vmatpush1.msra.mxu0 0.0
        %434 = vmatprep.subr.mxu0 0.0
        %435 = vmatpush1.msra.mxu0 0.0
        %436 = vmatprep.subr.mxu0 0.0
        %437 = vmatpush1.msra.mxu0 0.0
        %438 = vmatprep.subr.mxu0 0.0
        %439 = vmatpush1.msra.mxu0 0.0
        %440 = vmatprep.subr.mxu0 0.0
        %441 = vmatpush1.msra.mxu0 0.0
        %442 = vmatprep.subr.mxu0 0.0
        %443 = vmatpush1.msra.mxu0 0.0
        %444 = vmatprep.subr.mxu0 0.0
        %445 = vmatpush1.msra.mxu0 0.0
        %446 = vmatprep.subr.mxu0 0.0
        %447 = vmatpush1.msra.mxu0 0.0
        %448 = vmatprep.subr.mxu0 0.0
        %449 = vmatpush1.msra.mxu0 0.0
        %450 = vmatprep.subr.mxu0 0.0
        %451 = vmatpush1.msra.mxu0 0.0
        %452 = vmatprep.subr.mxu0 0.0
        %453 = vmatpush1.msra.mxu0 0.0
        %454 = vmatprep.subr.mxu0 0.0
        %455 = vmatpush1.msra.mxu0 0.0
        %456 = vmatprep.subr.mxu0 0.0
        %457 = vmatpush1.msra.mxu0 0.0
        %458 = vmatprep.subr.mxu0 %v424
        %459 = vmatpush1.msra.mxu0 %v422
        %460 = vmatprep.subr.mxu0 0.0
        %461 = vmatpush2.msra.mxu0 0.0
        %462 = vmatprep.subr.mxu0 0.0
        %463 = vmatpush2.msra.mxu0 0.0
        %464 = vmatprep.subr.mxu0 0.0
        %465 = vmatpush2.msra.mxu0 0.0
        %466 = vmatprep.subr.mxu0 0.0
        %467 = vmatpush2.msra.mxu0 0.0
        %468 = vmatprep.subr.mxu0 0.0
        %469 = vmatpush2.msra.mxu0 0.0
        %470 = vmatprep.subr.mxu0 0.0
        %471 = vmatpush2.msra.mxu0 0.0
        %472 = vmatprep.subr.mxu0 0.0
        %473 = vmatpush2.msra.mxu0 0.0
        %474 = vmatprep.subr.mxu0 0.0
        %475 = vmatpush2.msra.mxu0 0.0
        %476 = vmatprep.subr.mxu0 0.0
        %477 = vmatpush2.msra.mxu0 0.0
        %478 = vmatprep.subr.mxu0 0.0
        %479 = vmatpush2.msra.mxu0 0.0
        %480 = vmatprep.subr.mxu0 0.0
        %481 = vmatpush2.msra.mxu0 0.0
        %482 = vmatprep.subr.mxu0 0.0
        %483 = vmatpush2.msra.mxu0 0.0
        %484 = vmatprep.subr.mxu0 0.0
        %485 = vmatpush2.msra.mxu0 0.0
        %486 = vmatprep.subr.mxu0 0.0
        %487 = vmatpush2.msra.mxu0 0.0
        %488 = vmatprep.subr.mxu0 0.0
        %489 = vmatpush2.msra.mxu0 0.0
        %490 = vmatprep.subr.mxu0 0.0
        %491 = vmatpush2.msra.mxu0 0.0
        %492 = vmatprep.mubr.f32.mxu0 0.0
        %493 = vmatmul.mubr.f32.gmra.mxu0 %v420
        %v494 = vpop.f32.mrf.mxu0
        %v495 = vadd.f32 %v345, %v494
        %v496 = vpop.f32.mrf.mxu0
        %v497 = vadd.f32 %v347, %v496
        %498 = vdwg.mxu0
        %499 = vmatprep.subr.mxu0 0.0
        %500 = vmatpush1.msra.mxu0 0.0
        %501 = vmatprep.subr.mxu0 0.0
        %502 = vmatpush1.msra.mxu0 0.0
        %503 = vmatprep.subr.mxu0 0.0
        %504 = vmatpush1.msra.mxu0 0.0
        %505 = vmatprep.subr.mxu0 0.0
        %506 = vmatpush1.msra.mxu0 0.0
        %507 = vmatprep.subr.mxu0 0.0
        %508 = vmatpush1.msra.mxu0 0.0
        %509 = vmatprep.subr.mxu0 0.0
        %510 = vmatpush1.msra.mxu0 0.0
        %511 = vmatprep.subr.mxu0 0.0
        %512 = vmatpush1.msra.mxu0 0.0
        %513 = vmatprep.subr.mxu0 0.0
        %514 = vmatpush1.msra.mxu0 0.0
        %515 = vmatprep.subr.mxu0 0.0
        %516 = vmatpush1.msra.mxu0 0.0
        %517 = vmatprep.subr.mxu0 0.0
        %518 = vmatpush1.msra.mxu0 0.0
        %519 = vmatprep.subr.mxu0 0.0
        %520 = vmatpush1.msra.mxu0 0.0
        %521 = vmatprep.subr.mxu0 0.0
        %522 = vmatpush1.msra.mxu0 0.0
        %523 = vmatprep.subr.mxu0 0.0
        %524 = vmatpush1.msra.mxu0 0.0
        %525 = vmatprep.subr.mxu0 0.0
        %526 = vmatpush1.msra.mxu0 0.0
        %527 = vmatprep.subr.mxu0 0.0
        %528 = vmatpush1.msra.mxu0 0.0
        %529 = vmatprep.subr.mxu0 0.0
        %530 = vmatpush1.msra.mxu0 %v426
        %531 = vmatprep.subr.mxu0 0.0
        %532 = vmatpush2.msra.mxu0 0.0
        %533 = vmatprep.subr.mxu0 0.0
        %534 = vmatpush2.msra.mxu0 0.0
        %535 = vmatprep.subr.mxu0 0.0
        %536 = vmatpush2.msra.mxu0 0.0
        %537 = vmatprep.subr.mxu0 0.0
        %538 = vmatpush2.msra.mxu0 0.0
        %539 = vmatprep.subr.mxu0 0.0
        %540 = vmatpush2.msra.mxu0 0.0
        %541 = vmatprep.subr.mxu0 0.0
        %542 = vmatpush2.msra.mxu0 0.0
        %543 = vmatprep.subr.mxu0 0.0
        %544 = vmatpush2.msra.mxu0 0.0
        %545 = vmatprep.subr.mxu0 0.0
        %546 = vmatpush2.msra.mxu0 0.0
        %547 = vmatprep.subr.mxu0 0.0
        %548 = vmatpush2.msra.mxu0 0.0
        %549 = vmatprep.subr.mxu0 0.0
        %550 = vmatpush2.msra.mxu0 0.0
        %551 = vmatprep.subr.mxu0 0.0
        %552 = vmatpush2.msra.mxu0 0.0
        %553 = vmatprep.subr.mxu0 0.0
        %554 = vmatpush2.msra.mxu0 0.0
        %555 = vmatprep.subr.mxu0 0.0
        %556 = vmatpush2.msra.mxu0 0.0
        %557 = vmatprep.subr.mxu0 0.0
        %558 = vmatpush2.msra.mxu0 0.0
        %559 = vmatprep.subr.mxu0 0.0
        %560 = vmatpush2.msra.mxu0 0.0
        %561 = vmatprep.subr.mxu0 0.0
        %562 = vmatpush2.msra.mxu0 0.0
        %563 = vmatprep.mubr.f32.mxu0 0.0
        %564 = vmatmul.mubr.f32.gmra.mxu0 %v420
        %v565 = vpop.f32.mrf.mxu0
        %v566 = vadd.f32 %v416, %v565
        %v567 = vpop.f32.mrf.mxu0
        %568 = vdwg.mxu0
        %v569 = vld [vmem:[%s249] sm:$0xff]
        %v570 = vld [vmem:[%s249 + $0x8] sm:$0xf]
        %s571 = scalar_lea.vmem %s1, 16
        %v572 = vld [vmem:[%s571] sm:$0xff]
        %v575 = vcombine.high %v569, %v569
        %576 = vrot.lane.b32.xlu0 %v569, 126
        %v577 = vpop.permute.xlu0 %576
        %578 = vrot.lane.b32.xlu0 %v575, 126
        %v579 = vpop.permute.xlu0 %578
        %580 = vrot.lane.b32.xlu0 %v570, 126
        %v581 = vpop.permute.xlu0 %580
        %vm582 = vcmask 1031168
        %v583 = vsel %vm582, %v577, %v579
        %v584 = vsel %vm582, %v579, %v581
        %v586 = vsel %vm267, %v572, 0
        %v588 = vsel %vm271, %v583, 0
        %v590 = vsel %vm271, %v584, 0
        %v592 = vsel %vm271, %v581, 0
        %594 = vmatprep.subr.mxu0 0.0
        %595 = vmatpush1.msra.mxu0 0.0
        %596 = vmatprep.subr.mxu0 0.0
        %597 = vmatpush1.msra.mxu0 0.0
        %598 = vmatprep.subr.mxu0 0.0
        %599 = vmatpush1.msra.mxu0 0.0
        %600 = vmatprep.subr.mxu0 0.0
        %601 = vmatpush1.msra.mxu0 0.0
        %602 = vmatprep.subr.mxu0 0.0
        %603 = vmatpush1.msra.mxu0 0.0
        %604 = vmatprep.subr.mxu0 0.0
        %605 = vmatpush1.msra.mxu0 0.0
        %606 = vmatprep.subr.mxu0 0.0
        %607 = vmatpush1.msra.mxu0 0.0
        %608 = vmatprep.subr.mxu0 0.0
        %609 = vmatpush1.msra.mxu0 0.0
        %610 = vmatprep.subr.mxu0 0.0
        %611 = vmatpush1.msra.mxu0 0.0
        %612 = vmatprep.subr.mxu0 0.0
        %613 = vmatpush1.msra.mxu0 0.0
        %614 = vmatprep.subr.mxu0 0.0
        %615 = vmatpush1.msra.mxu0 0.0
        %616 = vmatprep.subr.mxu0 0.0
        %617 = vmatpush1.msra.mxu0 0.0
        %618 = vmatprep.subr.mxu0 0.0
        %619 = vmatpush1.msra.mxu0 0.0
        %620 = vmatprep.subr.mxu0 0.0
        %621 = vmatpush1.msra.mxu0 0.0
        %622 = vmatprep.subr.mxu0 0.0
        %623 = vmatpush1.msra.mxu0 0.0
        %624 = vmatprep.subr.mxu0 %v590
        %625 = vmatpush1.msra.mxu0 %v588
        %626 = vmatprep.subr.mxu0 0.0
        %627 = vmatpush2.msra.mxu0 0.0
        %628 = vmatprep.subr.mxu0 0.0
        %629 = vmatpush2.msra.mxu0 0.0
        %630 = vmatprep.subr.mxu0 0.0
        %631 = vmatpush2.msra.mxu0 0.0
        %632 = vmatprep.subr.mxu0 0.0
        %633 = vmatpush2.msra.mxu0 0.0
        %634 = vmatprep.subr.mxu0 0.0
        %635 = vmatpush2.msra.mxu0 0.0
        %636 = vmatprep.subr.mxu0 0.0
        %637 = vmatpush2.msra.mxu0 0.0
        %638 = vmatprep.subr.mxu0 0.0
        %639 = vmatpush2.msra.mxu0 0.0
        %640 = vmatprep.subr.mxu0 0.0
        %641 = vmatpush2.msra.mxu0 0.0
        %642 = vmatprep.subr.mxu0 0.0
        %643 = vmatpush2.msra.mxu0 0.0
        %644 = vmatprep.subr.mxu0 0.0
        %645 = vmatpush2.msra.mxu0 0.0
        %646 = vmatprep.subr.mxu0 0.0
        %647 = vmatpush2.msra.mxu0 0.0
        %648 = vmatprep.subr.mxu0 0.0
        %649 = vmatpush2.msra.mxu0 0.0
        %650 = vmatprep.subr.mxu0 0.0
        %651 = vmatpush2.msra.mxu0 0.0
        %652 = vmatprep.subr.mxu0 0.0
        %653 = vmatpush2.msra.mxu0 0.0
        %654 = vmatprep.subr.mxu0 0.0
        %655 = vmatpush2.msra.mxu0 0.0
        %656 = vmatprep.subr.mxu0 0.0
        %657 = vmatpush2.msra.mxu0 0.0
        %658 = vmatprep.mubr.f32.mxu0 0.0
        %659 = vmatmul.mubr.f32.gmra.mxu0 %v586
        %v660 = vpop.f32.mrf.mxu0
        %v661 = vadd.f32 0.0, %v660
        %v662 = vpop.f32.mrf.mxu0
        %v663 = vadd.f32 0.0, %v662
        %664 = vdwg.mxu0
        %665 = vmatprep.subr.mxu0 0.0
        %666 = vmatpush1.msra.mxu0 0.0
        %667 = vmatprep.subr.mxu0 0.0
        %668 = vmatpush1.msra.mxu0 0.0
        %669 = vmatprep.subr.mxu0 0.0
        %670 = vmatpush1.msra.mxu0 0.0
        %671 = vmatprep.subr.mxu0 0.0
        %672 = vmatpush1.msra.mxu0 0.0
        %673 = vmatprep.subr.mxu0 0.0
        %674 = vmatpush1.msra.mxu0 0.0
        %675 = vmatprep.subr.mxu0 0.0
        %676 = vmatpush1.msra.mxu0 0.0
        %677 = vmatprep.subr.mxu0 0.0
        %678 = vmatpush1.msra.mxu0 0.0
        %679 = vmatprep.subr.mxu0 0.0
        %680 = vmatpush1.msra.mxu0 0.0
        %681 = vmatprep.subr.mxu0 0.0
        %682 = vmatpush1.msra.mxu0 0.0
        %683 = vmatprep.subr.mxu0 0.0
        %684 = vmatpush1.msra.mxu0 0.0
        %685 = vmatprep.subr.mxu0 0.0
        %686 = vmatpush1.msra.mxu0 0.0
        %687 = vmatprep.subr.mxu0 0.0
        %688 = vmatpush1.msra.mxu0 0.0
        %689 = vmatprep.subr.mxu0 0.0
        %690 = vmatpush1.msra.mxu0 0.0
        %691 = vmatprep.subr.mxu0 0.0
        %692 = vmatpush1.msra.mxu0 0.0
        %693 = vmatprep.subr.mxu0 0.0
        %694 = vmatpush1.msra.mxu0 0.0
        %695 = vmatprep.subr.mxu0 0.0
        %696 = vmatpush1.msra.mxu0 %v592
        %697 = vmatprep.subr.mxu0 0.0
        %698 = vmatpush2.msra.mxu0 0.0
        %699 = vmatprep.subr.mxu0 0.0
        %700 = vmatpush2.msra.mxu0 0.0
        %701 = vmatprep.subr.mxu0 0.0
        %702 = vmatpush2.msra.mxu0 0.0
        %703 = vmatprep.subr.mxu0 0.0
        %704 = vmatpush2.msra.mxu0 0.0
        %705 = vmatprep.subr.mxu0 0.0
        %706 = vmatpush2.msra.mxu0 0.0
        %707 = vmatprep.subr.mxu0 0.0
        %708 = vmatpush2.msra.mxu0 0.0
        %709 = vmatprep.subr.mxu0 0.0
        %710 = vmatpush2.msra.mxu0 0.0
        %711 = vmatprep.subr.mxu0 0.0
        %712 = vmatpush2.msra.mxu0 0.0
        %713 = vmatprep.subr.mxu0 0.0
        %714 = vmatpush2.msra.mxu0 0.0
        %715 = vmatprep.subr.mxu0 0.0
        %716 = vmatpush2.msra.mxu0 0.0
        %717 = vmatprep.subr.mxu0 0.0
        %718 = vmatpush2.msra.mxu0 0.0
        %719 = vmatprep.subr.mxu0 0.0
        %720 = vmatpush2.msra.mxu0 0.0
        %721 = vmatprep.subr.mxu0 0.0
        %722 = vmatpush2.msra.mxu0 0.0
        %723 = vmatprep.subr.mxu0 0.0
        %724 = vmatpush2.msra.mxu0 0.0
        %725 = vmatprep.subr.mxu0 0.0
        %726 = vmatpush2.msra.mxu0 0.0
        %727 = vmatprep.subr.mxu0 0.0
        %728 = vmatpush2.msra.mxu0 0.0
        %729 = vmatprep.mubr.f32.mxu0 0.0
        %730 = vmatmul.mubr.f32.gmra.mxu0 %v586
        %v731 = vpop.f32.mrf.mxu0
        %v732 = vadd.f32 0.0, %v731
        %v733 = vpop.f32.mrf.mxu0
        %734 = vdwg.mxu0
        %v735 = vadd.f32 %v495, %v661
        %v736 = vadd.f32 %v497, %v663
        %v737 = vadd.f32 %v566, %v732
        %v738 = vld [vmem:[%s249] sm:$0xff]
        %v739 = vld [vmem:[%s249 + $0x8] sm:$0xf]
        %s740 = scalar_lea.vmem %s1, 24
        %v741 = vld [vmem:[%s740] sm:$0xff]
        %v744 = vcombine.high %v738, %v738
        %745 = vrot.lane.b32.xlu0 %v738, 110
        %v746 = vpop.permute.xlu0 %745
        %747 = vrot.lane.b32.xlu0 %v744, 110
        %v748 = vpop.permute.xlu0 %747
        %749 = vrot.lane.b32.xlu0 %v739, 110
        %v750 = vpop.permute.xlu0 %749
        %vm751 = vcmask 900096
        %v752 = vsel %vm751, %v746, %v748
        %v753 = vsel %vm751, %v748, %v750
        %v755 = vsel %vm267, %v741, 0
        %v757 = vsel %vm271, %v752, 0
        %v759 = vsel %vm271, %v753, 0
        %v761 = vsel %vm271, %v750, 0
        %763 = vmatprep.subr.mxu0 0.0
        %764 = vmatpush1.msra.mxu0 0.0
        %765 = vmatprep.subr.mxu0 0.0
        %766 = vmatpush1.msra.mxu0 0.0
        %767 = vmatprep.subr.mxu0 0.0
        %768 = vmatpush1.msra.mxu0 0.0
        %769 = vmatprep.subr.mxu0 0.0
        %770 = vmatpush1.msra.mxu0 0.0
        %771 = vmatprep.subr.mxu0 0.0
        %772 = vmatpush1.msra.mxu0 0.0
        %773 = vmatprep.subr.mxu0 0.0
        %774 = vmatpush1.msra.mxu0 0.0
        %775 = vmatprep.subr.mxu0 0.0
        %776 = vmatpush1.msra.mxu0 0.0
        %777 = vmatprep.subr.mxu0 0.0
        %778 = vmatpush1.msra.mxu0 0.0
        %779 = vmatprep.subr.mxu0 0.0
        %780 = vmatpush1.msra.mxu0 0.0
        %781 = vmatprep.subr.mxu0 0.0
        %782 = vmatpush1.msra.mxu0 0.0
        %783 = vmatprep.subr.mxu0 0.0
        %784 = vmatpush1.msra.mxu0 0.0
        %785 = vmatprep.subr.mxu0 0.0
        %786 = vmatpush1.msra.mxu0 0.0
        %787 = vmatprep.subr.mxu0 0.0
        %788 = vmatpush1.msra.mxu0 0.0
        %789 = vmatprep.subr.mxu0 0.0
        %790 = vmatpush1.msra.mxu0 0.0
        %791 = vmatprep.subr.mxu0 0.0
        %792 = vmatpush1.msra.mxu0 0.0
        %793 = vmatprep.subr.mxu0 %v759
        %794 = vmatpush1.msra.mxu0 %v757
        %795 = vmatprep.subr.mxu0 0.0
        %796 = vmatpush2.msra.mxu0 0.0
        %797 = vmatprep.subr.mxu0 0.0
        %798 = vmatpush2.msra.mxu0 0.0
        %799 = vmatprep.subr.mxu0 0.0
        %800 = vmatpush2.msra.mxu0 0.0
        %801 = vmatprep.subr.mxu0 0.0
        %802 = vmatpush2.msra.mxu0 0.0
        %803 = vmatprep.subr.mxu0 0.0
        %804 = vmatpush2.msra.mxu0 0.0
        %805 = vmatprep.subr.mxu0 0.0
        %806 = vmatpush2.msra.mxu0 0.0
        %807 = vmatprep.subr.mxu0 0.0
        %808 = vmatpush2.msra.mxu0 0.0
        %809 = vmatprep.subr.mxu0 0.0
        %810 = vmatpush2.msra.mxu0 0.0
        %811 = vmatprep.subr.mxu0 0.0
        %812 = vmatpush2.msra.mxu0 0.0
        %813 = vmatprep.subr.mxu0 0.0
        %814 = vmatpush2.msra.mxu0 0.0
        %815 = vmatprep.subr.mxu0 0.0
        %816 = vmatpush2.msra.mxu0 0.0
        %817 = vmatprep.subr.mxu0 0.0
        %818 = vmatpush2.msra.mxu0 0.0
        %819 = vmatprep.subr.mxu0 0.0
        %820 = vmatpush2.msra.mxu0 0.0
        %821 = vmatprep.subr.mxu0 0.0
        %822 = vmatpush2.msra.mxu0 0.0
        %823 = vmatprep.subr.mxu0 0.0
        %824 = vmatpush2.msra.mxu0 0.0
        %825 = vmatprep.subr.mxu0 0.0
        %826 = vmatpush2.msra.mxu0 0.0
        %827 = vmatprep.mubr.f32.mxu0 0.0
        %828 = vmatmul.mubr.f32.gmra.mxu0 %v755
        %v829 = vpop.f32.mrf.mxu0
        %v830 = vadd.f32 0.0, %v829
        %v831 = vpop.f32.mrf.mxu0
        %v832 = vadd.f32 0.0, %v831
        %833 = vdwg.mxu0
        %834 = vmatprep.subr.mxu0 0.0
        %835 = vmatpush1.msra.mxu0 0.0
        %836 = vmatprep.subr.mxu0 0.0
        %837 = vmatpush1.msra.mxu0 0.0
        %838 = vmatprep.subr.mxu0 0.0
        %839 = vmatpush1.msra.mxu0 0.0
        %840 = vmatprep.subr.mxu0 0.0
        %841 = vmatpush1.msra.mxu0 0.0
        %842 = vmatprep.subr.mxu0 0.0
        %843 = vmatpush1.msra.mxu0 0.0
        %844 = vmatprep.subr.mxu0 0.0
        %845 = vmatpush1.msra.mxu0 0.0
        %846 = vmatprep.subr.mxu0 0.0
        %847 = vmatpush1.msra.mxu0 0.0
        %848 = vmatprep.subr.mxu0 0.0
        %849 = vmatpush1.msra.mxu0 0.0
        %850 = vmatprep.subr.mxu0 0.0
        %851 = vmatpush1.msra.mxu0 0.0
        %852 = vmatprep.subr.mxu0 0.0
        %853 = vmatpush1.msra.mxu0 0.0
        %854 = vmatprep.subr.mxu0 0.0
        %855 = vmatpush1.msra.mxu0 0.0
        %856 = vmatprep.subr.mxu0 0.0
        %857 = vmatpush1.msra.mxu0 0.0
        %858 = vmatprep.subr.mxu0 0.0
        %859 = vmatpush1.msra.mxu0 0.0
        %860 = vmatprep.subr.mxu0 0.0
        %861 = vmatpush1.msra.mxu0 0.0
        %862 = vmatprep.subr.mxu0 0.0
        %863 = vmatpush1.msra.mxu0 0.0
        %864 = vmatprep.subr.mxu0 0.0
        %865 = vmatpush1.msra.mxu0 %v761
        %866 = vmatprep.subr.mxu0 0.0
        %867 = vmatpush2.msra.mxu0 0.0
        %868 = vmatprep.subr.mxu0 0.0
        %869 = vmatpush2.msra.mxu0 0.0
        %870 = vmatprep.subr.mxu0 0.0
        %871 = vmatpush2.msra.mxu0 0.0
        %872 = vmatprep.subr.mxu0 0.0
        %873 = vmatpush2.msra.mxu0 0.0
        %874 = vmatprep.subr.mxu0 0.0
        %875 = vmatpush2.msra.mxu0 0.0
        %876 = vmatprep.subr.mxu0 0.0
        %877 = vmatpush2.msra.mxu0 0.0
        %878 = vmatprep.subr.mxu0 0.0
        %879 = vmatpush2.msra.mxu0 0.0
        %880 = vmatprep.subr.mxu0 0.0
        %881 = vmatpush2.msra.mxu0 0.0
        %882 = vmatprep.subr.mxu0 0.0
        %883 = vmatpush2.msra.mxu0 0.0
        %884 = vmatprep.subr.mxu0 0.0
        %885 = vmatpush2.msra.mxu0 0.0
        %886 = vmatprep.subr.mxu0 0.0
        %887 = vmatpush2.msra.mxu0 0.0
        %888 = vmatprep.subr.mxu0 0.0
        %889 = vmatpush2.msra.mxu0 0.0
        %890 = vmatprep.subr.mxu0 0.0
        %891 = vmatpush2.msra.mxu0 0.0
        %892 = vmatprep.subr.mxu0 0.0
        %893 = vmatpush2.msra.mxu0 0.0
        %894 = vmatprep.subr.mxu0 0.0
        %895 = vmatpush2.msra.mxu0 0.0
        %896 = vmatprep.subr.mxu0 0.0
        %897 = vmatpush2.msra.mxu0 0.0
        %898 = vmatprep.mubr.f32.mxu0 0.0
        %899 = vmatmul.mubr.f32.gmra.mxu0 %v755
        %v900 = vpop.f32.mrf.mxu0
        %v901 = vadd.f32 0.0, %v900
        %v902 = vpop.f32.mrf.mxu0
        %903 = vdwg.mxu0
        %v904 = vadd.f32 %v735, %v830
        %v905 = vadd.f32 %v736, %v832
        %v906 = vadd.f32 %v737, %v901
        %v907 = vld [vmem:[%s249] sm:$0xff]
        %v908 = vld [vmem:[%s249 + $0x8] sm:$0xf]
        %s909 = scalar_lea.vmem %s1, 32
        %v910 = vld [vmem:[%s909] sm:$0xff]
        %v913 = vcombine.high %v907, %v907
        %914 = vrot.lane.b32.xlu0 %v907, 109
        %v915 = vpop.permute.xlu0 %914
        %916 = vrot.lane.b32.xlu0 %v913, 109
        %v917 = vpop.permute.xlu0 %916
        %918 = vrot.lane.b32.xlu0 %v908, 109
        %v919 = vpop.permute.xlu0 %918
        %vm920 = vcmask 891904
        %v921 = vsel %vm920, %v915, %v917
        %v922 = vsel %vm920, %v917, %v919
        %v924 = vsel %vm267, %v910, 0
        %v926 = vsel %vm271, %v921, 0
        %v928 = vsel %vm271, %v922, 0
        %v930 = vsel %vm271, %v919, 0
        %932 = vmatprep.subr.mxu0 0.0
        %933 = vmatpush1.msra.mxu0 0.0
        %934 = vmatprep.subr.mxu0 0.0
        %935 = vmatpush1.msra.mxu0 0.0
        %936 = vmatprep.subr.mxu0 0.0
        %937 = vmatpush1.msra.mxu0 0.0
        %938 = vmatprep.subr.mxu0 0.0
        %939 = vmatpush1.msra.mxu0 0.0
        %940 = vmatprep.subr.mxu0 0.0
        %941 = vmatpush1.msra.mxu0 0.0
        %942 = vmatprep.subr.mxu0 0.0
        %943 = vmatpush1.msra.mxu0 0.0
        %944 = vmatprep.subr.mxu0 0.0
        %945 = vmatpush1.msra.mxu0 0.0
        %946 = vmatprep.subr.mxu0 0.0
        %947 = vmatpush1.msra.mxu0 0.0
        %948 = vmatprep.subr.mxu0 0.0
        %949 = vmatpush1.msra.mxu0 0.0
        %950 = vmatprep.subr.mxu0 0.0
        %951 = vmatpush1.msra.mxu0 0.0
        %952 = vmatprep.subr.mxu0 0.0
        %953 = vmatpush1.msra.mxu0 0.0
        %954 = vmatprep.subr.mxu0 0.0
        %955 = vmatpush1.msra.mxu0 0.0
        %956 = vmatprep.subr.mxu0 0.0
        %957 = vmatpush1.msra.mxu0 0.0
        %958 = vmatprep.subr.mxu0 0.0
        %959 = vmatpush1.msra.mxu0 0.0
        %960 = vmatprep.subr.mxu0 0.0
        %961 = vmatpush1.msra.mxu0 0.0
        %962 = vmatprep.subr.mxu0 %v928
        %963 = vmatpush1.msra.mxu0 %v926
        %964 = vmatprep.subr.mxu0 0.0
        %965 = vmatpush2.msra.mxu0 0.0
        %966 = vmatprep.subr.mxu0 0.0
        %967 = vmatpush2.msra.mxu0 0.0
        %968 = vmatprep.subr.mxu0 0.0
        %969 = vmatpush2.msra.mxu0 0.0
        %970 = vmatprep.subr.mxu0 0.0
        %971 = vmatpush2.msra.mxu0 0.0
        %972 = vmatprep.subr.mxu0 0.0
        %973 = vmatpush2.msra.mxu0 0.0
        %974 = vmatprep.subr.mxu0 0.0
        %975 = vmatpush2.msra.mxu0 0.0
        %976 = vmatprep.subr.mxu0 0.0
        %977 = vmatpush2.msra.mxu0 0.0
        %978 = vmatprep.subr.mxu0 0.0
        %979 = vmatpush2.msra.mxu0 0.0
        %980 = vmatprep.subr.mxu0 0.0
        %981 = vmatpush2.msra.mxu0 0.0
        %982 = vmatprep.subr.mxu0 0.0
        %983 = vmatpush2.msra.mxu0 0.0
        %984 = vmatprep.subr.mxu0 0.0
        %985 = vmatpush2.msra.mxu0 0.0
        %986 = vmatprep.subr.mxu0 0.0
        %987 = vmatpush2.msra.mxu0 0.0
        %988 = vmatprep.subr.mxu0 0.0
        %989 = vmatpush2.msra.mxu0 0.0
        %990 = vmatprep.subr.mxu0 0.0
        %991 = vmatpush2.msra.mxu0 0.0
        %992 = vmatprep.subr.mxu0 0.0
        %993 = vmatpush2.msra.mxu0 0.0
        %994 = vmatprep.subr.mxu0 0.0
        %995 = vmatpush2.msra.mxu0 0.0
        %996 = vmatprep.mubr.f32.mxu0 0.0
        %997 = vmatmul.mubr.f32.gmra.mxu0 %v924
        %v998 = vpop.f32.mrf.mxu0
        %v999 = vadd.f32 0.0, %v998
        %v1000 = vpop.f32.mrf.mxu0
        %v1001 = vadd.f32 0.0, %v1000
        %1002 = vdwg.mxu0
        %1003 = vmatprep.subr.mxu0 0.0
        %1004 = vmatpush1.msra.mxu0 0.0
        %1005 = vmatprep.subr.mxu0 0.0
        %1006 = vmatpush1.msra.mxu0 0.0
        %1007 = vmatprep.subr.mxu0 0.0
        %1008 = vmatpush1.msra.mxu0 0.0
        %1009 = vmatprep.subr.mxu0 0.0
        %1010 = vmatpush1.msra.mxu0 0.0
        %1011 = vmatprep.subr.mxu0 0.0
        %1012 = vmatpush1.msra.mxu0 0.0
        %1013 = vmatprep.subr.mxu0 0.0
        %1014 = vmatpush1.msra.mxu0 0.0
        %1015 = vmatprep.subr.mxu0 0.0
        %1016 = vmatpush1.msra.mxu0 0.0
        %1017 = vmatprep.subr.mxu0 0.0
        %1018 = vmatpush1.msra.mxu0 0.0
        %1019 = vmatprep.subr.mxu0 0.0
        %1020 = vmatpush1.msra.mxu0 0.0
        %1021 = vmatprep.subr.mxu0 0.0
        %1022 = vmatpush1.msra.mxu0 0.0
        %1023 = vmatprep.subr.mxu0 0.0
        %1024 = vmatpush1.msra.mxu0 0.0
        %1025 = vmatprep.subr.mxu0 0.0
        %1026 = vmatpush1.msra.mxu0 0.0
        %1027 = vmatprep.subr.mxu0 0.0
        %1028 = vmatpush1.msra.mxu0 0.0
        %1029 = vmatprep.subr.mxu0 0.0
        %1030 = vmatpush1.msra.mxu0 0.0
        %1031 = vmatprep.subr.mxu0 0.0
        %1032 = vmatpush1.msra.mxu0 0.0
        %1033 = vmatprep.subr.mxu0 0.0
        %1034 = vmatpush1.msra.mxu0 %v930
        %1035 = vmatprep.subr.mxu0 0.0
        %1036 = vmatpush2.msra.mxu0 0.0
        %1037 = vmatprep.subr.mxu0 0.0
        %1038 = vmatpush2.msra.mxu0 0.0
        %1039 = vmatprep.subr.mxu0 0.0
        %1040 = vmatpush2.msra.mxu0 0.0
        %1041 = vmatprep.subr.mxu0 0.0
        %1042 = vmatpush2.msra.mxu0 0.0
        %1043 = vmatprep.subr.mxu0 0.0
        %1044 = vmatpush2.msra.mxu0 0.0
        %1045 = vmatprep.subr.mxu0 0.0
        %1046 = vmatpush2.msra.mxu0 0.0
        %1047 = vmatprep.subr.mxu0 0.0
        %1048 = vmatpush2.msra.mxu0 0.0
        %1049 = vmatprep.subr.mxu0 0.0
        %1050 = vmatpush2.msra.mxu0 0.0
        %1051 = vmatprep.subr.mxu0 0.0
        %1052 = vmatpush2.msra.mxu0 0.0
        %1053 = vmatprep.subr.mxu0 0.0
        %1054 = vmatpush2.msra.mxu0 0.0
        %1055 = vmatprep.subr.mxu0 0.0
        %1056 = vmatpush2.msra.mxu0 0.0
        %1057 = vmatprep.subr.mxu0 0.0
        %1058 = vmatpush2.msra.mxu0 0.0
        %1059 = vmatprep.subr.mxu0 0.0
        %1060 = vmatpush2.msra.mxu0 0.0
        %1061 = vmatprep.subr.mxu0 0.0
        %1062 = vmatpush2.msra.mxu0 0.0
        %1063 = vmatprep.subr.mxu0 0.0
        %1064 = vmatpush2.msra.mxu0 0.0
        %1065 = vmatprep.subr.mxu0 0.0
        %1066 = vmatpush2.msra.mxu0 0.0
        %1067 = vmatprep.mubr.f32.mxu0 0.0
        %1068 = vmatmul.mubr.f32.gmra.mxu0 %v924
        %v1069 = vpop.f32.mrf.mxu0
        %v1070 = vadd.f32 0.0, %v1069
        %v1071 = vpop.f32.mrf.mxu0
        %1072 = vdwg.mxu0
        %v1073 = vadd.f32 %v904, %v999
        %v1074 = vadd.f32 %v905, %v1001
        %v1075 = vadd.f32 %v906, %v1070
        %v1076 = vld [vmem:[%s249] sm:$0xff]
        %v1077 = vld [vmem:[%s249 + $0x8] sm:$0xf]
        %s1078 = scalar_lea.vmem %s1, 40
        %v1079 = vld [vmem:[%s1078] sm:$0xff]
        %v1082 = vcombine.high %v1076, %v1076
        %1083 = vrot.lane.b32.xlu0 %v1076, 108
        %v1084 = vpop.permute.xlu0 %1083
        %1085 = vrot.lane.b32.xlu0 %v1082, 108
        %v1086 = vpop.permute.xlu0 %1085
        %1087 = vrot.lane.b32.xlu0 %v1077, 108
        %v1088 = vpop.permute.xlu0 %1087
        %vm1089 = vcmask 883712
        %v1090 = vsel %vm1089, %v1084, %v1086
        %v1091 = vsel %vm1089, %v1086, %v1088
        %v1093 = vsel %vm267, %v1079, 0
        %v1095 = vsel %vm271, %v1090, 0
        %v1097 = vsel %vm271, %v1091, 0
        %v1099 = vsel %vm271, %v1088, 0
        %1101 = vmatprep.subr.mxu0 0.0
        %1102 = vmatpush1.msra.mxu0 0.0
        %1103 = vmatprep.subr.mxu0 0.0
        %1104 = vmatpush1.msra.mxu0 0.0
        %1105 = vmatprep.subr.mxu0 0.0
        %1106 = vmatpush1.msra.mxu0 0.0
        %1107 = vmatprep.subr.mxu0 0.0
        %1108 = vmatpush1.msra.mxu0 0.0
        %1109 = vmatprep.subr.mxu0 0.0
        %1110 = vmatpush1.msra.mxu0 0.0
        %1111 = vmatprep.subr.mxu0 0.0
        %1112 = vmatpush1.msra.mxu0 0.0
        %1113 = vmatprep.subr.mxu0 0.0
        %1114 = vmatpush1.msra.mxu0 0.0
        %1115 = vmatprep.subr.mxu0 0.0
        %1116 = vmatpush1.msra.mxu0 0.0
        %1117 = vmatprep.subr.mxu0 0.0
        %1118 = vmatpush1.msra.mxu0 0.0
        %1119 = vmatprep.subr.mxu0 0.0
        %1120 = vmatpush1.msra.mxu0 0.0
        %1121 = vmatprep.subr.mxu0 0.0
        %1122 = vmatpush1.msra.mxu0 0.0
        %1123 = vmatprep.subr.mxu0 0.0
        %1124 = vmatpush1.msra.mxu0 0.0
        %1125 = vmatprep.subr.mxu0 0.0
        %1126 = vmatpush1.msra.mxu0 0.0
        %1127 = vmatprep.subr.mxu0 0.0
        %1128 = vmatpush1.msra.mxu0 0.0
        %1129 = vmatprep.subr.mxu0 0.0
        %1130 = vmatpush1.msra.mxu0 0.0
        %1131 = vmatprep.subr.mxu0 %v1097
        %1132 = vmatpush1.msra.mxu0 %v1095
        %1133 = vmatprep.subr.mxu0 0.0
        %1134 = vmatpush2.msra.mxu0 0.0
        %1135 = vmatprep.subr.mxu0 0.0
        %1136 = vmatpush2.msra.mxu0 0.0
        %1137 = vmatprep.subr.mxu0 0.0
        %1138 = vmatpush2.msra.mxu0 0.0
        %1139 = vmatprep.subr.mxu0 0.0
        %1140 = vmatpush2.msra.mxu0 0.0
        %1141 = vmatprep.subr.mxu0 0.0
        %1142 = vmatpush2.msra.mxu0 0.0
        %1143 = vmatprep.subr.mxu0 0.0
        %1144 = vmatpush2.msra.mxu0 0.0
        %1145 = vmatprep.subr.mxu0 0.0
        %1146 = vmatpush2.msra.mxu0 0.0
        %1147 = vmatprep.subr.mxu0 0.0
        %1148 = vmatpush2.msra.mxu0 0.0
        %1149 = vmatprep.subr.mxu0 0.0
        %1150 = vmatpush2.msra.mxu0 0.0
        %1151 = vmatprep.subr.mxu0 0.0
        %1152 = vmatpush2.msra.mxu0 0.0
        %1153 = vmatprep.subr.mxu0 0.0
        %1154 = vmatpush2.msra.mxu0 0.0
        %1155 = vmatprep.subr.mxu0 0.0
        %1156 = vmatpush2.msra.mxu0 0.0
        %1157 = vmatprep.subr.mxu0 0.0
        %1158 = vmatpush2.msra.mxu0 0.0
        %1159 = vmatprep.subr.mxu0 0.0
        %1160 = vmatpush2.msra.mxu0 0.0
        %1161 = vmatprep.subr.mxu0 0.0
        %1162 = vmatpush2.msra.mxu0 0.0
        %1163 = vmatprep.subr.mxu0 0.0
        %1164 = vmatpush2.msra.mxu0 0.0
        %1165 = vmatprep.mubr.f32.mxu0 0.0
        %1166 = vmatmul.mubr.f32.gmra.mxu0 %v1093
        %v1167 = vpop.f32.mrf.mxu0
        %v1168 = vadd.f32 0.0, %v1167
        %v1169 = vpop.f32.mrf.mxu0
        %v1170 = vadd.f32 0.0, %v1169
        %1171 = vdwg.mxu0
        %1172 = vmatprep.subr.mxu0 0.0
        %1173 = vmatpush1.msra.mxu0 0.0
        %1174 = vmatprep.subr.mxu0 0.0
        %1175 = vmatpush1.msra.mxu0 0.0
        %1176 = vmatprep.subr.mxu0 0.0
        %1177 = vmatpush1.msra.mxu0 0.0
        %1178 = vmatprep.subr.mxu0 0.0
        %1179 = vmatpush1.msra.mxu0 0.0
        %1180 = vmatprep.subr.mxu0 0.0
        %1181 = vmatpush1.msra.mxu0 0.0
        %1182 = vmatprep.subr.mxu0 0.0
        %1183 = vmatpush1.msra.mxu0 0.0
        %1184 = vmatprep.subr.mxu0 0.0
        %1185 = vmatpush1.msra.mxu0 0.0
        %1186 = vmatprep.subr.mxu0 0.0
        %1187 = vmatpush1.msra.mxu0 0.0
        %1188 = vmatprep.subr.mxu0 0.0
        %1189 = vmatpush1.msra.mxu0 0.0
        %1190 = vmatprep.subr.mxu0 0.0
        %1191 = vmatpush1.msra.mxu0 0.0
        %1192 = vmatprep.subr.mxu0 0.0
        %1193 = vmatpush1.msra.mxu0 0.0
        %1194 = vmatprep.subr.mxu0 0.0
        %1195 = vmatpush1.msra.mxu0 0.0
        %1196 = vmatprep.subr.mxu0 0.0
        %1197 = vmatpush1.msra.mxu0 0.0
        %1198 = vmatprep.subr.mxu0 0.0
        %1199 = vmatpush1.msra.mxu0 0.0
        %1200 = vmatprep.subr.mxu0 0.0
        %1201 = vmatpush1.msra.mxu0 0.0
        %1202 = vmatprep.subr.mxu0 0.0
        %1203 = vmatpush1.msra.mxu0 %v1099
        %1204 = vmatprep.subr.mxu0 0.0
        %1205 = vmatpush2.msra.mxu0 0.0
        %1206 = vmatprep.subr.mxu0 0.0
        %1207 = vmatpush2.msra.mxu0 0.0
        %1208 = vmatprep.subr.mxu0 0.0
        %1209 = vmatpush2.msra.mxu0 0.0
        %1210 = vmatprep.subr.mxu0 0.0
        %1211 = vmatpush2.msra.mxu0 0.0
        %1212 = vmatprep.subr.mxu0 0.0
        %1213 = vmatpush2.msra.mxu0 0.0
        %1214 = vmatprep.subr.mxu0 0.0
        %1215 = vmatpush2.msra.mxu0 0.0
        %1216 = vmatprep.subr.mxu0 0.0
        %1217 = vmatpush2.msra.mxu0 0.0
        %1218 = vmatprep.subr.mxu0 0.0
        %1219 = vmatpush2.msra.mxu0 0.0
        %1220 = vmatprep.subr.mxu0 0.0
        %1221 = vmatpush2.msra.mxu0 0.0
        %1222 = vmatprep.subr.mxu0 0.0
        %1223 = vmatpush2.msra.mxu0 0.0
        %1224 = vmatprep.subr.mxu0 0.0
        %1225 = vmatpush2.msra.mxu0 0.0
        %1226 = vmatprep.subr.mxu0 0.0
        %1227 = vmatpush2.msra.mxu0 0.0
        %1228 = vmatprep.subr.mxu0 0.0
        %1229 = vmatpush2.msra.mxu0 0.0
        %1230 = vmatprep.subr.mxu0 0.0
        %1231 = vmatpush2.msra.mxu0 0.0
        %1232 = vmatprep.subr.mxu0 0.0
        %1233 = vmatpush2.msra.mxu0 0.0
        %1234 = vmatprep.subr.mxu0 0.0
        %1235 = vmatpush2.msra.mxu0 0.0
        %1236 = vmatprep.mubr.f32.mxu0 0.0
        %1237 = vmatmul.mubr.f32.gmra.mxu0 %v1093
        %v1238 = vpop.f32.mrf.mxu0
        %v1239 = vadd.f32 0.0, %v1238
        %v1240 = vpop.f32.mrf.mxu0
        %1241 = vdwg.mxu0
        %v1242 = vadd.f32 %v1073, %v1168
        %v1243 = vadd.f32 %v1074, %v1170
        %v1244 = vadd.f32 %v1075, %v1239
        %v1245 = vld [vmem:[%s249] sm:$0xff]
        %v1246 = vld [vmem:[%s249 + $0x8] sm:$0xf]
        %s1247 = scalar_lea.vmem %s1, 48
        %v1248 = vld [vmem:[%s1247] sm:$0xff]
        %v1251 = vcombine.high %v1245, %v1245
        %1252 = vrot.lane.b32.xlu0 %v1245, 92
        %v1253 = vpop.permute.xlu0 %1252
        %1254 = vrot.lane.b32.xlu0 %v1251, 92
        %v1255 = vpop.permute.xlu0 %1254
        %1256 = vrot.lane.b32.xlu0 %v1246, 92
        %v1257 = vpop.permute.xlu0 %1256
        %vm1258 = vcmask 752640
        %v1259 = vsel %vm1258, %v1253, %v1255
        %v1260 = vsel %vm1258, %v1255, %v1257
        %v1262 = vsel %vm267, %v1248, 0
        %v1264 = vsel %vm271, %v1259, 0
        %v1266 = vsel %vm271, %v1260, 0
        %v1268 = vsel %vm271, %v1257, 0
        %1270 = vmatprep.subr.mxu0 0.0
        %1271 = vmatpush1.msra.mxu0 0.0
        %1272 = vmatprep.subr.mxu0 0.0
        %1273 = vmatpush1.msra.mxu0 0.0
        %1274 = vmatprep.subr.mxu0 0.0
        %1275 = vmatpush1.msra.mxu0 0.0
        %1276 = vmatprep.subr.mxu0 0.0
        %1277 = vmatpush1.msra.mxu0 0.0
        %1278 = vmatprep.subr.mxu0 0.0
        %1279 = vmatpush1.msra.mxu0 0.0
        %1280 = vmatprep.subr.mxu0 0.0
        %1281 = vmatpush1.msra.mxu0 0.0
        %1282 = vmatprep.subr.mxu0 0.0
        %1283 = vmatpush1.msra.mxu0 0.0
        %1284 = vmatprep.subr.mxu0 0.0
        %1285 = vmatpush1.msra.mxu0 0.0
        %1286 = vmatprep.subr.mxu0 0.0
        %1287 = vmatpush1.msra.mxu0 0.0
        %1288 = vmatprep.subr.mxu0 0.0
        %1289 = vmatpush1.msra.mxu0 0.0
        %1290 = vmatprep.subr.mxu0 0.0
        %1291 = vmatpush1.msra.mxu0 0.0
        %1292 = vmatprep.subr.mxu0 0.0
        %1293 = vmatpush1.msra.mxu0 0.0
        %1294 = vmatprep.subr.mxu0 0.0
        %1295 = vmatpush1.msra.mxu0 0.0
        %1296 = vmatprep.subr.mxu0 0.0
        %1297 = vmatpush1.msra.mxu0 0.0
        %1298 = vmatprep.subr.mxu0 0.0
        %1299 = vmatpush1.msra.mxu0 0.0
        %1300 = vmatprep.subr.mxu0 %v1266
        %1301 = vmatpush1.msra.mxu0 %v1264
        %1302 = vmatprep.subr.mxu0 0.0
        %1303 = vmatpush2.msra.mxu0 0.0
        %1304 = vmatprep.subr.mxu0 0.0
        %1305 = vmatpush2.msra.mxu0 0.0
        %1306 = vmatprep.subr.mxu0 0.0
        %1307 = vmatpush2.msra.mxu0 0.0
        %1308 = vmatprep.subr.mxu0 0.0
        %1309 = vmatpush2.msra.mxu0 0.0
        %1310 = vmatprep.subr.mxu0 0.0
        %1311 = vmatpush2.msra.mxu0 0.0
        %1312 = vmatprep.subr.mxu0 0.0
        %1313 = vmatpush2.msra.mxu0 0.0
        %1314 = vmatprep.subr.mxu0 0.0
        %1315 = vmatpush2.msra.mxu0 0.0
        %1316 = vmatprep.subr.mxu0 0.0
        %1317 = vmatpush2.msra.mxu0 0.0
        %1318 = vmatprep.subr.mxu0 0.0
        %1319 = vmatpush2.msra.mxu0 0.0
        %1320 = vmatprep.subr.mxu0 0.0
        %1321 = vmatpush2.msra.mxu0 0.0
        %1322 = vmatprep.subr.mxu0 0.0
        %1323 = vmatpush2.msra.mxu0 0.0
        %1324 = vmatprep.subr.mxu0 0.0
        %1325 = vmatpush2.msra.mxu0 0.0
        %1326 = vmatprep.subr.mxu0 0.0
        %1327 = vmatpush2.msra.mxu0 0.0
        %1328 = vmatprep.subr.mxu0 0.0
        %1329 = vmatpush2.msra.mxu0 0.0
        %1330 = vmatprep.subr.mxu0 0.0
        %1331 = vmatpush2.msra.mxu0 0.0
        %1332 = vmatprep.subr.mxu0 0.0
        %1333 = vmatpush2.msra.mxu0 0.0
        %1334 = vmatprep.mubr.f32.mxu0 0.0
        %1335 = vmatmul.mubr.f32.gmra.mxu0 %v1262
        %v1336 = vpop.f32.mrf.mxu0
        %v1337 = vadd.f32 0.0, %v1336
        %v1338 = vpop.f32.mrf.mxu0
        %v1339 = vadd.f32 0.0, %v1338
        %1340 = vdwg.mxu0
        %1341 = vmatprep.subr.mxu0 0.0
        %1342 = vmatpush1.msra.mxu0 0.0
        %1343 = vmatprep.subr.mxu0 0.0
        %1344 = vmatpush1.msra.mxu0 0.0
        %1345 = vmatprep.subr.mxu0 0.0
        %1346 = vmatpush1.msra.mxu0 0.0
        %1347 = vmatprep.subr.mxu0 0.0
        %1348 = vmatpush1.msra.mxu0 0.0
        %1349 = vmatprep.subr.mxu0 0.0
        %1350 = vmatpush1.msra.mxu0 0.0
        %1351 = vmatprep.subr.mxu0 0.0
        %1352 = vmatpush1.msra.mxu0 0.0
        %1353 = vmatprep.subr.mxu0 0.0
        %1354 = vmatpush1.msra.mxu0 0.0
        %1355 = vmatprep.subr.mxu0 0.0
        %1356 = vmatpush1.msra.mxu0 0.0
        %1357 = vmatprep.subr.mxu0 0.0
        %1358 = vmatpush1.msra.mxu0 0.0
        %1359 = vmatprep.subr.mxu0 0.0
        %1360 = vmatpush1.msra.mxu0 0.0
        %1361 = vmatprep.subr.mxu0 0.0
        %1362 = vmatpush1.msra.mxu0 0.0
        %1363 = vmatprep.subr.mxu0 0.0
        %1364 = vmatpush1.msra.mxu0 0.0
        %1365 = vmatprep.subr.mxu0 0.0
        %1366 = vmatpush1.msra.mxu0 0.0
        %1367 = vmatprep.subr.mxu0 0.0
        %1368 = vmatpush1.msra.mxu0 0.0
        %1369 = vmatprep.subr.mxu0 0.0
        %1370 = vmatpush1.msra.mxu0 0.0
        %1371 = vmatprep.subr.mxu0 0.0
        %1372 = vmatpush1.msra.mxu0 %v1268
        %1373 = vmatprep.subr.mxu0 0.0
        %1374 = vmatpush2.msra.mxu0 0.0
        %1375 = vmatprep.subr.mxu0 0.0
        %1376 = vmatpush2.msra.mxu0 0.0
        %1377 = vmatprep.subr.mxu0 0.0
        %1378 = vmatpush2.msra.mxu0 0.0
        %1379 = vmatprep.subr.mxu0 0.0
        %1380 = vmatpush2.msra.mxu0 0.0
        %1381 = vmatprep.subr.mxu0 0.0
        %1382 = vmatpush2.msra.mxu0 0.0
        %1383 = vmatprep.subr.mxu0 0.0
        %1384 = vmatpush2.msra.mxu0 0.0
        %1385 = vmatprep.subr.mxu0 0.0
        %1386 = vmatpush2.msra.mxu0 0.0
        %1387 = vmatprep.subr.mxu0 0.0
        %1388 = vmatpush2.msra.mxu0 0.0
        %1389 = vmatprep.subr.mxu0 0.0
        %1390 = vmatpush2.msra.mxu0 0.0
        %1391 = vmatprep.subr.mxu0 0.0
        %1392 = vmatpush2.msra.mxu0 0.0
        %1393 = vmatprep.subr.mxu0 0.0
        %1394 = vmatpush2.msra.mxu0 0.0
        %1395 = vmatprep.subr.mxu0 0.0
        %1396 = vmatpush2.msra.mxu0 0.0
        %1397 = vmatprep.subr.mxu0 0.0
        %1398 = vmatpush2.msra.mxu0 0.0
        %1399 = vmatprep.subr.mxu0 0.0
        %1400 = vmatpush2.msra.mxu0 0.0
        %1401 = vmatprep.subr.mxu0 0.0
        %1402 = vmatpush2.msra.mxu0 0.0
        %1403 = vmatprep.subr.mxu0 0.0
        %1404 = vmatpush2.msra.mxu0 0.0
        %1405 = vmatprep.mubr.f32.mxu0 0.0
        %1406 = vmatmul.mubr.f32.gmra.mxu0 %v1262
        %v1407 = vpop.f32.mrf.mxu0
        %v1408 = vadd.f32 0.0, %v1407
        %v1409 = vpop.f32.mrf.mxu0
        %1410 = vdwg.mxu0
        %v1411 = vadd.f32 %v1242, %v1337
        %v1412 = vadd.f32 %v1243, %v1339
        %v1413 = vadd.f32 %v1244, %v1408
        %v1414 = vld [vmem:[%s249] sm:$0xff]
        %v1415 = vld [vmem:[%s249 + $0x8] sm:$0xf]
        %s1416 = scalar_lea.vmem %s1, 56
        %v1417 = vld [vmem:[%s1416] sm:$0xff]
        %v1420 = vcombine.high %v1414, %v1414
        %1421 = vrot.lane.b32.xlu0 %v1414, 91
        %v1422 = vpop.permute.xlu0 %1421
        %1423 = vrot.lane.b32.xlu0 %v1420, 91
        %v1424 = vpop.permute.xlu0 %1423
        %1425 = vrot.lane.b32.xlu0 %v1415, 91
        %v1426 = vpop.permute.xlu0 %1425
        %vm1427 = vcmask 744448
        %v1428 = vsel %vm1427, %v1422, %v1424
        %v1429 = vsel %vm1427, %v1424, %v1426
        %v1431 = vsel %vm267, %v1417, 0
        %v1433 = vsel %vm271, %v1428, 0
        %v1435 = vsel %vm271, %v1429, 0
        %v1437 = vsel %vm271, %v1426, 0
        %1439 = vmatprep.subr.mxu0 0.0
        %1440 = vmatpush1.msra.mxu0 0.0
        %1441 = vmatprep.subr.mxu0 0.0
        %1442 = vmatpush1.msra.mxu0 0.0
        %1443 = vmatprep.subr.mxu0 0.0
        %1444 = vmatpush1.msra.mxu0 0.0
        %1445 = vmatprep.subr.mxu0 0.0
        %1446 = vmatpush1.msra.mxu0 0.0
        %1447 = vmatprep.subr.mxu0 0.0
        %1448 = vmatpush1.msra.mxu0 0.0
        %1449 = vmatprep.subr.mxu0 0.0
        %1450 = vmatpush1.msra.mxu0 0.0
        %1451 = vmatprep.subr.mxu0 0.0
        %1452 = vmatpush1.msra.mxu0 0.0
        %1453 = vmatprep.subr.mxu0 0.0
        %1454 = vmatpush1.msra.mxu0 0.0
        %1455 = vmatprep.subr.mxu0 0.0
        %1456 = vmatpush1.msra.mxu0 0.0
        %1457 = vmatprep.subr.mxu0 0.0
        %1458 = vmatpush1.msra.mxu0 0.0
        %1459 = vmatprep.subr.mxu0 0.0
        %1460 = vmatpush1.msra.mxu0 0.0
        %1461 = vmatprep.subr.mxu0 0.0
        %1462 = vmatpush1.msra.mxu0 0.0
        %1463 = vmatprep.subr.mxu0 0.0
        %1464 = vmatpush1.msra.mxu0 0.0
        %1465 = vmatprep.subr.mxu0 0.0
        %1466 = vmatpush1.msra.mxu0 0.0
        %1467 = vmatprep.subr.mxu0 0.0
        %1468 = vmatpush1.msra.mxu0 0.0
        %1469 = vmatprep.subr.mxu0 %v1435
        %1470 = vmatpush1.msra.mxu0 %v1433
        %1471 = vmatprep.subr.mxu0 0.0
        %1472 = vmatpush2.msra.mxu0 0.0
        %1473 = vmatprep.subr.mxu0 0.0
        %1474 = vmatpush2.msra.mxu0 0.0
        %1475 = vmatprep.subr.mxu0 0.0
        %1476 = vmatpush2.msra.mxu0 0.0
        %1477 = vmatprep.subr.mxu0 0.0
        %1478 = vmatpush2.msra.mxu0 0.0
        %1479 = vmatprep.subr.mxu0 0.0
        %1480 = vmatpush2.msra.mxu0 0.0
        %1481 = vmatprep.subr.mxu0 0.0
        %1482 = vmatpush2.msra.mxu0 0.0
        %1483 = vmatprep.subr.mxu0 0.0
        %1484 = vmatpush2.msra.mxu0 0.0
        %1485 = vmatprep.subr.mxu0 0.0
        %1486 = vmatpush2.msra.mxu0 0.0
        %1487 = vmatprep.subr.mxu0 0.0
        %1488 = vmatpush2.msra.mxu0 0.0
        %1489 = vmatprep.subr.mxu0 0.0
        %1490 = vmatpush2.msra.mxu0 0.0
        %1491 = vmatprep.subr.mxu0 0.0
        %1492 = vmatpush2.msra.mxu0 0.0
        %1493 = vmatprep.subr.mxu0 0.0
        %1494 = vmatpush2.msra.mxu0 0.0
        %1495 = vmatprep.subr.mxu0 0.0
        %1496 = vmatpush2.msra.mxu0 0.0
        %1497 = vmatprep.subr.mxu0 0.0
        %1498 = vmatpush2.msra.mxu0 0.0
        %1499 = vmatprep.subr.mxu0 0.0
        %1500 = vmatpush2.msra.mxu0 0.0
        %1501 = vmatprep.subr.mxu0 0.0
        %1502 = vmatpush2.msra.mxu0 0.0
        %1503 = vmatprep.mubr.f32.mxu0 0.0
        %1504 = vmatmul.mubr.f32.gmra.mxu0 %v1431
        %v1505 = vpop.f32.mrf.mxu0
        %v1506 = vadd.f32 0.0, %v1505
        %v1507 = vpop.f32.mrf.mxu0
        %v1508 = vadd.f32 0.0, %v1507
        %1509 = vdwg.mxu0
        %1510 = vmatprep.subr.mxu0 0.0
        %1511 = vmatpush1.msra.mxu0 0.0
        %1512 = vmatprep.subr.mxu0 0.0
        %1513 = vmatpush1.msra.mxu0 0.0
        %1514 = vmatprep.subr.mxu0 0.0
        %1515 = vmatpush1.msra.mxu0 0.0
        %1516 = vmatprep.subr.mxu0 0.0
        %1517 = vmatpush1.msra.mxu0 0.0
        %1518 = vmatprep.subr.mxu0 0.0
        %1519 = vmatpush1.msra.mxu0 0.0
        %1520 = vmatprep.subr.mxu0 0.0
        %1521 = vmatpush1.msra.mxu0 0.0
        %1522 = vmatprep.subr.mxu0 0.0
        %1523 = vmatpush1.msra.mxu0 0.0
        %1524 = vmatprep.subr.mxu0 0.0
        %1525 = vmatpush1.msra.mxu0 0.0
        %1526 = vmatprep.subr.mxu0 0.0
        %1527 = vmatpush1.msra.mxu0 0.0
        %1528 = vmatprep.subr.mxu0 0.0
        %1529 = vmatpush1.msra.mxu0 0.0
        %1530 = vmatprep.subr.mxu0 0.0
        %1531 = vmatpush1.msra.mxu0 0.0
        %1532 = vmatprep.subr.mxu0 0.0
        %1533 = vmatpush1.msra.mxu0 0.0
        %1534 = vmatprep.subr.mxu0 0.0
        %1535 = vmatpush1.msra.mxu0 0.0
        %1536 = vmatprep.subr.mxu0 0.0
        %1537 = vmatpush1.msra.mxu0 0.0
        %1538 = vmatprep.subr.mxu0 0.0
        %1539 = vmatpush1.msra.mxu0 0.0
        %1540 = vmatprep.subr.mxu0 0.0
        %1541 = vmatpush1.msra.mxu0 %v1437
        %1542 = vmatprep.subr.mxu0 0.0
        %1543 = vmatpush2.msra.mxu0 0.0
        %1544 = vmatprep.subr.mxu0 0.0
        %1545 = vmatpush2.msra.mxu0 0.0
        %1546 = vmatprep.subr.mxu0 0.0
        %1547 = vmatpush2.msra.mxu0 0.0
        %1548 = vmatprep.subr.mxu0 0.0
        %1549 = vmatpush2.msra.mxu0 0.0
        %1550 = vmatprep.subr.mxu0 0.0
        %1551 = vmatpush2.msra.mxu0 0.0
        %1552 = vmatprep.subr.mxu0 0.0
        %1553 = vmatpush2.msra.mxu0 0.0
        %1554 = vmatprep.subr.mxu0 0.0
        %1555 = vmatpush2.msra.mxu0 0.0
        %1556 = vmatprep.subr.mxu0 0.0
        %1557 = vmatpush2.msra.mxu0 0.0
        %1558 = vmatprep.subr.mxu0 0.0
        %1559 = vmatpush2.msra.mxu0 0.0
        %1560 = vmatprep.subr.mxu0 0.0
        %1561 = vmatpush2.msra.mxu0 0.0
        %1562 = vmatprep.subr.mxu0 0.0
        %1563 = vmatpush2.msra.mxu0 0.0
        %1564 = vmatprep.subr.mxu0 0.0
        %1565 = vmatpush2.msra.mxu0 0.0
        %1566 = vmatprep.subr.mxu0 0.0
        %1567 = vmatpush2.msra.mxu0 0.0
        %1568 = vmatprep.subr.mxu0 0.0
        %1569 = vmatpush2.msra.mxu0 0.0
        %1570 = vmatprep.subr.mxu0 0.0
        %1571 = vmatpush2.msra.mxu0 0.0
        %1572 = vmatprep.subr.mxu0 0.0
        %1573 = vmatpush2.msra.mxu0 0.0
        %1574 = vmatprep.mubr.f32.mxu0 0.0
        %1575 = vmatmul.mubr.f32.gmra.mxu0 %v1431
        %v1576 = vpop.f32.mrf.mxu0
        %v1577 = vadd.f32 0.0, %v1576
        %v1578 = vpop.f32.mrf.mxu0
        %1579 = vdwg.mxu0
        %v1580 = vadd.f32 %v1411, %v1506
        %v1581 = vadd.f32 %v1412, %v1508
        %v1582 = vadd.f32 %v1413, %v1577
        %v1583 = vld [vmem:[%s249] sm:$0xff]
        %v1584 = vld [vmem:[%s249 + $0x8] sm:$0xf]
        %s1585 = scalar_lea.vmem %s1, 64
        %v1586 = vld [vmem:[%s1585] sm:$0xff]
        %v1589 = vcombine.high %v1583, %v1583
        %1590 = vrot.lane.b32.xlu0 %v1583, 90
        %v1591 = vpop.permute.xlu0 %1590
        %1592 = vrot.lane.b32.xlu0 %v1589, 90
        %v1593 = vpop.permute.xlu0 %1592
        %1594 = vrot.lane.b32.xlu0 %v1584, 90
        %v1595 = vpop.permute.xlu0 %1594
        %vm1596 = vcmask 736256
        %v1597 = vsel %vm1596, %v1591, %v1593
        %v1598 = vsel %vm1596, %v1593, %v1595
        %v1600 = vsel %vm267, %v1586, 0
        %v1602 = vsel %vm271, %v1597, 0
        %v1604 = vsel %vm271, %v1598, 0
        %v1606 = vsel %vm271, %v1595, 0
        %1608 = vmatprep.subr.mxu0 0.0
        %1609 = vmatpush1.msra.mxu0 0.0
        %1610 = vmatprep.subr.mxu0 0.0
        %1611 = vmatpush1.msra.mxu0 0.0
        %1612 = vmatprep.subr.mxu0 0.0
        %1613 = vmatpush1.msra.mxu0 0.0
        %1614 = vmatprep.subr.mxu0 0.0
        %1615 = vmatpush1.msra.mxu0 0.0
        %1616 = vmatprep.subr.mxu0 0.0
        %1617 = vmatpush1.msra.mxu0 0.0
        %1618 = vmatprep.subr.mxu0 0.0
        %1619 = vmatpush1.msra.mxu0 0.0
        %1620 = vmatprep.subr.mxu0 0.0
        %1621 = vmatpush1.msra.mxu0 0.0
        %1622 = vmatprep.subr.mxu0 0.0
        %1623 = vmatpush1.msra.mxu0 0.0
        %1624 = vmatprep.subr.mxu0 0.0
        %1625 = vmatpush1.msra.mxu0 0.0
        %1626 = vmatprep.subr.mxu0 0.0
        %1627 = vmatpush1.msra.mxu0 0.0
        %1628 = vmatprep.subr.mxu0 0.0
        %1629 = vmatpush1.msra.mxu0 0.0
        %1630 = vmatprep.subr.mxu0 0.0
        %1631 = vmatpush1.msra.mxu0 0.0
        %1632 = vmatprep.subr.mxu0 0.0
        %1633 = vmatpush1.msra.mxu0 0.0
        %1634 = vmatprep.subr.mxu0 0.0
        %1635 = vmatpush1.msra.mxu0 0.0
        %1636 = vmatprep.subr.mxu0 0.0
        %1637 = vmatpush1.msra.mxu0 0.0
        %1638 = vmatprep.subr.mxu0 %v1604
        %1639 = vmatpush1.msra.mxu0 %v1602
        %1640 = vmatprep.subr.mxu0 0.0
        %1641 = vmatpush2.msra.mxu0 0.0
        %1642 = vmatprep.subr.mxu0 0.0
        %1643 = vmatpush2.msra.mxu0 0.0
        %1644 = vmatprep.subr.mxu0 0.0
        %1645 = vmatpush2.msra.mxu0 0.0
        %1646 = vmatprep.subr.mxu0 0.0
        %1647 = vmatpush2.msra.mxu0 0.0
        %1648 = vmatprep.subr.mxu0 0.0
        %1649 = vmatpush2.msra.mxu0 0.0
        %1650 = vmatprep.subr.mxu0 0.0
        %1651 = vmatpush2.msra.mxu0 0.0
        %1652 = vmatprep.subr.mxu0 0.0
        %1653 = vmatpush2.msra.mxu0 0.0
        %1654 = vmatprep.subr.mxu0 0.0
        %1655 = vmatpush2.msra.mxu0 0.0
        %1656 = vmatprep.subr.mxu0 0.0
        %1657 = vmatpush2.msra.mxu0 0.0
        %1658 = vmatprep.subr.mxu0 0.0
        %1659 = vmatpush2.msra.mxu0 0.0
        %1660 = vmatprep.subr.mxu0 0.0
        %1661 = vmatpush2.msra.mxu0 0.0
        %1662 = vmatprep.subr.mxu0 0.0
        %1663 = vmatpush2.msra.mxu0 0.0
        %1664 = vmatprep.subr.mxu0 0.0
        %1665 = vmatpush2.msra.mxu0 0.0
        %1666 = vmatprep.subr.mxu0 0.0
        %1667 = vmatpush2.msra.mxu0 0.0
        %1668 = vmatprep.subr.mxu0 0.0
        %1669 = vmatpush2.msra.mxu0 0.0
        %1670 = vmatprep.subr.mxu0 0.0
        %1671 = vmatpush2.msra.mxu0 0.0
        %1672 = vmatprep.mubr.f32.mxu0 0.0
        %1673 = vmatmul.mubr.f32.gmra.mxu0 %v1600
        %v1674 = vpop.f32.mrf.mxu0
        %v1675 = vadd.f32 0.0, %v1674
        %v1676 = vpop.f32.mrf.mxu0
        %v1677 = vadd.f32 0.0, %v1676
        %1678 = vdwg.mxu0
        %1679 = vmatprep.subr.mxu0 0.0
        %1680 = vmatpush1.msra.mxu0 0.0
        %1681 = vmatprep.subr.mxu0 0.0
        %1682 = vmatpush1.msra.mxu0 0.0
        %1683 = vmatprep.subr.mxu0 0.0
        %1684 = vmatpush1.msra.mxu0 0.0
        %1685 = vmatprep.subr.mxu0 0.0
        %1686 = vmatpush1.msra.mxu0 0.0
        %1687 = vmatprep.subr.mxu0 0.0
        %1688 = vmatpush1.msra.mxu0 0.0
        %1689 = vmatprep.subr.mxu0 0.0
        %1690 = vmatpush1.msra.mxu0 0.0
        %1691 = vmatprep.subr.mxu0 0.0
        %1692 = vmatpush1.msra.mxu0 0.0
        %1693 = vmatprep.subr.mxu0 0.0
        %1694 = vmatpush1.msra.mxu0 0.0
        %1695 = vmatprep.subr.mxu0 0.0
        %1696 = vmatpush1.msra.mxu0 0.0
        %1697 = vmatprep.subr.mxu0 0.0
        %1698 = vmatpush1.msra.mxu0 0.0
        %1699 = vmatprep.subr.mxu0 0.0
        %1700 = vmatpush1.msra.mxu0 0.0
        %1701 = vmatprep.subr.mxu0 0.0
        %1702 = vmatpush1.msra.mxu0 0.0
        %1703 = vmatprep.subr.mxu0 0.0
        %1704 = vmatpush1.msra.mxu0 0.0
        %1705 = vmatprep.subr.mxu0 0.0
        %1706 = vmatpush1.msra.mxu0 0.0
        %1707 = vmatprep.subr.mxu0 0.0
        %1708 = vmatpush1.msra.mxu0 0.0
        %1709 = vmatprep.subr.mxu0 0.0
        %1710 = vmatpush1.msra.mxu0 %v1606
        %1711 = vmatprep.subr.mxu0 0.0
        %1712 = vmatpush2.msra.mxu0 0.0
        %1713 = vmatprep.subr.mxu0 0.0
        %1714 = vmatpush2.msra.mxu0 0.0
        %1715 = vmatprep.subr.mxu0 0.0
        %1716 = vmatpush2.msra.mxu0 0.0
        %1717 = vmatprep.subr.mxu0 0.0
        %1718 = vmatpush2.msra.mxu0 0.0
        %1719 = vmatprep.subr.mxu0 0.0
        %1720 = vmatpush2.msra.mxu0 0.0
        %1721 = vmatprep.subr.mxu0 0.0
        %1722 = vmatpush2.msra.mxu0 0.0
        %1723 = vmatprep.subr.mxu0 0.0
        %1724 = vmatpush2.msra.mxu0 0.0
        %1725 = vmatprep.subr.mxu0 0.0
        %1726 = vmatpush2.msra.mxu0 0.0
        %1727 = vmatprep.subr.mxu0 0.0
        %1728 = vmatpush2.msra.mxu0 0.0
        %1729 = vmatprep.subr.mxu0 0.0
        %1730 = vmatpush2.msra.mxu0 0.0
        %1731 = vmatprep.subr.mxu0 0.0
        %1732 = vmatpush2.msra.mxu0 0.0
        %1733 = vmatprep.subr.mxu0 0.0
        %1734 = vmatpush2.msra.mxu0 0.0
        %1735 = vmatprep.subr.mxu0 0.0
        %1736 = vmatpush2.msra.mxu0 0.0
        %1737 = vmatprep.subr.mxu0 0.0
        %1738 = vmatpush2.msra.mxu0 0.0
        %1739 = vmatprep.subr.mxu0 0.0
        %1740 = vmatpush2.msra.mxu0 0.0
        %1741 = vmatprep.subr.mxu0 0.0
        %1742 = vmatpush2.msra.mxu0 0.0
        %1743 = vmatprep.mubr.f32.mxu0 0.0
        %1744 = vmatmul.mubr.f32.gmra.mxu0 %v1600
        %v1745 = vpop.f32.mrf.mxu0
        %v1746 = vadd.f32 0.0, %v1745
        %v1747 = vpop.f32.mrf.mxu0
        %1748 = vdwg.mxu0
        %v1749 = vadd.f32 %v1580, %v1675
        %v1750 = vadd.f32 %v1581, %v1677
        %v1751 = vadd.f32 %v1582, %v1746
        %v1752 = vld [vmem:[%s2] sm:$0xff]
        %1754 = vset.pattern.permute.xlu0 0
        %1755 = vperm.xlu0 %1754, %v1752
        %v1756 = vpop.permute.xlu0 %1755
        %v1758 = vadd.f32 %v1749, %v1756
        %v1759 = vadd.f32 %v1750, %v1756
        %v1760 = vadd.f32 %v1751, %v1756
        %v1761 = vmax.f32 %v1758, 0.0
        %v1762 = vmax.f32 %v1759, 0.0
        %v1763 = vmax.f32 %v1760, 0.0
        %v1764 = vld [vmem:[%s5] sm:$0x7]
        %v1766 = vlaneseq
        %v1767 = vshrl.u32 %v1766, 7
        %v1768 = vsub.s32 0, %v1767
        %v1769 = vrot.slane %v1764, %v1768
        %v1770 = vlaneseq
        %v1771 = vshrl.u32 %v1770, 7
        %v1772 = vsub.s32 1, %v1771
        %v1773 = vrot.slane %v1764, %v1772
        %v1774 = vlaneseq
        %v1775 = vshrl.u32 %v1774, 7
        %v1776 = vsub.s32 2, %v1775
        %v1777 = vrot.slane %v1764, %v1776
        %v1781 = vmul.f32 %v1761, %v1769
        %v1782 = vmul.f32 %v1762, %v1773
        %v1783 = vmul.f32 %v1763, %v1777
        %1784 = vst [vmem:[#allocation2] sm:$0xff] %v1781
        %1785 = vst [vmem:[#allocation2 + $0x8] sm:$0xff] %v1782
        %vm1786 = vcmask 261120
        %1787 = vst.msk [vmem:[#allocation2 + $0x10] sm:$0xff] %vm1786, %v1783
        %vm1788 = vcmask 1047808
        %1789 = vst.msk [vmem:[#allocation2 + $0x10] sm:$0xff] %vm1788, 0.0
        %v1790 = vld [vmem:[#allocation2] sm:$0xff]
        %v1791 = vld [vmem:[#allocation2 + $0x8] sm:$0xff]
        %v1792 = vld [vmem:[#allocation2 + $0x10] sm:$0xff]
        %s1793 = scalar_lea.vmem %s3, 16
        %v1794 = vld [vmem:[%s1793] sm:$0xf]
        %s1795 = scalar_lea.vmem %s3, 20
        %v1796 = vld [vmem:[%s1795] sm:$0xf]
        %s1797 = scalar_lea.vmem %s3, 12
        %v1798 = vld [vmem:[%s1797] sm:$0xf]
        %1802 = vrot.lane.b32.xlu0 %v1790, 127
        %v1803 = vpop.permute.xlu0 %1802
        %1804 = vrot.lane.b32.xlu0 %v1791, 127
        %v1805 = vpop.permute.xlu0 %1804
        %1806 = vrot.lane.b32.xlu0 %v1792, 127
        %v1807 = vpop.permute.xlu0 %1806
        %v1808 = vsel %vm264, %v1803, %v1805
        %v1809 = vsel %vm264, %v1805, %v1807
        %vm1813 = vcmask 64512
        %v1815 = vsel %vm1813, %v1798, 0
        %1817 = vmatprep.subr.mxu0 0.0
        %1818 = vmatpush1.msra.mxu0 0.0
        %1819 = vmatprep.subr.mxu0 0.0
        %1820 = vmatpush1.msra.mxu0 0.0
        %1821 = vmatprep.subr.mxu0 0.0
        %1822 = vmatpush1.msra.mxu0 0.0
        %1823 = vmatprep.subr.mxu0 0.0
        %1824 = vmatpush1.msra.mxu0 0.0
        %1825 = vmatprep.subr.mxu0 0.0
        %1826 = vmatpush1.msra.mxu0 0.0
        %1827 = vmatprep.subr.mxu0 0.0
        %1828 = vmatpush1.msra.mxu0 0.0
        %1829 = vmatprep.subr.mxu0 0.0
        %1830 = vmatpush1.msra.mxu0 0.0
        %1831 = vmatprep.subr.mxu0 0.0
        %1832 = vmatpush1.msra.mxu0 0.0
        %1833 = vmatprep.subr.mxu0 0.0
        %1834 = vmatpush1.msra.mxu0 0.0
        %1835 = vmatprep.subr.mxu0 0.0
        %1836 = vmatpush1.msra.mxu0 0.0
        %1837 = vmatprep.subr.mxu0 0.0
        %1838 = vmatpush1.msra.mxu0 0.0
        %1839 = vmatprep.subr.mxu0 0.0
        %1840 = vmatpush1.msra.mxu0 0.0
        %1841 = vmatprep.subr.mxu0 0.0
        %1842 = vmatpush1.msra.mxu0 0.0
        %1843 = vmatprep.subr.mxu0 0.0
        %1844 = vmatpush1.msra.mxu0 0.0
        %1845 = vmatprep.subr.mxu0 0.0
        %1846 = vmatpush1.msra.mxu0 0.0
        %1847 = vmatprep.subr.mxu0 %v1809
        %1848 = vmatpush1.msra.mxu0 %v1808
        %1849 = vmatprep.subr.mxu0 0.0
        %1850 = vmatpush2.msra.mxu0 0.0
        %1851 = vmatprep.subr.mxu0 0.0
        %1852 = vmatpush2.msra.mxu0 0.0
        %1853 = vmatprep.subr.mxu0 0.0
        %1854 = vmatpush2.msra.mxu0 0.0
        %1855 = vmatprep.subr.mxu0 0.0
        %1856 = vmatpush2.msra.mxu0 0.0
        %1857 = vmatprep.subr.mxu0 0.0
        %1858 = vmatpush2.msra.mxu0 0.0
        %1859 = vmatprep.subr.mxu0 0.0
        %1860 = vmatpush2.msra.mxu0 0.0
        %1861 = vmatprep.subr.mxu0 0.0
        %1862 = vmatpush2.msra.mxu0 0.0
        %1863 = vmatprep.subr.mxu0 0.0
        %1864 = vmatpush2.msra.mxu0 0.0
        %1865 = vmatprep.subr.mxu0 0.0
        %1866 = vmatpush2.msra.mxu0 0.0
        %1867 = vmatprep.subr.mxu0 0.0
        %1868 = vmatpush2.msra.mxu0 0.0
        %1869 = vmatprep.subr.mxu0 0.0
        %1870 = vmatpush2.msra.mxu0 0.0
        %1871 = vmatprep.subr.mxu0 0.0
        %1872 = vmatpush2.msra.mxu0 0.0
        %1873 = vmatprep.subr.mxu0 0.0
        %1874 = vmatpush2.msra.mxu0 0.0
        %1875 = vmatprep.subr.mxu0 0.0
        %1876 = vmatpush2.msra.mxu0 0.0
        %1877 = vmatprep.subr.mxu0 0.0
        %1878 = vmatpush2.msra.mxu0 0.0
        %1879 = vmatprep.subr.mxu0 0.0
        %1880 = vmatpush2.msra.mxu0 0.0
        %1881 = vmatprep.mubr.f32.mxu0 0.0
        %1882 = vmatmul.mubr.f32.gmra.mxu0 %v1815
        %v1883 = vpop.f32.mrf.mxu0
        %v1884 = vadd.f32 0.0, %v1883
        %v1885 = vpop.f32.mrf.mxu0
        %v1886 = vadd.f32 0.0, %v1885
        %1887 = vdwg.mxu0
        %1888 = vmatprep.subr.mxu0 0.0
        %1889 = vmatpush1.msra.mxu0 0.0
        %1890 = vmatprep.subr.mxu0 0.0
        %1891 = vmatpush1.msra.mxu0 0.0
        %1892 = vmatprep.subr.mxu0 0.0
        %1893 = vmatpush1.msra.mxu0 0.0
        %1894 = vmatprep.subr.mxu0 0.0
        %1895 = vmatpush1.msra.mxu0 0.0
        %1896 = vmatprep.subr.mxu0 0.0
        %1897 = vmatpush1.msra.mxu0 0.0
        %1898 = vmatprep.subr.mxu0 0.0
        %1899 = vmatpush1.msra.mxu0 0.0
        %1900 = vmatprep.subr.mxu0 0.0
        %1901 = vmatpush1.msra.mxu0 0.0
        %1902 = vmatprep.subr.mxu0 0.0
        %1903 = vmatpush1.msra.mxu0 0.0
        %1904 = vmatprep.subr.mxu0 0.0
        %1905 = vmatpush1.msra.mxu0 0.0
        %1906 = vmatprep.subr.mxu0 0.0
        %1907 = vmatpush1.msra.mxu0 0.0
        %1908 = vmatprep.subr.mxu0 0.0
        %1909 = vmatpush1.msra.mxu0 0.0
        %1910 = vmatprep.subr.mxu0 0.0
        %1911 = vmatpush1.msra.mxu0 0.0
        %1912 = vmatprep.subr.mxu0 0.0
        %1913 = vmatpush1.msra.mxu0 0.0
        %1914 = vmatprep.subr.mxu0 0.0
        %1915 = vmatpush1.msra.mxu0 0.0
        %1916 = vmatprep.subr.mxu0 0.0
        %1917 = vmatpush1.msra.mxu0 0.0
        %1918 = vmatprep.subr.mxu0 0.0
        %1919 = vmatpush1.msra.mxu0 %v1807
        %1920 = vmatprep.subr.mxu0 0.0
        %1921 = vmatpush2.msra.mxu0 0.0
        %1922 = vmatprep.subr.mxu0 0.0
        %1923 = vmatpush2.msra.mxu0 0.0
        %1924 = vmatprep.subr.mxu0 0.0
        %1925 = vmatpush2.msra.mxu0 0.0
        %1926 = vmatprep.subr.mxu0 0.0
        %1927 = vmatpush2.msra.mxu0 0.0
        %1928 = vmatprep.subr.mxu0 0.0
        %1929 = vmatpush2.msra.mxu0 0.0
        %1930 = vmatprep.subr.mxu0 0.0
        %1931 = vmatpush2.msra.mxu0 0.0
        %1932 = vmatprep.subr.mxu0 0.0
        %1933 = vmatpush2.msra.mxu0 0.0
        %1934 = vmatprep.subr.mxu0 0.0
        %1935 = vmatpush2.msra.mxu0 0.0
        %1936 = vmatprep.subr.mxu0 0.0
        %1937 = vmatpush2.msra.mxu0 0.0
        %1938 = vmatprep.subr.mxu0 0.0
        %1939 = vmatpush2.msra.mxu0 0.0
        %1940 = vmatprep.subr.mxu0 0.0
        %1941 = vmatpush2.msra.mxu0 0.0
        %1942 = vmatprep.subr.mxu0 0.0
        %1943 = vmatpush2.msra.mxu0 0.0
        %1944 = vmatprep.subr.mxu0 0.0
        %1945 = vmatpush2.msra.mxu0 0.0
        %1946 = vmatprep.subr.mxu0 0.0
        %1947 = vmatpush2.msra.mxu0 0.0
        %1948 = vmatprep.subr.mxu0 0.0
        %1949 = vmatpush2.msra.mxu0 0.0
        %1950 = vmatprep.subr.mxu0 0.0
        %1951 = vmatpush2.msra.mxu0 0.0
        %1952 = vmatprep.mubr.f32.mxu0 0.0
        %1953 = vmatmul.mubr.f32.gmra.mxu0 %v1815
        %v1954 = vpop.f32.mrf.mxu0
        %v1955 = vadd.f32 0.0, %v1954
        %v1956 = vpop.f32.mrf.mxu0
        %1957 = vdwg.mxu0
        %v1959 = vsel %vm1813, %v1796, 0
        %1961 = vmatprep.subr.mxu0 0.0
        %1962 = vmatpush1.msra.mxu0 0.0
        %1963 = vmatprep.subr.mxu0 0.0
        %1964 = vmatpush1.msra.mxu0 0.0
        %1965 = vmatprep.subr.mxu0 0.0
        %1966 = vmatpush1.msra.mxu0 0.0
        %1967 = vmatprep.subr.mxu0 0.0
        %1968 = vmatpush1.msra.mxu0 0.0
        %1969 = vmatprep.subr.mxu0 0.0
        %1970 = vmatpush1.msra.mxu0 0.0
        %1971 = vmatprep.subr.mxu0 0.0
        %1972 = vmatpush1.msra.mxu0 0.0
        %1973 = vmatprep.subr.mxu0 0.0
        %1974 = vmatpush1.msra.mxu0 0.0
        %1975 = vmatprep.subr.mxu0 0.0
        %1976 = vmatpush1.msra.mxu0 0.0
        %1977 = vmatprep.subr.mxu0 0.0
        %1978 = vmatpush1.msra.mxu0 0.0
        %1979 = vmatprep.subr.mxu0 0.0
        %1980 = vmatpush1.msra.mxu0 0.0
        %1981 = vmatprep.subr.mxu0 0.0
        %1982 = vmatpush1.msra.mxu0 0.0
        %1983 = vmatprep.subr.mxu0 0.0
        %1984 = vmatpush1.msra.mxu0 0.0
        %1985 = vmatprep.subr.mxu0 0.0
        %1986 = vmatpush1.msra.mxu0 0.0
        %1987 = vmatprep.subr.mxu0 0.0
        %1988 = vmatpush1.msra.mxu0 0.0
        %1989 = vmatprep.subr.mxu0 0.0
        %1990 = vmatpush1.msra.mxu0 0.0
        %1991 = vmatprep.subr.mxu0 %v1791
        %1992 = vmatpush1.msra.mxu0 %v1790
        %1993 = vmatprep.subr.mxu0 0.0
        %1994 = vmatpush2.msra.mxu0 0.0
        %1995 = vmatprep.subr.mxu0 0.0
        %1996 = vmatpush2.msra.mxu0 0.0
        %1997 = vmatprep.subr.mxu0 0.0
        %1998 = vmatpush2.msra.mxu0 0.0
        %1999 = vmatprep.subr.mxu0 0.0
        %2000 = vmatpush2.msra.mxu0 0.0
        %2001 = vmatprep.subr.mxu0 0.0
        %2002 = vmatpush2.msra.mxu0 0.0
        %2003 = vmatprep.subr.mxu0 0.0
        %2004 = vmatpush2.msra.mxu0 0.0
        %2005 = vmatprep.subr.mxu0 0.0
        %2006 = vmatpush2.msra.mxu0 0.0
        %2007 = vmatprep.subr.mxu0 0.0
        %2008 = vmatpush2.msra.mxu0 0.0
        %2009 = vmatprep.subr.mxu0 0.0
        %2010 = vmatpush2.msra.mxu0 0.0
        %2011 = vmatprep.subr.mxu0 0.0
        %2012 = vmatpush2.msra.mxu0 0.0
        %2013 = vmatprep.subr.mxu0 0.0
        %2014 = vmatpush2.msra.mxu0 0.0
        %2015 = vmatprep.subr.mxu0 0.0
        %2016 = vmatpush2.msra.mxu0 0.0
        %2017 = vmatprep.subr.mxu0 0.0
        %2018 = vmatpush2.msra.mxu0 0.0
        %2019 = vmatprep.subr.mxu0 0.0
        %2020 = vmatpush2.msra.mxu0 0.0
        %2021 = vmatprep.subr.mxu0 0.0
        %2022 = vmatpush2.msra.mxu0 0.0
        %2023 = vmatprep.subr.mxu0 0.0
        %2024 = vmatpush2.msra.mxu0 0.0
        %2025 = vmatprep.mubr.f32.mxu0 0.0
        %2026 = vmatmul.mubr.f32.gmra.mxu0 %v1959
        %v2027 = vpop.f32.mrf.mxu0
        %v2028 = vadd.f32 %v1884, %v2027
        %v2029 = vpop.f32.mrf.mxu0
        %v2030 = vadd.f32 %v1886, %v2029
        %2031 = vdwg.mxu0
        %2032 = vmatprep.subr.mxu0 0.0
        %2033 = vmatpush1.msra.mxu0 0.0
        %2034 = vmatprep.subr.mxu0 0.0
        %2035 = vmatpush1.msra.mxu0 0.0
        %2036 = vmatprep.subr.mxu0 0.0
        %2037 = vmatpush1.msra.mxu0 0.0
        %2038 = vmatprep.subr.mxu0 0.0
        %2039 = vmatpush1.msra.mxu0 0.0
        %2040 = vmatprep.subr.mxu0 0.0
        %2041 = vmatpush1.msra.mxu0 0.0
        %2042 = vmatprep.subr.mxu0 0.0
        %2043 = vmatpush1.msra.mxu0 0.0
        %2044 = vmatprep.subr.mxu0 0.0
        %2045 = vmatpush1.msra.mxu0 0.0
        %2046 = vmatprep.subr.mxu0 0.0
        %2047 = vmatpush1.msra.mxu0 0.0
        %2048 = vmatprep.subr.mxu0 0.0
        %2049 = vmatpush1.msra.mxu0 0.0
        %2050 = vmatprep.subr.mxu0 0.0
        %2051 = vmatpush1.msra.mxu0 0.0
        %2052 = vmatprep.subr.mxu0 0.0
        %2053 = vmatpush1.msra.mxu0 0.0
        %2054 = vmatprep.subr.mxu0 0.0
        %2055 = vmatpush1.msra.mxu0 0.0
        %2056 = vmatprep.subr.mxu0 0.0
        %2057 = vmatpush1.msra.mxu0 0.0
        %2058 = vmatprep.subr.mxu0 0.0
        %2059 = vmatpush1.msra.mxu0 0.0
        %2060 = vmatprep.subr.mxu0 0.0
        %2061 = vmatpush1.msra.mxu0 0.0
        %2062 = vmatprep.subr.mxu0 0.0
        %2063 = vmatpush1.msra.mxu0 %v1792
        %2064 = vmatprep.subr.mxu0 0.0
        %2065 = vmatpush2.msra.mxu0 0.0
        %2066 = vmatprep.subr.mxu0 0.0
        %2067 = vmatpush2.msra.mxu0 0.0
        %2068 = vmatprep.subr.mxu0 0.0
        %2069 = vmatpush2.msra.mxu0 0.0
        %2070 = vmatprep.subr.mxu0 0.0
        %2071 = vmatpush2.msra.mxu0 0.0
        %2072 = vmatprep.subr.mxu0 0.0
        %2073 = vmatpush2.msra.mxu0 0.0
        %2074 = vmatprep.subr.mxu0 0.0
        %2075 = vmatpush2.msra.mxu0 0.0
        %2076 = vmatprep.subr.mxu0 0.0
        %2077 = vmatpush2.msra.mxu0 0.0
        %2078 = vmatprep.subr.mxu0 0.0
        %2079 = vmatpush2.msra.mxu0 0.0
        %2080 = vmatprep.subr.mxu0 0.0
        %2081 = vmatpush2.msra.mxu0 0.0
        %2082 = vmatprep.subr.mxu0 0.0
        %2083 = vmatpush2.msra.mxu0 0.0
        %2084 = vmatprep.subr.mxu0 0.0
        %2085 = vmatpush2.msra.mxu0 0.0
        %2086 = vmatprep.subr.mxu0 0.0
        %2087 = vmatpush2.msra.mxu0 0.0
        %2088 = vmatprep.subr.mxu0 0.0
        %2089 = vmatpush2.msra.mxu0 0.0
        %2090 = vmatprep.subr.mxu0 0.0
        %2091 = vmatpush2.msra.mxu0 0.0
        %2092 = vmatprep.subr.mxu0 0.0
        %2093 = vmatpush2.msra.mxu0 0.0
        %2094 = vmatprep.subr.mxu0 0.0
        %2095 = vmatpush2.msra.mxu0 0.0
        %2096 = vmatprep.mubr.f32.mxu0 0.0
        %2097 = vmatmul.mubr.f32.gmra.mxu0 %v1959
        %v2098 = vpop.f32.mrf.mxu0
        %v2099 = vadd.f32 %v1955, %v2098
        %v2100 = vpop.f32.mrf.mxu0
        %2101 = vdwg.mxu0
        %s2102 = scalar_lea.vmem %s3, 28
        %v2103 = vld [vmem:[%s2102] sm:$0xf]
        %s2104 = scalar_lea.vmem %s3, 4
        %v2105 = vld [vmem:[%s2104] sm:$0xf]
        %2106 = vrot.lane.b32.xlu0 %v1790, 110
        %v2107 = vpop.permute.xlu0 %2106
        %2108 = vrot.lane.b32.xlu0 %v1791, 110
        %v2109 = vpop.permute.xlu0 %2108
        %2110 = vrot.lane.b32.xlu0 %v1792, 110
        %v2111 = vpop.permute.xlu0 %2110
        %v2112 = vsel %vm751, %v2107, %v2109
        %v2113 = vsel %vm751, %v2109, %v2111
        %v2118 = vsel %vm1813, %v2105, 0
        %2120 = vmatprep.subr.mxu0 0.0
        %2121 = vmatpush1.msra.mxu0 0.0
        %2122 = vmatprep.subr.mxu0 0.0
        %2123 = vmatpush1.msra.mxu0 0.0
        %2124 = vmatprep.subr.mxu0 0.0
        %2125 = vmatpush1.msra.mxu0 0.0
        %2126 = vmatprep.subr.mxu0 0.0
        %2127 = vmatpush1.msra.mxu0 0.0
        %2128 = vmatprep.subr.mxu0 0.0
        %2129 = vmatpush1.msra.mxu0 0.0
        %2130 = vmatprep.subr.mxu0 0.0
        %2131 = vmatpush1.msra.mxu0 0.0
        %2132 = vmatprep.subr.mxu0 0.0
        %2133 = vmatpush1.msra.mxu0 0.0
        %2134 = vmatprep.subr.mxu0 0.0
        %2135 = vmatpush1.msra.mxu0 0.0
        %2136 = vmatprep.subr.mxu0 0.0
        %2137 = vmatpush1.msra.mxu0 0.0
        %2138 = vmatprep.subr.mxu0 0.0
        %2139 = vmatpush1.msra.mxu0 0.0
        %2140 = vmatprep.subr.mxu0 0.0
        %2141 = vmatpush1.msra.mxu0 0.0
        %2142 = vmatprep.subr.mxu0 0.0
        %2143 = vmatpush1.msra.mxu0 0.0
        %2144 = vmatprep.subr.mxu0 0.0
        %2145 = vmatpush1.msra.mxu0 0.0
        %2146 = vmatprep.subr.mxu0 0.0
        %2147 = vmatpush1.msra.mxu0 0.0
        %2148 = vmatprep.subr.mxu0 0.0
        %2149 = vmatpush1.msra.mxu0 0.0
        %2150 = vmatprep.subr.mxu0 %v2113
        %2151 = vmatpush1.msra.mxu0 %v2112
        %2152 = vmatprep.subr.mxu0 0.0
        %2153 = vmatpush2.msra.mxu0 0.0
        %2154 = vmatprep.subr.mxu0 0.0
        %2155 = vmatpush2.msra.mxu0 0.0
        %2156 = vmatprep.subr.mxu0 0.0
        %2157 = vmatpush2.msra.mxu0 0.0
        %2158 = vmatprep.subr.mxu0 0.0
        %2159 = vmatpush2.msra.mxu0 0.0
        %2160 = vmatprep.subr.mxu0 0.0
        %2161 = vmatpush2.msra.mxu0 0.0
        %2162 = vmatprep.subr.mxu0 0.0
        %2163 = vmatpush2.msra.mxu0 0.0
        %2164 = vmatprep.subr.mxu0 0.0
        %2165 = vmatpush2.msra.mxu0 0.0
        %2166 = vmatprep.subr.mxu0 0.0
        %2167 = vmatpush2.msra.mxu0 0.0
        %2168 = vmatprep.subr.mxu0 0.0
        %2169 = vmatpush2.msra.mxu0 0.0
        %2170 = vmatprep.subr.mxu0 0.0
        %2171 = vmatpush2.msra.mxu0 0.0
        %2172 = vmatprep.subr.mxu0 0.0
        %2173 = vmatpush2.msra.mxu0 0.0
        %2174 = vmatprep.subr.mxu0 0.0
        %2175 = vmatpush2.msra.mxu0 0.0
        %2176 = vmatprep.subr.mxu0 0.0
        %2177 = vmatpush2.msra.mxu0 0.0
        %2178 = vmatprep.subr.mxu0 0.0
        %2179 = vmatpush2.msra.mxu0 0.0
        %2180 = vmatprep.subr.mxu0 0.0
        %2181 = vmatpush2.msra.mxu0 0.0
        %2182 = vmatprep.subr.mxu0 0.0
        %2183 = vmatpush2.msra.mxu0 0.0
        %2184 = vmatprep.mubr.f32.mxu0 0.0
        %2185 = vmatmul.mubr.f32.gmra.mxu0 %v2118
        %v2186 = vpop.f32.mrf.mxu0
        %v2187 = vadd.f32 0.0, %v2186
        %v2188 = vpop.f32.mrf.mxu0
        %v2189 = vadd.f32 0.0, %v2188
        %2190 = vdwg.mxu0
        %2191 = vmatprep.subr.mxu0 0.0
        %2192 = vmatpush1.msra.mxu0 0.0
        %2193 = vmatprep.subr.mxu0 0.0
        %2194 = vmatpush1.msra.mxu0 0.0
        %2195 = vmatprep.subr.mxu0 0.0
        %2196 = vmatpush1.msra.mxu0 0.0
        %2197 = vmatprep.subr.mxu0 0.0
        %2198 = vmatpush1.msra.mxu0 0.0
        %2199 = vmatprep.subr.mxu0 0.0
        %2200 = vmatpush1.msra.mxu0 0.0
        %2201 = vmatprep.subr.mxu0 0.0
        %2202 = vmatpush1.msra.mxu0 0.0
        %2203 = vmatprep.subr.mxu0 0.0
        %2204 = vmatpush1.msra.mxu0 0.0
        %2205 = vmatprep.subr.mxu0 0.0
        %2206 = vmatpush1.msra.mxu0 0.0
        %2207 = vmatprep.subr.mxu0 0.0
        %2208 = vmatpush1.msra.mxu0 0.0
        %2209 = vmatprep.subr.mxu0 0.0
        %2210 = vmatpush1.msra.mxu0 0.0
        %2211 = vmatprep.subr.mxu0 0.0
        %2212 = vmatpush1.msra.mxu0 0.0
        %2213 = vmatprep.subr.mxu0 0.0
        %2214 = vmatpush1.msra.mxu0 0.0
        %2215 = vmatprep.subr.mxu0 0.0
        %2216 = vmatpush1.msra.mxu0 0.0
        %2217 = vmatprep.subr.mxu0 0.0
        %2218 = vmatpush1.msra.mxu0 0.0
        %2219 = vmatprep.subr.mxu0 0.0
        %2220 = vmatpush1.msra.mxu0 0.0
        %2221 = vmatprep.subr.mxu0 0.0
        %2222 = vmatpush1.msra.mxu0 %v2111
        %2223 = vmatprep.subr.mxu0 0.0
        %2224 = vmatpush2.msra.mxu0 0.0
        %2225 = vmatprep.subr.mxu0 0.0
        %2226 = vmatpush2.msra.mxu0 0.0
        %2227 = vmatprep.subr.mxu0 0.0
        %2228 = vmatpush2.msra.mxu0 0.0
        %2229 = vmatprep.subr.mxu0 0.0
        %2230 = vmatpush2.msra.mxu0 0.0
        %2231 = vmatprep.subr.mxu0 0.0
        %2232 = vmatpush2.msra.mxu0 0.0
        %2233 = vmatprep.subr.mxu0 0.0
        %2234 = vmatpush2.msra.mxu0 0.0
        %2235 = vmatprep.subr.mxu0 0.0
        %2236 = vmatpush2.msra.mxu0 0.0
        %2237 = vmatprep.subr.mxu0 0.0
        %2238 = vmatpush2.msra.mxu0 0.0
        %2239 = vmatprep.subr.mxu0 0.0
        %2240 = vmatpush2.msra.mxu0 0.0
        %2241 = vmatprep.subr.mxu0 0.0
        %2242 = vmatpush2.msra.mxu0 0.0
        %2243 = vmatprep.subr.mxu0 0.0
        %2244 = vmatpush2.msra.mxu0 0.0
        %2245 = vmatprep.subr.mxu0 0.0
        %2246 = vmatpush2.msra.mxu0 0.0
        %2247 = vmatprep.subr.mxu0 0.0
        %2248 = vmatpush2.msra.mxu0 0.0
        %2249 = vmatprep.subr.mxu0 0.0
        %2250 = vmatpush2.msra.mxu0 0.0
        %2251 = vmatprep.subr.mxu0 0.0
        %2252 = vmatpush2.msra.mxu0 0.0
        %2253 = vmatprep.subr.mxu0 0.0
        %2254 = vmatpush2.msra.mxu0 0.0
        %2255 = vmatprep.mubr.f32.mxu0 0.0
        %2256 = vmatmul.mubr.f32.gmra.mxu0 %v2118
        %v2257 = vpop.f32.mrf.mxu0
        %v2258 = vadd.f32 0.0, %v2257
        %v2259 = vpop.f32.mrf.mxu0
        %2260 = vdwg.mxu0
        %v2262 = vsel %vm1813, %v2103, 0
        %2264 = vmatprep.subr.mxu0 0.0
        %2265 = vmatpush1.msra.mxu0 0.0
        %2266 = vmatprep.subr.mxu0 0.0
        %2267 = vmatpush1.msra.mxu0 0.0
        %2268 = vmatprep.subr.mxu0 0.0
        %2269 = vmatpush1.msra.mxu0 0.0
        %2270 = vmatprep.subr.mxu0 0.0
        %2271 = vmatpush1.msra.mxu0 0.0
        %2272 = vmatprep.subr.mxu0 0.0
        %2273 = vmatpush1.msra.mxu0 0.0
        %2274 = vmatprep.subr.mxu0 0.0
        %2275 = vmatpush1.msra.mxu0 0.0
        %2276 = vmatprep.subr.mxu0 0.0
        %2277 = vmatpush1.msra.mxu0 0.0
        %2278 = vmatprep.subr.mxu0 0.0
        %2279 = vmatpush1.msra.mxu0 0.0
        %2280 = vmatprep.subr.mxu0 0.0
        %2281 = vmatpush1.msra.mxu0 0.0
        %2282 = vmatprep.subr.mxu0 0.0
        %2283 = vmatpush1.msra.mxu0 0.0
        %2284 = vmatprep.subr.mxu0 0.0
        %2285 = vmatpush1.msra.mxu0 0.0
        %2286 = vmatprep.subr.mxu0 0.0
        %2287 = vmatpush1.msra.mxu0 0.0
        %2288 = vmatprep.subr.mxu0 0.0
        %2289 = vmatpush1.msra.mxu0 0.0
        %2290 = vmatprep.subr.mxu0 0.0
        %2291 = vmatpush1.msra.mxu0 0.0
        %2292 = vmatprep.subr.mxu0 0.0
        %2293 = vmatpush1.msra.mxu0 0.0
        %2294 = vmatprep.subr.mxu0 %v1791
        %2295 = vmatpush1.msra.mxu0 %v1790
        %2296 = vmatprep.subr.mxu0 0.0
        %2297 = vmatpush2.msra.mxu0 0.0
        %2298 = vmatprep.subr.mxu0 0.0
        %2299 = vmatpush2.msra.mxu0 0.0
        %2300 = vmatprep.subr.mxu0 0.0
        %2301 = vmatpush2.msra.mxu0 0.0
        %2302 = vmatprep.subr.mxu0 0.0
        %2303 = vmatpush2.msra.mxu0 0.0
        %2304 = vmatprep.subr.mxu0 0.0
        %2305 = vmatpush2.msra.mxu0 0.0
        %2306 = vmatprep.subr.mxu0 0.0
        %2307 = vmatpush2.msra.mxu0 0.0
        %2308 = vmatprep.subr.mxu0 0.0
        %2309 = vmatpush2.msra.mxu0 0.0
        %2310 = vmatprep.subr.mxu0 0.0
        %2311 = vmatpush2.msra.mxu0 0.0
        %2312 = vmatprep.subr.mxu0 0.0
        %2313 = vmatpush2.msra.mxu0 0.0
        %2314 = vmatprep.subr.mxu0 0.0
        %2315 = vmatpush2.msra.mxu0 0.0
        %2316 = vmatprep.subr.mxu0 0.0
        %2317 = vmatpush2.msra.mxu0 0.0
        %2318 = vmatprep.subr.mxu0 0.0
        %2319 = vmatpush2.msra.mxu0 0.0
        %2320 = vmatprep.subr.mxu0 0.0
        %2321 = vmatpush2.msra.mxu0 0.0
        %2322 = vmatprep.subr.mxu0 0.0
        %2323 = vmatpush2.msra.mxu0 0.0
        %2324 = vmatprep.subr.mxu0 0.0
        %2325 = vmatpush2.msra.mxu0 0.0
        %2326 = vmatprep.subr.mxu0 0.0
        %2327 = vmatpush2.msra.mxu0 0.0
        %2328 = vmatprep.mubr.f32.mxu0 0.0
        %2329 = vmatmul.mubr.f32.gmra.mxu0 %v2262
        %v2330 = vpop.f32.mrf.mxu0
        %v2331 = vadd.f32 %v2187, %v2330
        %v2332 = vpop.f32.mrf.mxu0
        %v2333 = vadd.f32 %v2189, %v2332
        %2334 = vdwg.mxu0
        %2335 = vmatprep.subr.mxu0 0.0
        %2336 = vmatpush1.msra.mxu0 0.0
        %2337 = vmatprep.subr.mxu0 0.0
        %2338 = vmatpush1.msra.mxu0 0.0
        %2339 = vmatprep.subr.mxu0 0.0
        %2340 = vmatpush1.msra.mxu0 0.0
        %2341 = vmatprep.subr.mxu0 0.0
        %2342 = vmatpush1.msra.mxu0 0.0
        %2343 = vmatprep.subr.mxu0 0.0
        %2344 = vmatpush1.msra.mxu0 0.0
        %2345 = vmatprep.subr.mxu0 0.0
        %2346 = vmatpush1.msra.mxu0 0.0
        %2347 = vmatprep.subr.mxu0 0.0
        %2348 = vmatpush1.msra.mxu0 0.0
        %2349 = vmatprep.subr.mxu0 0.0
        %2350 = vmatpush1.msra.mxu0 0.0
        %2351 = vmatprep.subr.mxu0 0.0
        %2352 = vmatpush1.msra.mxu0 0.0
        %2353 = vmatprep.subr.mxu0 0.0
        %2354 = vmatpush1.msra.mxu0 0.0
        %2355 = vmatprep.subr.mxu0 0.0
        %2356 = vmatpush1.msra.mxu0 0.0
        %2357 = vmatprep.subr.mxu0 0.0
        %2358 = vmatpush1.msra.mxu0 0.0
        %2359 = vmatprep.subr.mxu0 0.0
        %2360 = vmatpush1.msra.mxu0 0.0
        %2361 = vmatprep.subr.mxu0 0.0
        %2362 = vmatpush1.msra.mxu0 0.0
        %2363 = vmatprep.subr.mxu0 0.0
        %2364 = vmatpush1.msra.mxu0 0.0
        %2365 = vmatprep.subr.mxu0 0.0
        %2366 = vmatpush1.msra.mxu0 %v1792
        %2367 = vmatprep.subr.mxu0 0.0
        %2368 = vmatpush2.msra.mxu0 0.0
        %2369 = vmatprep.subr.mxu0 0.0
        %2370 = vmatpush2.msra.mxu0 0.0
        %2371 = vmatprep.subr.mxu0 0.0
        %2372 = vmatpush2.msra.mxu0 0.0
        %2373 = vmatprep.subr.mxu0 0.0
        %2374 = vmatpush2.msra.mxu0 0.0
        %2375 = vmatprep.subr.mxu0 0.0
        %2376 = vmatpush2.msra.mxu0 0.0
        %2377 = vmatprep.subr.mxu0 0.0
        %2378 = vmatpush2.msra.mxu0 0.0
        %2379 = vmatprep.subr.mxu0 0.0
        %2380 = vmatpush2.msra.mxu0 0.0
        %2381 = vmatprep.subr.mxu0 0.0
        %2382 = vmatpush2.msra.mxu0 0.0
        %2383 = vmatprep.subr.mxu0 0.0
        %2384 = vmatpush2.msra.mxu0 0.0
        %2385 = vmatprep.subr.mxu0 0.0
        %2386 = vmatpush2.msra.mxu0 0.0
        %2387 = vmatprep.subr.mxu0 0.0
        %2388 = vmatpush2.msra.mxu0 0.0
        %2389 = vmatprep.subr.mxu0 0.0
        %2390 = vmatpush2.msra.mxu0 0.0
        %2391 = vmatprep.subr.mxu0 0.0
        %2392 = vmatpush2.msra.mxu0 0.0
        %2393 = vmatprep.subr.mxu0 0.0
        %2394 = vmatpush2.msra.mxu0 0.0
        %2395 = vmatprep.subr.mxu0 0.0
        %2396 = vmatpush2.msra.mxu0 0.0
        %2397 = vmatprep.subr.mxu0 0.0
        %2398 = vmatpush2.msra.mxu0 0.0
        %2399 = vmatprep.mubr.f32.mxu0 0.0
        %2400 = vmatmul.mubr.f32.gmra.mxu0 %v2262
        %v2401 = vpop.f32.mrf.mxu0
        %v2402 = vadd.f32 %v2258, %v2401
        %v2403 = vpop.f32.mrf.mxu0
        %2404 = vdwg.mxu0
        %s2405 = scalar_lea.vmem %s3, 32
        %v2406 = vld [vmem:[%s2405] sm:$0xf]
        %s2407 = scalar_lea.vmem %s3, 24
        %v2408 = vld [vmem:[%s2407] sm:$0xf]
        %v2410 = vsel %vm1813, %v2408, 0
        %2412 = vmatprep.subr.mxu0 0.0
        %2413 = vmatpush1.msra.mxu0 0.0
        %2414 = vmatprep.subr.mxu0 0.0
        %2415 = vmatpush1.msra.mxu0 0.0
        %2416 = vmatprep.subr.mxu0 0.0
        %2417 = vmatpush1.msra.mxu0 0.0
        %2418 = vmatprep.subr.mxu0 0.0
        %2419 = vmatpush1.msra.mxu0 0.0
        %2420 = vmatprep.subr.mxu0 0.0
        %2421 = vmatpush1.msra.mxu0 0.0
        %2422 = vmatprep.subr.mxu0 0.0
        %2423 = vmatpush1.msra.mxu0 0.0
        %2424 = vmatprep.subr.mxu0 0.0
        %2425 = vmatpush1.msra.mxu0 0.0
        %2426 = vmatprep.subr.mxu0 0.0
        %2427 = vmatpush1.msra.mxu0 0.0
        %2428 = vmatprep.subr.mxu0 0.0
        %2429 = vmatpush1.msra.mxu0 0.0
        %2430 = vmatprep.subr.mxu0 0.0
        %2431 = vmatpush1.msra.mxu0 0.0
        %2432 = vmatprep.subr.mxu0 0.0
        %2433 = vmatpush1.msra.mxu0 0.0
        %2434 = vmatprep.subr.mxu0 0.0
        %2435 = vmatpush1.msra.mxu0 0.0
        %2436 = vmatprep.subr.mxu0 0.0
        %2437 = vmatpush1.msra.mxu0 0.0
        %2438 = vmatprep.subr.mxu0 0.0
        %2439 = vmatpush1.msra.mxu0 0.0
        %2440 = vmatprep.subr.mxu0 0.0
        %2441 = vmatpush1.msra.mxu0 0.0
        %2442 = vmatprep.subr.mxu0 %v1809
        %2443 = vmatpush1.msra.mxu0 %v1808
        %2444 = vmatprep.subr.mxu0 0.0
        %2445 = vmatpush2.msra.mxu0 0.0
        %2446 = vmatprep.subr.mxu0 0.0
        %2447 = vmatpush2.msra.mxu0 0.0
        %2448 = vmatprep.subr.mxu0 0.0
        %2449 = vmatpush2.msra.mxu0 0.0
        %2450 = vmatprep.subr.mxu0 0.0
        %2451 = vmatpush2.msra.mxu0 0.0
        %2452 = vmatprep.subr.mxu0 0.0
        %2453 = vmatpush2.msra.mxu0 0.0
        %2454 = vmatprep.subr.mxu0 0.0
        %2455 = vmatpush2.msra.mxu0 0.0
        %2456 = vmatprep.subr.mxu0 0.0
        %2457 = vmatpush2.msra.mxu0 0.0
        %2458 = vmatprep.subr.mxu0 0.0
        %2459 = vmatpush2.msra.mxu0 0.0
        %2460 = vmatprep.subr.mxu0 0.0
        %2461 = vmatpush2.msra.mxu0 0.0
        %2462 = vmatprep.subr.mxu0 0.0
        %2463 = vmatpush2.msra.mxu0 0.0
        %2464 = vmatprep.subr.mxu0 0.0
        %2465 = vmatpush2.msra.mxu0 0.0
        %2466 = vmatprep.subr.mxu0 0.0
        %2467 = vmatpush2.msra.mxu0 0.0
        %2468 = vmatprep.subr.mxu0 0.0
        %2469 = vmatpush2.msra.mxu0 0.0
        %2470 = vmatprep.subr.mxu0 0.0
        %2471 = vmatpush2.msra.mxu0 0.0
        %2472 = vmatprep.subr.mxu0 0.0
        %2473 = vmatpush2.msra.mxu0 0.0
        %2474 = vmatprep.subr.mxu0 0.0
        %2475 = vmatpush2.msra.mxu0 0.0
        %2476 = vmatprep.mubr.f32.mxu0 0.0
        %2477 = vmatmul.mubr.f32.gmra.mxu0 %v2410
        %v2478 = vpop.f32.mrf.mxu0
        %v2479 = vadd.f32 0.0, %v2478
        %v2480 = vpop.f32.mrf.mxu0
        %v2481 = vadd.f32 0.0, %v2480
        %2482 = vdwg.mxu0
        %2483 = vmatprep.subr.mxu0 0.0
        %2484 = vmatpush1.msra.mxu0 0.0
        %2485 = vmatprep.subr.mxu0 0.0
        %2486 = vmatpush1.msra.mxu0 0.0
        %2487 = vmatprep.subr.mxu0 0.0
        %2488 = vmatpush1.msra.mxu0 0.0
        %2489 = vmatprep.subr.mxu0 0.0
        %2490 = vmatpush1.msra.mxu0 0.0
        %2491 = vmatprep.subr.mxu0 0.0
        %2492 = vmatpush1.msra.mxu0 0.0
        %2493 = vmatprep.subr.mxu0 0.0
        %2494 = vmatpush1.msra.mxu0 0.0
        %2495 = vmatprep.subr.mxu0 0.0
        %2496 = vmatpush1.msra.mxu0 0.0
        %2497 = vmatprep.subr.mxu0 0.0
        %2498 = vmatpush1.msra.mxu0 0.0
        %2499 = vmatprep.subr.mxu0 0.0
        %2500 = vmatpush1.msra.mxu0 0.0
        %2501 = vmatprep.subr.mxu0 0.0
        %2502 = vmatpush1.msra.mxu0 0.0
        %2503 = vmatprep.subr.mxu0 0.0
        %2504 = vmatpush1.msra.mxu0 0.0
        %2505 = vmatprep.subr.mxu0 0.0
        %2506 = vmatpush1.msra.mxu0 0.0
        %2507 = vmatprep.subr.mxu0 0.0
        %2508 = vmatpush1.msra.mxu0 0.0
        %2509 = vmatprep.subr.mxu0 0.0
        %2510 = vmatpush1.msra.mxu0 0.0
        %2511 = vmatprep.subr.mxu0 0.0
        %2512 = vmatpush1.msra.mxu0 0.0
        %2513 = vmatprep.subr.mxu0 0.0
        %2514 = vmatpush1.msra.mxu0 %v1807
        %2515 = vmatprep.subr.mxu0 0.0
        %2516 = vmatpush2.msra.mxu0 0.0
        %2517 = vmatprep.subr.mxu0 0.0
        %2518 = vmatpush2.msra.mxu0 0.0
        %2519 = vmatprep.subr.mxu0 0.0
        %2520 = vmatpush2.msra.mxu0 0.0
        %2521 = vmatprep.subr.mxu0 0.0
        %2522 = vmatpush2.msra.mxu0 0.0
        %2523 = vmatprep.subr.mxu0 0.0
        %2524 = vmatpush2.msra.mxu0 0.0
        %2525 = vmatprep.subr.mxu0 0.0
        %2526 = vmatpush2.msra.mxu0 0.0
        %2527 = vmatprep.subr.mxu0 0.0
        %2528 = vmatpush2.msra.mxu0 0.0
        %2529 = vmatprep.subr.mxu0 0.0
        %2530 = vmatpush2.msra.mxu0 0.0
        %2531 = vmatprep.subr.mxu0 0.0
        %2532 = vmatpush2.msra.mxu0 0.0
        %2533 = vmatprep.subr.mxu0 0.0
        %2534 = vmatpush2.msra.mxu0 0.0
        %2535 = vmatprep.subr.mxu0 0.0
        %2536 = vmatpush2.msra.mxu0 0.0
        %2537 = vmatprep.subr.mxu0 0.0
        %2538 = vmatpush2.msra.mxu0 0.0
        %2539 = vmatprep.subr.mxu0 0.0
        %2540 = vmatpush2.msra.mxu0 0.0
        %2541 = vmatprep.subr.mxu0 0.0
        %2542 = vmatpush2.msra.mxu0 0.0
        %2543 = vmatprep.subr.mxu0 0.0
        %2544 = vmatpush2.msra.mxu0 0.0
        %2545 = vmatprep.subr.mxu0 0.0
        %2546 = vmatpush2.msra.mxu0 0.0
        %2547 = vmatprep.mubr.f32.mxu0 0.0
        %2548 = vmatmul.mubr.f32.gmra.mxu0 %v2410
        %v2549 = vpop.f32.mrf.mxu0
        %v2550 = vadd.f32 0.0, %v2549
        %v2551 = vpop.f32.mrf.mxu0
        %2552 = vdwg.mxu0
        %v2554 = vsel %vm1813, %v2406, 0
        %2556 = vmatprep.subr.mxu0 0.0
        %2557 = vmatpush1.msra.mxu0 0.0
        %2558 = vmatprep.subr.mxu0 0.0
        %2559 = vmatpush1.msra.mxu0 0.0
        %2560 = vmatprep.subr.mxu0 0.0
        %2561 = vmatpush1.msra.mxu0 0.0
        %2562 = vmatprep.subr.mxu0 0.0
        %2563 = vmatpush1.msra.mxu0 0.0
        %2564 = vmatprep.subr.mxu0 0.0
        %2565 = vmatpush1.msra.mxu0 0.0
        %2566 = vmatprep.subr.mxu0 0.0
        %2567 = vmatpush1.msra.mxu0 0.0
        %2568 = vmatprep.subr.mxu0 0.0
        %2569 = vmatpush1.msra.mxu0 0.0
        %2570 = vmatprep.subr.mxu0 0.0
        %2571 = vmatpush1.msra.mxu0 0.0
        %2572 = vmatprep.subr.mxu0 0.0
        %2573 = vmatpush1.msra.mxu0 0.0
        %2574 = vmatprep.subr.mxu0 0.0
        %2575 = vmatpush1.msra.mxu0 0.0
        %2576 = vmatprep.subr.mxu0 0.0
        %2577 = vmatpush1.msra.mxu0 0.0
        %2578 = vmatprep.subr.mxu0 0.0
        %2579 = vmatpush1.msra.mxu0 0.0
        %2580 = vmatprep.subr.mxu0 0.0
        %2581 = vmatpush1.msra.mxu0 0.0
        %2582 = vmatprep.subr.mxu0 0.0
        %2583 = vmatpush1.msra.mxu0 0.0
        %2584 = vmatprep.subr.mxu0 0.0
        %2585 = vmatpush1.msra.mxu0 0.0
        %2586 = vmatprep.subr.mxu0 %v1791
        %2587 = vmatpush1.msra.mxu0 %v1790
        %2588 = vmatprep.subr.mxu0 0.0
        %2589 = vmatpush2.msra.mxu0 0.0
        %2590 = vmatprep.subr.mxu0 0.0
        %2591 = vmatpush2.msra.mxu0 0.0
        %2592 = vmatprep.subr.mxu0 0.0
        %2593 = vmatpush2.msra.mxu0 0.0
        %2594 = vmatprep.subr.mxu0 0.0
        %2595 = vmatpush2.msra.mxu0 0.0
        %2596 = vmatprep.subr.mxu0 0.0
        %2597 = vmatpush2.msra.mxu0 0.0
        %2598 = vmatprep.subr.mxu0 0.0
        %2599 = vmatpush2.msra.mxu0 0.0
        %2600 = vmatprep.subr.mxu0 0.0
        %2601 = vmatpush2.msra.mxu0 0.0
        %2602 = vmatprep.subr.mxu0 0.0
        %2603 = vmatpush2.msra.mxu0 0.0
        %2604 = vmatprep.subr.mxu0 0.0
        %2605 = vmatpush2.msra.mxu0 0.0
        %2606 = vmatprep.subr.mxu0 0.0
        %2607 = vmatpush2.msra.mxu0 0.0
        %2608 = vmatprep.subr.mxu0 0.0
        %2609 = vmatpush2.msra.mxu0 0.0
        %2610 = vmatprep.subr.mxu0 0.0
        %2611 = vmatpush2.msra.mxu0 0.0
        %2612 = vmatprep.subr.mxu0 0.0
        %2613 = vmatpush2.msra.mxu0 0.0
        %2614 = vmatprep.subr.mxu0 0.0
        %2615 = vmatpush2.msra.mxu0 0.0
        %2616 = vmatprep.subr.mxu0 0.0
        %2617 = vmatpush2.msra.mxu0 0.0
        %2618 = vmatprep.subr.mxu0 0.0
        %2619 = vmatpush2.msra.mxu0 0.0
        %2620 = vmatprep.mubr.f32.mxu0 0.0
        %2621 = vmatmul.mubr.f32.gmra.mxu0 %v2554
        %v2622 = vpop.f32.mrf.mxu0
        %v2623 = vadd.f32 %v2479, %v2622
        %v2624 = vpop.f32.mrf.mxu0
        %v2625 = vadd.f32 %v2481, %v2624
        %2626 = vdwg.mxu0
        %2627 = vmatprep.subr.mxu0 0.0
        %2628 = vmatpush1.msra.mxu0 0.0
        %2629 = vmatprep.subr.mxu0 0.0
        %2630 = vmatpush1.msra.mxu0 0.0
        %2631 = vmatprep.subr.mxu0 0.0
        %2632 = vmatpush1.msra.mxu0 0.0
        %2633 = vmatprep.subr.mxu0 0.0
        %2634 = vmatpush1.msra.mxu0 0.0
        %2635 = vmatprep.subr.mxu0 0.0
        %2636 = vmatpush1.msra.mxu0 0.0
        %2637 = vmatprep.subr.mxu0 0.0
        %2638 = vmatpush1.msra.mxu0 0.0
        %2639 = vmatprep.subr.mxu0 0.0
        %2640 = vmatpush1.msra.mxu0 0.0
        %2641 = vmatprep.subr.mxu0 0.0
        %2642 = vmatpush1.msra.mxu0 0.0
        %2643 = vmatprep.subr.mxu0 0.0
        %2644 = vmatpush1.msra.mxu0 0.0
        %2645 = vmatprep.subr.mxu0 0.0
        %2646 = vmatpush1.msra.mxu0 0.0
        %2647 = vmatprep.subr.mxu0 0.0
        %2648 = vmatpush1.msra.mxu0 0.0
        %2649 = vmatprep.subr.mxu0 0.0
        %2650 = vmatpush1.msra.mxu0 0.0
        %2651 = vmatprep.subr.mxu0 0.0
        %2652 = vmatpush1.msra.mxu0 0.0
        %2653 = vmatprep.subr.mxu0 0.0
        %2654 = vmatpush1.msra.mxu0 0.0
        %2655 = vmatprep.subr.mxu0 0.0
        %2656 = vmatpush1.msra.mxu0 0.0
        %2657 = vmatprep.subr.mxu0 0.0
        %2658 = vmatpush1.msra.mxu0 %v1792
        %2659 = vmatprep.subr.mxu0 0.0
        %2660 = vmatpush2.msra.mxu0 0.0
        %2661 = vmatprep.subr.mxu0 0.0
        %2662 = vmatpush2.msra.mxu0 0.0
        %2663 = vmatprep.subr.mxu0 0.0
        %2664 = vmatpush2.msra.mxu0 0.0
        %2665 = vmatprep.subr.mxu0 0.0
        %2666 = vmatpush2.msra.mxu0 0.0
        %2667 = vmatprep.subr.mxu0 0.0
        %2668 = vmatpush2.msra.mxu0 0.0
        %2669 = vmatprep.subr.mxu0 0.0
        %2670 = vmatpush2.msra.mxu0 0.0
        %2671 = vmatprep.subr.mxu0 0.0
        %2672 = vmatpush2.msra.mxu0 0.0
        %2673 = vmatprep.subr.mxu0 0.0
        %2674 = vmatpush2.msra.mxu0 0.0
        %2675 = vmatprep.subr.mxu0 0.0
        %2676 = vmatpush2.msra.mxu0 0.0
        %2677 = vmatprep.subr.mxu0 0.0
        %2678 = vmatpush2.msra.mxu0 0.0
        %2679 = vmatprep.subr.mxu0 0.0
        %2680 = vmatpush2.msra.mxu0 0.0
        %2681 = vmatprep.subr.mxu0 0.0
        %2682 = vmatpush2.msra.mxu0 0.0
        %2683 = vmatprep.subr.mxu0 0.0
        %2684 = vmatpush2.msra.mxu0 0.0
        %2685 = vmatprep.subr.mxu0 0.0
        %2686 = vmatpush2.msra.mxu0 0.0
        %2687 = vmatprep.subr.mxu0 0.0
        %2688 = vmatpush2.msra.mxu0 0.0
        %2689 = vmatprep.subr.mxu0 0.0
        %2690 = vmatpush2.msra.mxu0 0.0
        %2691 = vmatprep.mubr.f32.mxu0 0.0
        %2692 = vmatmul.mubr.f32.gmra.mxu0 %v2554
        %v2693 = vpop.f32.mrf.mxu0
        %v2694 = vadd.f32 %v2550, %v2693
        %v2695 = vpop.f32.mrf.mxu0
        %2696 = vdwg.mxu0
        %s2697 = scalar_lea.vmem %s3, 8
        %v2698 = vld [vmem:[%s2697] sm:$0xf]
        %v2700 = vsel %vm1813, %v2698, 0
        %2702 = vmatprep.subr.mxu0 0.0
        %2703 = vmatpush1.msra.mxu0 0.0
        %2704 = vmatprep.subr.mxu0 0.0
        %2705 = vmatpush1.msra.mxu0 0.0
        %2706 = vmatprep.subr.mxu0 0.0
        %2707 = vmatpush1.msra.mxu0 0.0
        %2708 = vmatprep.subr.mxu0 0.0
        %2709 = vmatpush1.msra.mxu0 0.0
        %2710 = vmatprep.subr.mxu0 0.0
        %2711 = vmatpush1.msra.mxu0 0.0
        %2712 = vmatprep.subr.mxu0 0.0
        %2713 = vmatpush1.msra.mxu0 0.0
        %2714 = vmatprep.subr.mxu0 0.0
        %2715 = vmatpush1.msra.mxu0 0.0
        %2716 = vmatprep.subr.mxu0 0.0
        %2717 = vmatpush1.msra.mxu0 0.0
        %2718 = vmatprep.subr.mxu0 0.0
        %2719 = vmatpush1.msra.mxu0 0.0
        %2720 = vmatprep.subr.mxu0 0.0
        %2721 = vmatpush1.msra.mxu0 0.0
        %2722 = vmatprep.subr.mxu0 0.0
        %2723 = vmatpush1.msra.mxu0 0.0
        %2724 = vmatprep.subr.mxu0 0.0
        %2725 = vmatpush1.msra.mxu0 0.0
        %2726 = vmatprep.subr.mxu0 0.0
        %2727 = vmatpush1.msra.mxu0 0.0
        %2728 = vmatprep.subr.mxu0 0.0
        %2729 = vmatpush1.msra.mxu0 0.0
        %2730 = vmatprep.subr.mxu0 0.0
        %2731 = vmatpush1.msra.mxu0 0.0
        %2732 = vmatprep.subr.mxu0 %v2113
        %2733 = vmatpush1.msra.mxu0 %v2112
        %2734 = vmatprep.subr.mxu0 0.0
        %2735 = vmatpush2.msra.mxu0 0.0
        %2736 = vmatprep.subr.mxu0 0.0
        %2737 = vmatpush2.msra.mxu0 0.0
        %2738 = vmatprep.subr.mxu0 0.0
        %2739 = vmatpush2.msra.mxu0 0.0
        %2740 = vmatprep.subr.mxu0 0.0
        %2741 = vmatpush2.msra.mxu0 0.0
        %2742 = vmatprep.subr.mxu0 0.0
        %2743 = vmatpush2.msra.mxu0 0.0
        %2744 = vmatprep.subr.mxu0 0.0
        %2745 = vmatpush2.msra.mxu0 0.0
        %2746 = vmatprep.subr.mxu0 0.0
        %2747 = vmatpush2.msra.mxu0 0.0
        %2748 = vmatprep.subr.mxu0 0.0
        %2749 = vmatpush2.msra.mxu0 0.0
        %2750 = vmatprep.subr.mxu0 0.0
        %2751 = vmatpush2.msra.mxu0 0.0
        %2752 = vmatprep.subr.mxu0 0.0
        %2753 = vmatpush2.msra.mxu0 0.0
        %2754 = vmatprep.subr.mxu0 0.0
        %2755 = vmatpush2.msra.mxu0 0.0
        %2756 = vmatprep.subr.mxu0 0.0
        %2757 = vmatpush2.msra.mxu0 0.0
        %2758 = vmatprep.subr.mxu0 0.0
        %2759 = vmatpush2.msra.mxu0 0.0
        %2760 = vmatprep.subr.mxu0 0.0
        %2761 = vmatpush2.msra.mxu0 0.0
        %2762 = vmatprep.subr.mxu0 0.0
        %2763 = vmatpush2.msra.mxu0 0.0
        %2764 = vmatprep.subr.mxu0 0.0
        %2765 = vmatpush2.msra.mxu0 0.0
        %2766 = vmatprep.mubr.f32.mxu0 0.0
        %2767 = vmatmul.mubr.f32.gmra.mxu0 %v2700
        %v2768 = vpop.f32.mrf.mxu0
        %v2769 = vadd.f32 0.0, %v2768
        %v2770 = vpop.f32.mrf.mxu0
        %v2771 = vadd.f32 0.0, %v2770
        %2772 = vdwg.mxu0
        %2773 = vmatprep.subr.mxu0 0.0
        %2774 = vmatpush1.msra.mxu0 0.0
        %2775 = vmatprep.subr.mxu0 0.0
        %2776 = vmatpush1.msra.mxu0 0.0
        %2777 = vmatprep.subr.mxu0 0.0
        %2778 = vmatpush1.msra.mxu0 0.0
        %2779 = vmatprep.subr.mxu0 0.0
        %2780 = vmatpush1.msra.mxu0 0.0
        %2781 = vmatprep.subr.mxu0 0.0
        %2782 = vmatpush1.msra.mxu0 0.0
        %2783 = vmatprep.subr.mxu0 0.0
        %2784 = vmatpush1.msra.mxu0 0.0
        %2785 = vmatprep.subr.mxu0 0.0
        %2786 = vmatpush1.msra.mxu0 0.0
        %2787 = vmatprep.subr.mxu0 0.0
        %2788 = vmatpush1.msra.mxu0 0.0
        %2789 = vmatprep.subr.mxu0 0.0
        %2790 = vmatpush1.msra.mxu0 0.0
        %2791 = vmatprep.subr.mxu0 0.0
        %2792 = vmatpush1.msra.mxu0 0.0
        %2793 = vmatprep.subr.mxu0 0.0
        %2794 = vmatpush1.msra.mxu0 0.0
        %2795 = vmatprep.subr.mxu0 0.0
        %2796 = vmatpush1.msra.mxu0 0.0
        %2797 = vmatprep.subr.mxu0 0.0
        %2798 = vmatpush1.msra.mxu0 0.0
        %2799 = vmatprep.subr.mxu0 0.0
        %2800 = vmatpush1.msra.mxu0 0.0
        %2801 = vmatprep.subr.mxu0 0.0
        %2802 = vmatpush1.msra.mxu0 0.0
        %2803 = vmatprep.subr.mxu0 0.0
        %2804 = vmatpush1.msra.mxu0 %v2111
        %2805 = vmatprep.subr.mxu0 0.0
        %2806 = vmatpush2.msra.mxu0 0.0
        %2807 = vmatprep.subr.mxu0 0.0
        %2808 = vmatpush2.msra.mxu0 0.0
        %2809 = vmatprep.subr.mxu0 0.0
        %2810 = vmatpush2.msra.mxu0 0.0
        %2811 = vmatprep.subr.mxu0 0.0
        %2812 = vmatpush2.msra.mxu0 0.0
        %2813 = vmatprep.subr.mxu0 0.0
        %2814 = vmatpush2.msra.mxu0 0.0
        %2815 = vmatprep.subr.mxu0 0.0
        %2816 = vmatpush2.msra.mxu0 0.0
        %2817 = vmatprep.subr.mxu0 0.0
        %2818 = vmatpush2.msra.mxu0 0.0
        %2819 = vmatprep.subr.mxu0 0.0
        %2820 = vmatpush2.msra.mxu0 0.0
        %2821 = vmatprep.subr.mxu0 0.0
        %2822 = vmatpush2.msra.mxu0 0.0
        %2823 = vmatprep.subr.mxu0 0.0
        %2824 = vmatpush2.msra.mxu0 0.0
        %2825 = vmatprep.subr.mxu0 0.0
        %2826 = vmatpush2.msra.mxu0 0.0
        %2827 = vmatprep.subr.mxu0 0.0
        %2828 = vmatpush2.msra.mxu0 0.0
        %2829 = vmatprep.subr.mxu0 0.0
        %2830 = vmatpush2.msra.mxu0 0.0
        %2831 = vmatprep.subr.mxu0 0.0
        %2832 = vmatpush2.msra.mxu0 0.0
        %2833 = vmatprep.subr.mxu0 0.0
        %2834 = vmatpush2.msra.mxu0 0.0
        %2835 = vmatprep.subr.mxu0 0.0
        %2836 = vmatpush2.msra.mxu0 0.0
        %2837 = vmatprep.mubr.f32.mxu0 0.0
        %2838 = vmatmul.mubr.f32.gmra.mxu0 %v2700
        %v2839 = vpop.f32.mrf.mxu0
        %v2840 = vadd.f32 0.0, %v2839
        %v2841 = vpop.f32.mrf.mxu0
        %2842 = vdwg.mxu0
        %v2843 = vadd.f32 %v2623, %v2769
        %v2844 = vadd.f32 %v2625, %v2771
        %v2845 = vadd.f32 %v2694, %v2840
        %v2846 = vld [vmem:[%s3] sm:$0xf]
        %2847 = vrot.lane.b32.xlu0 %v1790, 109
        %v2848 = vpop.permute.xlu0 %2847
        %2849 = vrot.lane.b32.xlu0 %v1791, 109
        %v2850 = vpop.permute.xlu0 %2849
        %2851 = vrot.lane.b32.xlu0 %v1792, 109
        %v2852 = vpop.permute.xlu0 %2851
        %v2853 = vsel %vm920, %v2848, %v2850
        %v2854 = vsel %vm920, %v2850, %v2852
        %v2859 = vsel %vm1813, %v2846, 0
        %2861 = vmatprep.subr.mxu0 0.0
        %2862 = vmatpush1.msra.mxu0 0.0
        %2863 = vmatprep.subr.mxu0 0.0
        %2864 = vmatpush1.msra.mxu0 0.0
        %2865 = vmatprep.subr.mxu0 0.0
        %2866 = vmatpush1.msra.mxu0 0.0
        %2867 = vmatprep.subr.mxu0 0.0
        %2868 = vmatpush1.msra.mxu0 0.0
        %2869 = vmatprep.subr.mxu0 0.0
        %2870 = vmatpush1.msra.mxu0 0.0
        %2871 = vmatprep.subr.mxu0 0.0
        %2872 = vmatpush1.msra.mxu0 0.0
        %2873 = vmatprep.subr.mxu0 0.0
        %2874 = vmatpush1.msra.mxu0 0.0
        %2875 = vmatprep.subr.mxu0 0.0
        %2876 = vmatpush1.msra.mxu0 0.0
        %2877 = vmatprep.subr.mxu0 0.0
        %2878 = vmatpush1.msra.mxu0 0.0
        %2879 = vmatprep.subr.mxu0 0.0
        %2880 = vmatpush1.msra.mxu0 0.0
        %2881 = vmatprep.subr.mxu0 0.0
        %2882 = vmatpush1.msra.mxu0 0.0
        %2883 = vmatprep.subr.mxu0 0.0
        %2884 = vmatpush1.msra.mxu0 0.0
        %2885 = vmatprep.subr.mxu0 0.0
        %2886 = vmatpush1.msra.mxu0 0.0
        %2887 = vmatprep.subr.mxu0 0.0
        %2888 = vmatpush1.msra.mxu0 0.0
        %2889 = vmatprep.subr.mxu0 0.0
        %2890 = vmatpush1.msra.mxu0 0.0
        %2891 = vmatprep.subr.mxu0 %v2854
        %2892 = vmatpush1.msra.mxu0 %v2853
        %2893 = vmatprep.subr.mxu0 0.0
        %2894 = vmatpush2.msra.mxu0 0.0
        %2895 = vmatprep.subr.mxu0 0.0
        %2896 = vmatpush2.msra.mxu0 0.0
        %2897 = vmatprep.subr.mxu0 0.0
        %2898 = vmatpush2.msra.mxu0 0.0
        %2899 = vmatprep.subr.mxu0 0.0
        %2900 = vmatpush2.msra.mxu0 0.0
        %2901 = vmatprep.subr.mxu0 0.0
        %2902 = vmatpush2.msra.mxu0 0.0
        %2903 = vmatprep.subr.mxu0 0.0
        %2904 = vmatpush2.msra.mxu0 0.0
        %2905 = vmatprep.subr.mxu0 0.0
        %2906 = vmatpush2.msra.mxu0 0.0
        %2907 = vmatprep.subr.mxu0 0.0
        %2908 = vmatpush2.msra.mxu0 0.0
        %2909 = vmatprep.subr.mxu0 0.0
        %2910 = vmatpush2.msra.mxu0 0.0
        %2911 = vmatprep.subr.mxu0 0.0
        %2912 = vmatpush2.msra.mxu0 0.0
        %2913 = vmatprep.subr.mxu0 0.0
        %2914 = vmatpush2.msra.mxu0 0.0
        %2915 = vmatprep.subr.mxu0 0.0
        %2916 = vmatpush2.msra.mxu0 0.0
        %2917 = vmatprep.subr.mxu0 0.0
        %2918 = vmatpush2.msra.mxu0 0.0
        %2919 = vmatprep.subr.mxu0 0.0
        %2920 = vmatpush2.msra.mxu0 0.0
        %2921 = vmatprep.subr.mxu0 0.0
        %2922 = vmatpush2.msra.mxu0 0.0
        %2923 = vmatprep.subr.mxu0 0.0
        %2924 = vmatpush2.msra.mxu0 0.0
        %2925 = vmatprep.mubr.f32.mxu0 0.0
        %2926 = vmatmul.mubr.f32.gmra.mxu0 %v2859
        %v2927 = vpop.f32.mrf.mxu0
        %v2928 = vadd.f32 0.0, %v2927
        %v2929 = vpop.f32.mrf.mxu0
        %v2930 = vadd.f32 0.0, %v2929
        %2931 = vdwg.mxu0
        %2932 = vmatprep.subr.mxu0 0.0
        %2933 = vmatpush1.msra.mxu0 0.0
        %2934 = vmatprep.subr.mxu0 0.0
        %2935 = vmatpush1.msra.mxu0 0.0
        %2936 = vmatprep.subr.mxu0 0.0
        %2937 = vmatpush1.msra.mxu0 0.0
        %2938 = vmatprep.subr.mxu0 0.0
        %2939 = vmatpush1.msra.mxu0 0.0
        %2940 = vmatprep.subr.mxu0 0.0
        %2941 = vmatpush1.msra.mxu0 0.0
        %2942 = vmatprep.subr.mxu0 0.0
        %2943 = vmatpush1.msra.mxu0 0.0
        %2944 = vmatprep.subr.mxu0 0.0
        %2945 = vmatpush1.msra.mxu0 0.0
        %2946 = vmatprep.subr.mxu0 0.0
        %2947 = vmatpush1.msra.mxu0 0.0
        %2948 = vmatprep.subr.mxu0 0.0
        %2949 = vmatpush1.msra.mxu0 0.0
        %2950 = vmatprep.subr.mxu0 0.0
        %2951 = vmatpush1.msra.mxu0 0.0
        %2952 = vmatprep.subr.mxu0 0.0
        %2953 = vmatpush1.msra.mxu0 0.0
        %2954 = vmatprep.subr.mxu0 0.0
        %2955 = vmatpush1.msra.mxu0 0.0
        %2956 = vmatprep.subr.mxu0 0.0
        %2957 = vmatpush1.msra.mxu0 0.0
        %2958 = vmatprep.subr.mxu0 0.0
        %2959 = vmatpush1.msra.mxu0 0.0
        %2960 = vmatprep.subr.mxu0 0.0
        %2961 = vmatpush1.msra.mxu0 0.0
        %2962 = vmatprep.subr.mxu0 0.0
        %2963 = vmatpush1.msra.mxu0 %v2852
        %2964 = vmatprep.subr.mxu0 0.0
        %2965 = vmatpush2.msra.mxu0 0.0
        %2966 = vmatprep.subr.mxu0 0.0
        %2967 = vmatpush2.msra.mxu0 0.0
        %2968 = vmatprep.subr.mxu0 0.0
        %2969 = vmatpush2.msra.mxu0 0.0
        %2970 = vmatprep.subr.mxu0 0.0
        %2971 = vmatpush2.msra.mxu0 0.0
        %2972 = vmatprep.subr.mxu0 0.0
        %2973 = vmatpush2.msra.mxu0 0.0
        %2974 = vmatprep.subr.mxu0 0.0
        %2975 = vmatpush2.msra.mxu0 0.0
        %2976 = vmatprep.subr.mxu0 0.0
        %2977 = vmatpush2.msra.mxu0 0.0
        %2978 = vmatprep.subr.mxu0 0.0
        %2979 = vmatpush2.msra.mxu0 0.0
        %2980 = vmatprep.subr.mxu0 0.0
        %2981 = vmatpush2.msra.mxu0 0.0
        %2982 = vmatprep.subr.mxu0 0.0
        %2983 = vmatpush2.msra.mxu0 0.0
        %2984 = vmatprep.subr.mxu0 0.0
        %2985 = vmatpush2.msra.mxu0 0.0
        %2986 = vmatprep.subr.mxu0 0.0
        %2987 = vmatpush2.msra.mxu0 0.0
        %2988 = vmatprep.subr.mxu0 0.0
        %2989 = vmatpush2.msra.mxu0 0.0
        %2990 = vmatprep.subr.mxu0 0.0
        %2991 = vmatpush2.msra.mxu0 0.0
        %2992 = vmatprep.subr.mxu0 0.0
        %2993 = vmatpush2.msra.mxu0 0.0
        %2994 = vmatprep.subr.mxu0 0.0
        %2995 = vmatpush2.msra.mxu0 0.0
        %2996 = vmatprep.mubr.f32.mxu0 0.0
        %2997 = vmatmul.mubr.f32.gmra.mxu0 %v2859
        %v2998 = vpop.f32.mrf.mxu0
        %v2999 = vadd.f32 0.0, %v2998
        %v3000 = vpop.f32.mrf.mxu0
        %3001 = vdwg.mxu0
        %v3002 = vadd.f32 %v2843, %v2928
        %v3003 = vadd.f32 %v2844, %v2930
        %v3004 = vadd.f32 %v2845, %v2999
        %v3005 = vld [vmem:[%s4] sm:$0xf]
        %3007 = vset.pattern.permute.xlu0 0
        %3008 = vperm.xlu0 %3007, %v3005
        %v3009 = vpop.permute.xlu0 %3008
        %v3012 = vsel %vm1813, %v1794, 0
        %3014 = vmatprep.subr.mxu0 0.0
        %3015 = vmatpush1.msra.mxu0 0.0
        %3016 = vmatprep.subr.mxu0 0.0
        %3017 = vmatpush1.msra.mxu0 0.0
        %3018 = vmatprep.subr.mxu0 0.0
        %3019 = vmatpush1.msra.mxu0 0.0
        %3020 = vmatprep.subr.mxu0 0.0
        %3021 = vmatpush1.msra.mxu0 0.0
        %3022 = vmatprep.subr.mxu0 0.0
        %3023 = vmatpush1.msra.mxu0 0.0
        %3024 = vmatprep.subr.mxu0 0.0
        %3025 = vmatpush1.msra.mxu0 0.0
        %3026 = vmatprep.subr.mxu0 0.0
        %3027 = vmatpush1.msra.mxu0 0.0
        %3028 = vmatprep.subr.mxu0 0.0
        %3029 = vmatpush1.msra.mxu0 0.0
        %3030 = vmatprep.subr.mxu0 0.0
        %3031 = vmatpush1.msra.mxu0 0.0
        %3032 = vmatprep.subr.mxu0 0.0
        %3033 = vmatpush1.msra.mxu0 0.0
        %3034 = vmatprep.subr.mxu0 0.0
        %3035 = vmatpush1.msra.mxu0 0.0
        %3036 = vmatprep.subr.mxu0 0.0
        %3037 = vmatpush1.msra.mxu0 0.0
        %3038 = vmatprep.subr.mxu0 0.0
        %3039 = vmatpush1.msra.mxu0 0.0
        %3040 = vmatprep.subr.mxu0 0.0
        %3041 = vmatpush1.msra.mxu0 0.0
        %3042 = vmatprep.subr.mxu0 0.0
        %3043 = vmatpush1.msra.mxu0 0.0
        %3044 = vmatprep.subr.mxu0 %v1791
        %3045 = vmatpush1.msra.mxu0 %v1790
        %3046 = vmatprep.subr.mxu0 0.0
        %3047 = vmatpush2.msra.mxu0 0.0
        %3048 = vmatprep.subr.mxu0 0.0
        %3049 = vmatpush2.msra.mxu0 0.0
        %3050 = vmatprep.subr.mxu0 0.0
        %3051 = vmatpush2.msra.mxu0 0.0
        %3052 = vmatprep.subr.mxu0 0.0
        %3053 = vmatpush2.msra.mxu0 0.0
        %3054 = vmatprep.subr.mxu0 0.0
        %3055 = vmatpush2.msra.mxu0 0.0
        %3056 = vmatprep.subr.mxu0 0.0
        %3057 = vmatpush2.msra.mxu0 0.0
        %3058 = vmatprep.subr.mxu0 0.0
        %3059 = vmatpush2.msra.mxu0 0.0
        %3060 = vmatprep.subr.mxu0 0.0
        %3061 = vmatpush2.msra.mxu0 0.0
        %3062 = vmatprep.subr.mxu0 0.0
        %3063 = vmatpush2.msra.mxu0 0.0
        %3064 = vmatprep.subr.mxu0 0.0
        %3065 = vmatpush2.msra.mxu0 0.0
        %3066 = vmatprep.subr.mxu0 0.0
        %3067 = vmatpush2.msra.mxu0 0.0
        %3068 = vmatprep.subr.mxu0 0.0
        %3069 = vmatpush2.msra.mxu0 0.0
        %3070 = vmatprep.subr.mxu0 0.0
        %3071 = vmatpush2.msra.mxu0 0.0
        %3072 = vmatprep.subr.mxu0 0.0
        %3073 = vmatpush2.msra.mxu0 0.0
        %3074 = vmatprep.subr.mxu0 0.0
        %3075 = vmatpush2.msra.mxu0 0.0
        %3076 = vmatprep.subr.mxu0 0.0
        %3077 = vmatpush2.msra.mxu0 0.0
        %3078 = vmatprep.mubr.f32.mxu0 0.0
        %3079 = vmatmul.mubr.f32.gmra.mxu0 %v3012
        %v3080 = vpop.f32.mrf.mxu0
        %v3081 = vadd.f32 %v3009, %v3080
        %v3082 = vpop.f32.mrf.mxu0
        %v3083 = vadd.f32 %v3009, %v3082
        %3084 = vdwg.mxu0
        %3085 = vmatprep.subr.mxu0 0.0
        %3086 = vmatpush1.msra.mxu0 0.0
        %3087 = vmatprep.subr.mxu0 0.0
        %3088 = vmatpush1.msra.mxu0 0.0
        %3089 = vmatprep.subr.mxu0 0.0
        %3090 = vmatpush1.msra.mxu0 0.0
        %3091 = vmatprep.subr.mxu0 0.0
        %3092 = vmatpush1.msra.mxu0 0.0
        %3093 = vmatprep.subr.mxu0 0.0
        %3094 = vmatpush1.msra.mxu0 0.0
        %3095 = vmatprep.subr.mxu0 0.0
        %3096 = vmatpush1.msra.mxu0 0.0
        %3097 = vmatprep.subr.mxu0 0.0
        %3098 = vmatpush1.msra.mxu0 0.0
        %3099 = vmatprep.subr.mxu0 0.0
        %3100 = vmatpush1.msra.mxu0 0.0
        %3101 = vmatprep.subr.mxu0 0.0
        %3102 = vmatpush1.msra.mxu0 0.0
        %3103 = vmatprep.subr.mxu0 0.0
        %3104 = vmatpush1.msra.mxu0 0.0
        %3105 = vmatprep.subr.mxu0 0.0
        %3106 = vmatpush1.msra.mxu0 0.0
        %3107 = vmatprep.subr.mxu0 0.0
        %3108 = vmatpush1.msra.mxu0 0.0
        %3109 = vmatprep.subr.mxu0 0.0
        %3110 = vmatpush1.msra.mxu0 0.0
        %3111 = vmatprep.subr.mxu0 0.0
        %3112 = vmatpush1.msra.mxu0 0.0
        %3113 = vmatprep.subr.mxu0 0.0
        %3114 = vmatpush1.msra.mxu0 0.0
        %3115 = vmatprep.subr.mxu0 0.0
        %3116 = vmatpush1.msra.mxu0 %v1792
        %3117 = vmatprep.subr.mxu0 0.0
        %3118 = vmatpush2.msra.mxu0 0.0
        %3119 = vmatprep.subr.mxu0 0.0
        %3120 = vmatpush2.msra.mxu0 0.0
        %3121 = vmatprep.subr.mxu0 0.0
        %3122 = vmatpush2.msra.mxu0 0.0
        %3123 = vmatprep.subr.mxu0 0.0
        %3124 = vmatpush2.msra.mxu0 0.0
        %3125 = vmatprep.subr.mxu0 0.0
        %3126 = vmatpush2.msra.mxu0 0.0
        %3127 = vmatprep.subr.mxu0 0.0
        %3128 = vmatpush2.msra.mxu0 0.0
        %3129 = vmatprep.subr.mxu0 0.0
        %3130 = vmatpush2.msra.mxu0 0.0
        %3131 = vmatprep.subr.mxu0 0.0
        %3132 = vmatpush2.msra.mxu0 0.0
        %3133 = vmatprep.subr.mxu0 0.0
        %3134 = vmatpush2.msra.mxu0 0.0
        %3135 = vmatprep.subr.mxu0 0.0
        %3136 = vmatpush2.msra.mxu0 0.0
        %3137 = vmatprep.subr.mxu0 0.0
        %3138 = vmatpush2.msra.mxu0 0.0
        %3139 = vmatprep.subr.mxu0 0.0
        %3140 = vmatpush2.msra.mxu0 0.0
        %3141 = vmatprep.subr.mxu0 0.0
        %3142 = vmatpush2.msra.mxu0 0.0
        %3143 = vmatprep.subr.mxu0 0.0
        %3144 = vmatpush2.msra.mxu0 0.0
        %3145 = vmatprep.subr.mxu0 0.0
        %3146 = vmatpush2.msra.mxu0 0.0
        %3147 = vmatprep.subr.mxu0 0.0
        %3148 = vmatpush2.msra.mxu0 0.0
        %3149 = vmatprep.mubr.f32.mxu0 0.0
        %3150 = vmatmul.mubr.f32.gmra.mxu0 %v3012
        %v3151 = vpop.f32.mrf.mxu0
        %v3152 = vadd.f32 %v3009, %v3151
        %v3153 = vpop.f32.mrf.mxu0
        %3154 = vdwg.mxu0
        %v3155 = vmax.f32 %v3081, 0.0
        %v3156 = vmax.f32 %v3083, 0.0
        %v3157 = vmax.f32 %v3152, 0.0
        %v3160 = vcombine.low %v3155, %v3156
        %3162 = vst [vmem:[%s244] sm:$0xff] %v3160
        %vm3163 = vcmask 257024
        %3164 = vst.msk [vmem:[%s244 + $0x8] sm:$0xf] %vm3163, %v3157
        %v3165 = vadd.f32 %v2028, %v3009
        %v3166 = vadd.f32 %v2030, %v3009
        %v3167 = vadd.f32 %v2099, %v3009
        %v3168 = vmax.f32 %v3165, 0.0
        %v3169 = vmax.f32 %v3166, 0.0
        %v3170 = vmax.f32 %v3167, 0.0
        %v3173 = vcombine.low %v3168, %v3169
        %s3175 = scalar_lea.vmem %s244, 12 [#allocation3]
        %3176 = vst [vmem:[%s3175] sm:$0xff] %v3173
        %3177 = vst.msk [vmem:[%s3175 + $0x8] sm:$0xf] %vm3163, %v3170
        %v3178 = vadd.f32 %v2331, %v3009
        %v3179 = vadd.f32 %v2333, %v3009
        %v3180 = vadd.f32 %v2402, %v3009
        %v3181 = vmax.f32 %v3178, 0.0
        %v3182 = vmax.f32 %v3179, 0.0
        %v3183 = vmax.f32 %v3180, 0.0
        %v3186 = vcombine.low %v3181, %v3182
        %s3188 = scalar_lea.vmem %s244, 24 [#allocation3]
        %3189 = vst [vmem:[%s3188] sm:$0xff] %v3186
        %3190 = vst.msk [vmem:[%s3188 + $0x8] sm:$0xf] %vm3163, %v3183
        %v3191 = vadd.f32 %v3002, %v3009
        %v3192 = vadd.f32 %v3003, %v3009
        %v3193 = vadd.f32 %v3004, %v3009
        %v3194 = vmax.f32 %v3191, 0.0
        %v3195 = vmax.f32 %v3192, 0.0
        %v3196 = vmax.f32 %v3193, 0.0
        %v3199 = vcombine.low %v3194, %v3195
        %s3201 = scalar_lea.vmem %s244, 36 [#allocation3]
        %3202 = vst [vmem:[%s3201] sm:$0xff] %v3199
        %3203 = vst.msk [vmem:[%s3201 + $0x8] sm:$0xf] %vm3163, %v3196
        %s3204 = sand.u32 %s159, 1
        %s3205 = scalar_lea.sflag [#allocation4], %s3204
        %s3206 = sand.u32 %s159, 1
        %s3207 = smul.addr %s3206, 48
        %s3208 = scalar_lea.vmem [#allocation3], %s3207
        // Predicated region
        $region45: #{tpu_custom_call.1} parent=43 // pred_check
          %p3209 = pneg %p169
        $region46: #{tpu_custom_call.1} parent=43 // pred_check_branch
          %3211 = sbr.rel (%p3209) target = $region48
        $region47: #{tpu_custom_call.1} parent=43 // pred_region
          %s3213 = ssub.s32 768, 768
          %3214 = vsyncadd %s3205, %s3213
          %s3215 = smul.addr %s20, 12
          %s3216 = smul.addr %s3215, 64
          %s3217 = scalar_lea.hbm %s6, %s3216
          %s3218 = sshll.u32 %s3208, 4
          %s3219 = int_to_ptr.vmem [resolvable:$true] %s3218
          %3224 = dma.vmem_to_hbm [thread:$0]  %s3219, 768, %s3217, %s3205, 192, 192, 12
        $region48: #{tpu_custom_call.1} parent=43 // pred_fallthru
          _
      $region44: #{tpu_custom_call.1} parent=5 // pred_fallthru
        _
      %p3225 = scmp.le.s32.totalorder 2, %s15
      // Predicated region
      $region49: #{tpu_custom_call.1} parent=5 // pred_check
        %p3226 = pneg %p3225
      $region50: #{tpu_custom_call.1} parent=5 // pred_check_branch
        %3228 = sbr.rel (%p3226) target = $region52
      $region51: #{tpu_custom_call.1} parent=5 // pred_region
        %s3229 = ssub.s32 %s15, 2
        // Predicated region
        $region53: #{tpu_custom_call.1} parent=51 // pred_check
          %p3230 = pneg %p175
        $region54: #{tpu_custom_call.1} parent=51 // pred_check_branch
          %3232 = sbr.rel (%p3230) target = $region56
        $region55: #{tpu_custom_call.1} parent=51 // pred_region
          %s3233 = sand.u32 %s160, 1
          %s3234 = scalar_lea.sflag [#allocation4], %s3233
          %s3235 = sand.u32 %s160, 1
          %s3236 = smul.addr %s3235, 48
          %s3237 = scalar_lea.vmem [#allocation3], %s3236
          %3238 = dma.done %s3234, 768
        $region56: #{tpu_custom_call.1} parent=51 // pred_fallthru
          _
      $region52: #{tpu_custom_call.1} parent=5 // pred_fallthru
        _
    $region6: #{tpu_custom_call.1} parent=1 // loop_footer
      %s19 = sadd.s32 1, %s15
    $region7: #{tpu_custom_call.1} parent=1 // loop_footer_branch
      %14 = sbr.rel target = $region3
    $region8: #{tpu_custom_call.1} parent=1 // loop_exit
      _
    %3239 = vsyncpa [#allocation4], 1
    %s3240 = scalar_lea.sflag [#allocation4], 1
    %3241 = vsyncpa %s3240, 1

</llo_original>
